<compile_context>
chip_gen: v6e
topology: v6e:2x2x1
jax: 0.10.0
libtpu: 0.0.40
codegen_flags: <defaults>
</compile_context>

<pallas_src>
import functools

import jax
import jax.numpy as jnp
from jax.experimental import pallas as pl
from jax.experimental.pallas import tpu as pltpu


def _round_up(n, m):
    return -(-n // m) * m


def _gru_net_kernel(n_layers, seq_len, batch, hp, *refs):
    # refs = x_flat, [w_ih_p, w_hh_p, b_ih_p, b_hh_p] * n_layers, w_fc_p, b_fc_p,
    #        out_ref, h_slab (scratch)
    T, B, HP = seq_len, batch, hp
    x_ref = refs[0]
    layer_refs = refs[1:1 + 4 * n_layers]
    w_fc_ref = refs[1 + 4 * n_layers]
    b_fc_ref = refs[2 + 4 * n_layers]
    out_ref = refs[3 + 4 * n_layers]
    h_slab = refs[4 + 4 * n_layers]          # VMEM scratch (T*B, HP)

    for l in range(n_layers):
        w_ih = layer_refs[4 * l][...]        # (D_in_l, 3*HP), cols [r | z | n]
        w_hh = layer_refs[4 * l + 1][...]    # (HP,     3*HP)
        b_ih = layer_refs[4 * l + 2][...]    # (1, 3*HP)
        b_hh = layer_refs[4 * l + 3][...]    # (1, 3*HP)

        # Hoisted input-side projection for ALL timesteps (one well-shaped matmul).
        x_in = x_ref[...] if l == 0 else h_slab[...]
        gx_all = jnp.dot(x_in, w_ih, preferred_element_type=jnp.float32) + b_ih

        # Hoist the hh-bias broadcast out of the unrolled time loop (no CSE in JAX).
        b_hh_b = jnp.broadcast_to(b_hh, (B, 3 * HP))

        h = jnp.zeros((B, HP), jnp.float32)
        for t in range(T):                   # T small & static -> unrolled in one call
            gx = gx_all[t * B:(t + 1) * B, :]                        # (B, 3*HP)
            gh = jnp.dot(h, w_hh, preferred_element_type=jnp.float32) + b_hh_b
            # All gate slices below start at multiples of 128 lanes -> free vreg views.
            rz = jax.nn.sigmoid(gx[:, :2 * HP] + gh[:, :2 * HP])     # one pass for r, z
            r = rz[:, :HP]
            z = rz[:, HP:]
            n = jnp.tanh(gx[:, 2 * HP:] + r * gh[:, 2 * HP:])
            h = (1.0 - z) * n + z * h
            h_slab[pl.ds(t * B, B), :] = h

    # Batched fc + sigmoid over the whole (T*B, HP) slab; lane-dense padded store.
    logits = jnp.dot(h_slab[...], w_fc_ref[...],
                     preferred_element_type=jnp.float32) + b_fc_ref[...]
    out_ref[...] = jax.nn.sigmoid(logits).astype(out_ref.dtype)


def pack_params(params, input_dim, hidden_dim, output_dim, n_layers):
    """Pack raw PyTorch-layout GRU/Linear params once (outside the forward).

    Per layer: W_ih.T / W_hh.T with each gate block [r | z | n] zero-padded to HP=
    round_up(H,128) lanes (and hidden rows padded to HP for l>0 / W_hh), plus padded
    (1, 3*HP) biases.  fc weight padded to (HP, OP), OP = round_up(output_dim, 128).
    Padded lanes stay exactly zero through the recurrence (zero weights/bias, h0 = 0).
    """
    H = hidden_dim
    HP = _round_up(H, 128)
    OP = _round_up(output_dim, 128)
    layers = []
    for l in range(n_layers):
        w_ih, w_hh, b_ih, b_hh = params["layers"][l]
        d_in = input_dim if l == 0 else H
        d_in_p = input_dim if l == 0 else HP      # layer>0 input is the padded h slab
        w_ih_t = w_ih.T                           # (d_in, 3H), cols [r | z | n]
        w_hh_t = w_hh.T                           # (H, 3H)
        w_ih_p = jnp.zeros((d_in_p, 3 * HP), jnp.float32)
        w_hh_p = jnp.zeros((HP, 3 * HP), jnp.float32)
        b_ih_p = jnp.zeros((1, 3 * HP), jnp.float32)
        b_hh_p = jnp.zeros((1, 3 * HP), jnp.float32)
        for g in range(3):
            w_ih_p = w_ih_p.at[:d_in, g * HP:g * HP + H].set(w_ih_t[:, g * H:(g + 1) * H])
            w_hh_p = w_hh_p.at[:H, g * HP:g * HP + H].set(w_hh_t[:, g * H:(g + 1) * H])
            b_ih_p = b_ih_p.at[0, g * HP:g * HP + H].set(b_ih[g * H:(g + 1) * H])
            b_hh_p = b_hh_p.at[0, g * HP:g * HP + H].set(b_hh[g * H:(g + 1) * H])
        layers.append((w_ih_p, w_hh_p, b_ih_p, b_hh_p))
    w_fc, b_fc = params["fc"]
    w_fc_p = jnp.zeros((HP, OP), jnp.float32).at[:H, :output_dim].set(w_fc.T)
    b_fc_p = jnp.zeros((1, OP), jnp.float32).at[0, :output_dim].set(b_fc)
    return {"layers": layers, "w_fc": w_fc_p, "b_fc": b_fc_p, "hp": HP, "op": OP}


def gru_net_forward(x, packed, hidden_dim, output_dim, n_layers):
    """x: (B, T, input_dim) batch-first (like the PyTorch module). Returns (B, T, output_dim)."""
    B, T, D = x.shape
    HP, OP = packed["hp"], packed["op"]

    # Time-major flat rows (row = t*B + b) so the kernel's per-step slab slices are contiguous.
    x_flat = jnp.transpose(x, (1, 0, 2)).reshape(T * B, D)

    args = [x_flat]
    for l in range(n_layers):
        args += list(packed["layers"][l])
    args += [packed["w_fc"], packed["b_fc"]]

    # Single gridless invocation: the whole (tiny) problem lives in VMEM; the time loop
    # runs inside the kernel; output comes back as one lane-dense (T*B, OP) slab.
    out_pad = pl.pallas_call(
        functools.partial(_gru_net_kernel, n_layers, T, B, HP),
        out_shape=jax.ShapeDtypeStruct((T * B, OP), jnp.float32),
        scratch_shapes=[pltpu.VMEM((T * B, HP), jnp.float32)],
        compiler_params=pltpu.CompilerParams(vmem_limit_bytes=32 * 1024 * 1024),
    )(*args)

    out = out_pad[:, :output_dim].reshape(T, B, output_dim)
    return jnp.transpose(out, (1, 0, 2))


def init_params(key, input_dim, hidden_dim, output_dim, n_layers):
    """Deterministic init mirroring PyTorch's U(-1/sqrt(H), 1/sqrt(H)), raw nn.GRU layout."""
    k = 1.0 / float(hidden_dim) ** 0.5
    layers = []
    for l in range(n_layers):
        d_in = input_dim if l == 0 else hidden_dim
        key, k1, k2, k3, k4 = jax.random.split(key, 5)
        w_ih = jax.random.uniform(k1, (3 * hidden_dim, d_in), jnp.float32, -k, k)
        w_hh = jax.random.uniform(k2, (3 * hidden_dim, hidden_dim), jnp.float32, -k, k)
        b_ih = jax.random.uniform(k3, (3 * hidden_dim,), jnp.float32, -k, k)
        b_hh = jax.random.uniform(k4, (3 * hidden_dim,), jnp.float32, -k, k)
        layers.append((w_ih, w_hh, b_ih, b_hh))
    key, k5, k6 = jax.random.split(key, 3)
    w_fc = jax.random.uniform(k5, (output_dim, hidden_dim), jnp.float32, -k, k)
    b_fc = jax.random.uniform(k6, (output_dim,), jnp.float32, -k, k)
    return {"layers": layers, "fc": (w_fc, b_fc)}


def reference_forward(x, params, hidden_dim, n_layers):
    """Pure-JAX reference reproducing PyTorch nn.GRU(batch_first) + Linear + sigmoid."""
    B, T, _ = x.shape
    H = hidden_dim
    h = [jnp.zeros((B, H), jnp.float32) for _ in range(n_layers)]
    outs = []
    w_fc, b_fc = params["fc"]
    for t in range(T):
        inp = x[:, t, :]
        for l in range(n_layers):
            w_ih, w_hh, b_ih, b_hh = params["layers"][l]
            gi = inp @ w_ih.T + b_ih                 # (B, 3H): [r | z | n]
            gh = h[l] @ w_hh.T + b_hh                # (B, 3H)
            r = jax.nn.sigmoid(gi[:, :H] + gh[:, :H])
            z = jax.nn.sigmoid(gi[:, H:2 * H] + gh[:, H:2 * H])
            n = jnp.tanh(gi[:, 2 * H:] + r * gh[:, 2 * H:])
            h[l] = (1.0 - z) * n + z * h[l]
            inp = h[l]
        outs.append(jax.nn.sigmoid(inp @ w_fc.T + b_fc))
    return jnp.stack(outs, axis=1)


if __name__ == "__main__":
    B, T = 2, 8
    input_dim, hidden_dim, output_dim, n_layers = 8, 32, 4, 2

    key = jax.random.PRNGKey(0)
    key_x, key_p = jax.random.split(key)
    x = jax.random.normal(key_x, (B, T, input_dim), jnp.float32)
    params = init_params(key_p, input_dim, hidden_dim, output_dim, n_layers)

    # Pack/pad/transpose weights ONCE (not per forward call).
    packed = pack_params(params, input_dim, hidden_dim, output_dim, n_layers)

    out = gru_net_forward(x, packed, hidden_dim, output_dim, n_layers)
    out = jax.block_until_ready(out)

    ref = reference_forward(x, params, hidden_dim, n_layers)
    assert out.shape == (B, T, output_dim)
    assert bool(jnp.all(jnp.isfinite(out)))
    assert bool(jnp.allclose(out, ref, atol=1e-4, rtol=1e-4)), "mismatch vs JAX reference"

    print("KERNEL_OK")
</pallas_src>

<mosaic_0001>
module attributes {stable_mosaic.version = 11 : i64} {
  func.func @_gru_net_kernel(%arg0: memref<16x8xf32, #tpu.memory_space<vmem>>, %arg1: memref<8x384xf32, #tpu.memory_space<vmem>>, %arg2: memref<128x384xf32, #tpu.memory_space<vmem>>, %arg3: memref<1x384xf32, #tpu.memory_space<vmem>>, %arg4: memref<1x384xf32, #tpu.memory_space<vmem>>, %arg5: memref<128x384xf32, #tpu.memory_space<vmem>>, %arg6: memref<128x384xf32, #tpu.memory_space<vmem>>, %arg7: memref<1x384xf32, #tpu.memory_space<vmem>>, %arg8: memref<1x384xf32, #tpu.memory_space<vmem>>, %arg9: memref<128x128xf32, #tpu.memory_space<vmem>>, %arg10: memref<1x128xf32, #tpu.memory_space<vmem>>, %arg11: memref<16x128xf32, #tpu.memory_space<vmem>>, %arg12: memref<16x128xf32, #tpu.memory_space<vmem>>) attributes {dimension_semantics = [], scalar_prefetch = 0 : i64, scratch_operands = 1 : i64, tpu.core_type = #tpu.core_type<tc>} {
    %c0 = arith.constant 0 : index
    %c0_0 = arith.constant 0 : index
    %0 = vector.load %arg1[%c0, %c0_0] : memref<8x384xf32, #tpu.memory_space<vmem>>, vector<8x384xf32>
    %c0_1 = arith.constant 0 : index
    %c0_2 = arith.constant 0 : index
    %1 = vector.load %arg2[%c0_1, %c0_2] : memref<128x384xf32, #tpu.memory_space<vmem>>, vector<128x384xf32>
    %c0_3 = arith.constant 0 : index
    %c0_4 = arith.constant 0 : index
    %2 = vector.load %arg3[%c0_3, %c0_4] : memref<1x384xf32, #tpu.memory_space<vmem>>, vector<1x384xf32>
    %c0_5 = arith.constant 0 : index
    %c0_6 = arith.constant 0 : index
    %3 = vector.load %arg4[%c0_5, %c0_6] : memref<1x384xf32, #tpu.memory_space<vmem>>, vector<1x384xf32>
    %c0_7 = arith.constant 0 : index
    %c0_8 = arith.constant 0 : index
    %4 = vector.load %arg0[%c0_7, %c0_8] : memref<16x8xf32, #tpu.memory_space<vmem>>, vector<16x8xf32>
    %cst = arith.constant dense<0.000000e+00> : vector<16x384xf32>
    %5 = tpu.matmul %4, %0, %cst {dimension_numbers = #tpu.dot_dimension_numbers<[1], [0], [0], [1], [0, 0, 1, 1], [], []>} : vector<16x8xf32>, vector<8x384xf32>, vector<16x384xf32> -> vector<16x384xf32>
    %6 = vector.broadcast %2 : vector<1x384xf32> to vector<16x384xf32>
    %7 = arith.addf %5, %6 : vector<16x384xf32>
    %8 = vector.shape_cast %3 : vector<1x384xf32> to vector<1x384xf32>
    %9 = vector.broadcast %8 : vector<1x384xf32> to vector<2x384xf32>
    %cst_9 = arith.constant 0.000000e+00 : f32
    %10 = vector.broadcast %cst_9 : f32 to vector<2x128xf32>
    %11 = vector.extract_strided_slice %7 {offsets = [0, 0], sizes = [2, 384], strides = [1, 1]} : vector<16x384xf32> to vector<2x384xf32>
    %cst_10 = arith.constant dense<0.000000e+00> : vector<2x384xf32>
    %12 = tpu.matmul %10, %1, %cst_10 {dimension_numbers = #tpu.dot_dimension_numbers<[1], [0], [0], [1], [0, 0, 1, 1], [], []>} : vector<2x128xf32>, vector<128x384xf32>, vector<2x384xf32> -> vector<2x384xf32>
    %13 = arith.addf %12, %9 : vector<2x384xf32>
    %14 = vector.extract_strided_slice %11 {offsets = [0, 0], sizes = [2, 256], strides = [1, 1]} : vector<2x384xf32> to vector<2x256xf32>
    %15 = vector.extract_strided_slice %13 {offsets = [0, 0], sizes = [2, 256], strides = [1, 1]} : vector<2x384xf32> to vector<2x256xf32>
    %16 = arith.addf %14, %15 : vector<2x256xf32>
    %17 = arith.negf %16 : vector<2x256xf32>
    %18 = math.exp %17 : vector<2x256xf32>
    %cst_11 = arith.constant 1.000000e+00 : f32
    %19 = vector.broadcast %cst_11 : f32 to vector<2x256xf32>
    %20 = arith.addf %19, %18 : vector<2x256xf32>
    %21 = arith.divf %19, %20 : vector<2x256xf32>
    %22 = vector.extract_strided_slice %21 {offsets = [0, 0], sizes = [2, 128], strides = [1, 1]} : vector<2x256xf32> to vector<2x128xf32>
    %23 = vector.extract_strided_slice %21 {offsets = [0, 128], sizes = [2, 128], strides = [1, 1]} : vector<2x256xf32> to vector<2x128xf32>
    %24 = vector.extract_strided_slice %11 {offsets = [0, 256], sizes = [2, 128], strides = [1, 1]} : vector<2x384xf32> to vector<2x128xf32>
    %25 = vector.extract_strided_slice %13 {offsets = [0, 256], sizes = [2, 128], strides = [1, 1]} : vector<2x384xf32> to vector<2x128xf32>
    %26 = arith.mulf %22, %25 : vector<2x128xf32>
    %27 = arith.addf %24, %26 : vector<2x128xf32>
    %28 = math.tanh %27 : vector<2x128xf32>
    %cst_12 = arith.constant 1.000000e+00 : f32
    %29 = vector.broadcast %cst_12 : f32 to vector<2x128xf32>
    %30 = arith.subf %29, %23 : vector<2x128xf32>
    %31 = arith.mulf %30, %28 : vector<2x128xf32>
    %32 = arith.mulf %23, %10 : vector<2x128xf32>
    %33 = arith.addf %31, %32 : vector<2x128xf32>
    %c0_13 = arith.constant 0 : index
    %c0_14 = arith.constant 0 : index
    %34 = vector.load %arg12[%c0_13, %c0_14] : memref<16x128xf32, #tpu.memory_space<vmem>>, vector<2x128xf32>
    tpu.vector_store %arg12[%c0_13, %c0_14], %33 {strides = array<i32>} : memref<16x128xf32, #tpu.memory_space<vmem>>, vector<2x128xf32>,
    %35 = vector.extract_strided_slice %7 {offsets = [2, 0], sizes = [2, 384], strides = [1, 1]} : vector<16x384xf32> to vector<2x384xf32>
    %cst_15 = arith.constant dense<0.000000e+00> : vector<2x384xf32>
    %36 = tpu.matmul %33, %1, %cst_15 {dimension_numbers = #tpu.dot_dimension_numbers<[1], [0], [0], [1], [0, 0, 1, 1], [], []>} : vector<2x128xf32>, vector<128x384xf32>, vector<2x384xf32> -> vector<2x384xf32>
    %37 = arith.addf %36, %9 : vector<2x384xf32>
    %38 = vector.extract_strided_slice %35 {offsets = [0, 0], sizes = [2, 256], strides = [1, 1]} : vector<2x384xf32> to vector<2x256xf32>
    %39 = vector.extract_strided_slice %37 {offsets = [0, 0], sizes = [2, 256], strides = [1, 1]} : vector<2x384xf32> to vector<2x256xf32>
    %40 = arith.addf %38, %39 : vector<2x256xf32>
    %41 = arith.negf %40 : vector<2x256xf32>
    %42 = math.exp %41 : vector<2x256xf32>
    %cst_16 = arith.constant 1.000000e+00 : f32
    %43 = vector.broadcast %cst_16 : f32 to vector<2x256xf32>
    %44 = arith.addf %43, %42 : vector<2x256xf32>
    %45 = arith.divf %43, %44 : vector<2x256xf32>
    %46 = vector.extract_strided_slice %45 {offsets = [0, 0], sizes = [2, 128], strides = [1, 1]} : vector<2x256xf32> to vector<2x128xf32>
    %47 = vector.extract_strided_slice %45 {offsets = [0, 128], sizes = [2, 128], strides = [1, 1]} : vector<2x256xf32> to vector<2x128xf32>
    %48 = vector.extract_strided_slice %35 {offsets = [0, 256], sizes = [2, 128], strides = [1, 1]} : vector<2x384xf32> to vector<2x128xf32>
    %49 = vector.extract_strided_slice %37 {offsets = [0, 256], sizes = [2, 128], strides = [1, 1]} : vector<2x384xf32> to vector<2x128xf32>
    %50 = arith.mulf %46, %49 : vector<2x128xf32>
    %51 = arith.addf %48, %50 : vector<2x128xf32>
    %52 = math.tanh %51 : vector<2x128xf32>
    %cst_17 = arith.constant 1.000000e+00 : f32
    %53 = vector.broadcast %cst_17 : f32 to vector<2x128xf32>
    %54 = arith.subf %53, %47 : vector<2x128xf32>
    %55 = arith.mulf %54, %52 : vector<2x128xf32>
    %56 = arith.mulf %47, %33 : vector<2x128xf32>
    %57 = arith.addf %55, %56 : vector<2x128xf32>
    %c2 = arith.constant 2 : index
    %c0_18 = arith.constant 0 : index
    %58 = vector.load %arg12[%c2, %c0_18] : memref<16x128xf32, #tpu.memory_space<vmem>>, vector<2x128xf32>
    tpu.vector_store %arg12[%c2, %c0_18], %57 {strides = array<i32>} : memref<16x128xf32, #tpu.memory_space<vmem>>, vector<2x128xf32>,
    %59 = vector.extract_strided_slice %7 {offsets = [4, 0], sizes = [2, 384], strides = [1, 1]} : vector<16x384xf32> to vector<2x384xf32>
    %cst_19 = arith.constant dense<0.000000e+00> : vector<2x384xf32>
    %60 = tpu.matmul %57, %1, %cst_19 {dimension_numbers = #tpu.dot_dimension_numbers<[1], [0], [0], [1], [0, 0, 1, 1], [], []>} : vector<2x128xf32>, vector<128x384xf32>, vector<2x384xf32> -> vector<2x384xf32>
    %61 = arith.addf %60, %9 : vector<2x384xf32>
    %62 = vector.extract_strided_slice %59 {offsets = [0, 0], sizes = [2, 256], strides = [1, 1]} : vector<2x384xf32> to vector<2x256xf32>
    %63 = vector.extract_strided_slice %61 {offsets = [0, 0], sizes = [2, 256], strides = [1, 1]} : vector<2x384xf32> to vector<2x256xf32>
    %64 = arith.addf %62, %63 : vector<2x256xf32>
    %65 = arith.negf %64 : vector<2x256xf32>
    %66 = math.exp %65 : vector<2x256xf32>
    %cst_20 = arith.constant 1.000000e+00 : f32
    %67 = vector.broadcast %cst_20 : f32 to vector<2x256xf32>
    %68 = arith.addf %67, %66 : vector<2x256xf32>
    %69 = arith.divf %67, %68 : vector<2x256xf32>
    %70 = vector.extract_strided_slice %69 {offsets = [0, 0], sizes = [2, 128], strides = [1, 1]} : vector<2x256xf32> to vector<2x128xf32>
    %71 = vector.extract_strided_slice %69 {offsets = [0, 128], sizes = [2, 128], strides = [1, 1]} : vector<2x256xf32> to vector<2x128xf32>
    %72 = vector.extract_strided_slice %59 {offsets = [0, 256], sizes = [2, 128], strides = [1, 1]} : vector<2x384xf32> to vector<2x128xf32>
    %73 = vector.extract_strided_slice %61 {offsets = [0, 256], sizes = [2, 128], strides = [1, 1]} : vector<2x384xf32> to vector<2x128xf32>
    %74 = arith.mulf %70, %73 : vector<2x128xf32>
    %75 = arith.addf %72, %74 : vector<2x128xf32>
    %76 = math.tanh %75 : vector<2x128xf32>
    %cst_21 = arith.constant 1.000000e+00 : f32
    %77 = vector.broadcast %cst_21 : f32 to vector<2x128xf32>
    %78 = arith.subf %77, %71 : vector<2x128xf32>
    %79 = arith.mulf %78, %76 : vector<2x128xf32>
    %80 = arith.mulf %71, %57 : vector<2x128xf32>
    %81 = arith.addf %79, %80 : vector<2x128xf32>
    %c4 = arith.constant 4 : index
    %c0_22 = arith.constant 0 : index
    %82 = vector.load %arg12[%c4, %c0_22] : memref<16x128xf32, #tpu.memory_space<vmem>>, vector<2x128xf32>
    tpu.vector_store %arg12[%c4, %c0_22], %81 {strides = array<i32>} : memref<16x128xf32, #tpu.memory_space<vmem>>, vector<2x128xf32>,
    %83 = vector.extract_strided_slice %7 {offsets = [6, 0], sizes = [2, 384], strides = [1, 1]} : vector<16x384xf32> to vector<2x384xf32>
    %cst_23 = arith.constant dense<0.000000e+00> : vector<2x384xf32>
    %84 = tpu.matmul %81, %1, %cst_23 {dimension_numbers = #tpu.dot_dimension_numbers<[1], [0], [0], [1], [0, 0, 1, 1], [], []>} : vector<2x128xf32>, vector<128x384xf32>, vector<2x384xf32> -> vector<2x384xf32>
    %85 = arith.addf %84, %9 : vector<2x384xf32>
    %86 = vector.extract_strided_slice %83 {offsets = [0, 0], sizes = [2, 256], strides = [1, 1]} : vector<2x384xf32> to vector<2x256xf32>
    %87 = vector.extract_strided_slice %85 {offsets = [0, 0], sizes = [2, 256], strides = [1, 1]} : vector<2x384xf32> to vector<2x256xf32>
    %88 = arith.addf %86, %87 : vector<2x256xf32>
    %89 = arith.negf %88 : vector<2x256xf32>
    %90 = math.exp %89 : vector<2x256xf32>
    %cst_24 = arith.constant 1.000000e+00 : f32
    %91 = vector.broadcast %cst_24 : f32 to vector<2x256xf32>
    %92 = arith.addf %91, %90 : vector<2x256xf32>
    %93 = arith.divf %91, %92 : vector<2x256xf32>
    %94 = vector.extract_strided_slice %93 {offsets = [0, 0], sizes = [2, 128], strides = [1, 1]} : vector<2x256xf32> to vector<2x128xf32>
    %95 = vector.extract_strided_slice %93 {offsets = [0, 128], sizes = [2, 128], strides = [1, 1]} : vector<2x256xf32> to vector<2x128xf32>
    %96 = vector.extract_strided_slice %83 {offsets = [0, 256], sizes = [2, 128], strides = [1, 1]} : vector<2x384xf32> to vector<2x128xf32>
    %97 = vector.extract_strided_slice %85 {offsets = [0, 256], sizes = [2, 128], strides = [1, 1]} : vector<2x384xf32> to vector<2x128xf32>
    %98 = arith.mulf %94, %97 : vector<2x128xf32>
    %99 = arith.addf %96, %98 : vector<2x128xf32>
    %100 = math.tanh %99 : vector<2x128xf32>
    %cst_25 = arith.constant 1.000000e+00 : f32
    %101 = vector.broadcast %cst_25 : f32 to vector<2x128xf32>
    %102 = arith.subf %101, %95 : vector<2x128xf32>
    %103 = arith.mulf %102, %100 : vector<2x128xf32>
    %104 = arith.mulf %95, %81 : vector<2x128xf32>
    %105 = arith.addf %103, %104 : vector<2x128xf32>
    %c6 = arith.constant 6 : index
    %c0_26 = arith.constant 0 : index
    %106 = vector.load %arg12[%c6, %c0_26] : memref<16x128xf32, #tpu.memory_space<vmem>>, vector<2x128xf32>
    tpu.vector_store %arg12[%c6, %c0_26], %105 {strides = array<i32>} : memref<16x128xf32, #tpu.memory_space<vmem>>, vector<2x128xf32>,
    %107 = vector.extract_strided_slice %7 {offsets = [8, 0], sizes = [2, 384], strides = [1, 1]} : vector<16x384xf32> to vector<2x384xf32>
    %cst_27 = arith.constant dense<0.000000e+00> : vector<2x384xf32>
    %108 = tpu.matmul %105, %1, %cst_27 {dimension_numbers = #tpu.dot_dimension_numbers<[1], [0], [0], [1], [0, 0, 1, 1], [], []>} : vector<2x128xf32>, vector<128x384xf32>, vector<2x384xf32> -> vector<2x384xf32>
    %109 = arith.addf %108, %9 : vector<2x384xf32>
    %110 = vector.extract_strided_slice %107 {offsets = [0, 0], sizes = [2, 256], strides = [1, 1]} : vector<2x384xf32> to vector<2x256xf32>
    %111 = vector.extract_strided_slice %109 {offsets = [0, 0], sizes = [2, 256], strides = [1, 1]} : vector<2x384xf32> to vector<2x256xf32>
    %112 = arith.addf %110, %111 : vector<2x256xf32>
    %113 = arith.negf %112 : vector<2x256xf32>
    %114 = math.exp %113 : vector<2x256xf32>
    %cst_28 = arith.constant 1.000000e+00 : f32
    %115 = vector.broadcast %cst_28 : f32 to vector<2x256xf32>
    %116 = arith.addf %115, %114 : vector<2x256xf32>
    %117 = arith.divf %115, %116 : vector<2x256xf32>
    %118 = vector.extract_strided_slice %117 {offsets = [0, 0], sizes = [2, 128], strides = [1, 1]} : vector<2x256xf32> to vector<2x128xf32>
    %119 = vector.extract_strided_slice %117 {offsets = [0, 128], sizes = [2, 128], strides = [1, 1]} : vector<2x256xf32> to vector<2x128xf32>
    %120 = vector.extract_strided_slice %107 {offsets = [0, 256], sizes = [2, 128], strides = [1, 1]} : vector<2x384xf32> to vector<2x128xf32>
    %121 = vector.extract_strided_slice %109 {offsets = [0, 256], sizes = [2, 128], strides = [1, 1]} : vector<2x384xf32> to vector<2x128xf32>
    %122 = arith.mulf %118, %121 : vector<2x128xf32>
    %123 = arith.addf %120, %122 : vector<2x128xf32>
    %124 = math.tanh %123 : vector<2x128xf32>
    %cst_29 = arith.constant 1.000000e+00 : f32
    %125 = vector.broadcast %cst_29 : f32 to vector<2x128xf32>
    %126 = arith.subf %125, %119 : vector<2x128xf32>
    %127 = arith.mulf %126, %124 : vector<2x128xf32>
    %128 = arith.mulf %119, %105 : vector<2x128xf32>
    %129 = arith.addf %127, %128 : vector<2x128xf32>
    %c8 = arith.constant 8 : index
    %c0_30 = arith.constant 0 : index
    %130 = vector.load %arg12[%c8, %c0_30] : memref<16x128xf32, #tpu.memory_space<vmem>>, vector<2x128xf32>
    tpu.vector_store %arg12[%c8, %c0_30], %129 {strides = array<i32>} : memref<16x128xf32, #tpu.memory_space<vmem>>, vector<2x128xf32>,
    %131 = vector.extract_strided_slice %7 {offsets = [10, 0], sizes = [2, 384], strides = [1, 1]} : vector<16x384xf32> to vector<2x384xf32>
    %cst_31 = arith.constant dense<0.000000e+00> : vector<2x384xf32>
    %132 = tpu.matmul %129, %1, %cst_31 {dimension_numbers = #tpu.dot_dimension_numbers<[1], [0], [0], [1], [0, 0, 1, 1], [], []>} : vector<2x128xf32>, vector<128x384xf32>, vector<2x384xf32> -> vector<2x384xf32>
    %133 = arith.addf %132, %9 : vector<2x384xf32>
    %134 = vector.extract_strided_slice %131 {offsets = [0, 0], sizes = [2, 256], strides = [1, 1]} : vector<2x384xf32> to vector<2x256xf32>
    %135 = vector.extract_strided_slice %133 {offsets = [0, 0], sizes = [2, 256], strides = [1, 1]} : vector<2x384xf32> to vector<2x256xf32>
    %136 = arith.addf %134, %135 : vector<2x256xf32>
    %137 = arith.negf %136 : vector<2x256xf32>
    %138 = math.exp %137 : vector<2x256xf32>
    %cst_32 = arith.constant 1.000000e+00 : f32
    %139 = vector.broadcast %cst_32 : f32 to vector<2x256xf32>
    %140 = arith.addf %139, %138 : vector<2x256xf32>
    %141 = arith.divf %139, %140 : vector<2x256xf32>
    %142 = vector.extract_strided_slice %141 {offsets = [0, 0], sizes = [2, 128], strides = [1, 1]} : vector<2x256xf32> to vector<2x128xf32>
    %143 = vector.extract_strided_slice %141 {offsets = [0, 128], sizes = [2, 128], strides = [1, 1]} : vector<2x256xf32> to vector<2x128xf32>
    %144 = vector.extract_strided_slice %131 {offsets = [0, 256], sizes = [2, 128], strides = [1, 1]} : vector<2x384xf32> to vector<2x128xf32>
    %145 = vector.extract_strided_slice %133 {offsets = [0, 256], sizes = [2, 128], strides = [1, 1]} : vector<2x384xf32> to vector<2x128xf32>
    %146 = arith.mulf %142, %145 : vector<2x128xf32>
    %147 = arith.addf %144, %146 : vector<2x128xf32>
    %148 = math.tanh %147 : vector<2x128xf32>
    %cst_33 = arith.constant 1.000000e+00 : f32
    %149 = vector.broadcast %cst_33 : f32 to vector<2x128xf32>
    %150 = arith.subf %149, %143 : vector<2x128xf32>
    %151 = arith.mulf %150, %148 : vector<2x128xf32>
    %152 = arith.mulf %143, %129 : vector<2x128xf32>
    %153 = arith.addf %151, %152 : vector<2x128xf32>
    %c10 = arith.constant 10 : index
    %c0_34 = arith.constant 0 : index
    %154 = vector.load %arg12[%c10, %c0_34] : memref<16x128xf32, #tpu.memory_space<vmem>>, vector<2x128xf32>
    tpu.vector_store %arg12[%c10, %c0_34], %153 {strides = array<i32>} : memref<16x128xf32, #tpu.memory_space<vmem>>, vector<2x128xf32>,
    %155 = vector.extract_strided_slice %7 {offsets = [12, 0], sizes = [2, 384], strides = [1, 1]} : vector<16x384xf32> to vector<2x384xf32>
    %cst_35 = arith.constant dense<0.000000e+00> : vector<2x384xf32>
    %156 = tpu.matmul %153, %1, %cst_35 {dimension_numbers = #tpu.dot_dimension_numbers<[1], [0], [0], [1], [0, 0, 1, 1], [], []>} : vector<2x128xf32>, vector<128x384xf32>, vector<2x384xf32> -> vector<2x384xf32>
    %157 = arith.addf %156, %9 : vector<2x384xf32>
    %158 = vector.extract_strided_slice %155 {offsets = [0, 0], sizes = [2, 256], strides = [1, 1]} : vector<2x384xf32> to vector<2x256xf32>
    %159 = vector.extract_strided_slice %157 {offsets = [0, 0], sizes = [2, 256], strides = [1, 1]} : vector<2x384xf32> to vector<2x256xf32>
    %160 = arith.addf %158, %159 : vector<2x256xf32>
    %161 = arith.negf %160 : vector<2x256xf32>
    %162 = math.exp %161 : vector<2x256xf32>
    %cst_36 = arith.constant 1.000000e+00 : f32
    %163 = vector.broadcast %cst_36 : f32 to vector<2x256xf32>
    %164 = arith.addf %163, %162 : vector<2x256xf32>
    %165 = arith.divf %163, %164 : vector<2x256xf32>
    %166 = vector.extract_strided_slice %165 {offsets = [0, 0], sizes = [2, 128], strides = [1, 1]} : vector<2x256xf32> to vector<2x128xf32>
    %167 = vector.extract_strided_slice %165 {offsets = [0, 128], sizes = [2, 128], strides = [1, 1]} : vector<2x256xf32> to vector<2x128xf32>
    %168 = vector.extract_strided_slice %155 {offsets = [0, 256], sizes = [2, 128], strides = [1, 1]} : vector<2x384xf32> to vector<2x128xf32>
    %169 = vector.extract_strided_slice %157 {offsets = [0, 256], sizes = [2, 128], strides = [1, 1]} : vector<2x384xf32> to vector<2x128xf32>
    %170 = arith.mulf %166, %169 : vector<2x128xf32>
    %171 = arith.addf %168, %170 : vector<2x128xf32>
    %172 = math.tanh %171 : vector<2x128xf32>
    %cst_37 = arith.constant 1.000000e+00 : f32
    %173 = vector.broadcast %cst_37 : f32 to vector<2x128xf32>
    %174 = arith.subf %173, %167 : vector<2x128xf32>
    %175 = arith.mulf %174, %172 : vector<2x128xf32>
    %176 = arith.mulf %167, %153 : vector<2x128xf32>
    %177 = arith.addf %175, %176 : vector<2x128xf32>
    %c12 = arith.constant 12 : index
    %c0_38 = arith.constant 0 : index
    %178 = vector.load %arg12[%c12, %c0_38] : memref<16x128xf32, #tpu.memory_space<vmem>>, vector<2x128xf32>
    tpu.vector_store %arg12[%c12, %c0_38], %177 {strides = array<i32>} : memref<16x128xf32, #tpu.memory_space<vmem>>, vector<2x128xf32>,
    %179 = vector.extract_strided_slice %7 {offsets = [14, 0], sizes = [2, 384], strides = [1, 1]} : vector<16x384xf32> to vector<2x384xf32>
    %cst_39 = arith.constant dense<0.000000e+00> : vector<2x384xf32>
    %180 = tpu.matmul %177, %1, %cst_39 {dimension_numbers = #tpu.dot_dimension_numbers<[1], [0], [0], [1], [0, 0, 1, 1], [], []>} : vector<2x128xf32>, vector<128x384xf32>, vector<2x384xf32> -> vector<2x384xf32>
    %181 = arith.addf %180, %9 : vector<2x384xf32>
    %182 = vector.extract_strided_slice %179 {offsets = [0, 0], sizes = [2, 256], strides = [1, 1]} : vector<2x384xf32> to vector<2x256xf32>
    %183 = vector.extract_strided_slice %181 {offsets = [0, 0], sizes = [2, 256], strides = [1, 1]} : vector<2x384xf32> to vector<2x256xf32>
    %184 = arith.addf %182, %183 : vector<2x256xf32>
    %185 = arith.negf %184 : vector<2x256xf32>
    %186 = math.exp %185 : vector<2x256xf32>
    %cst_40 = arith.constant 1.000000e+00 : f32
    %187 = vector.broadcast %cst_40 : f32 to vector<2x256xf32>
    %188 = arith.addf %187, %186 : vector<2x256xf32>
    %189 = arith.divf %187, %188 : vector<2x256xf32>
    %190 = vector.extract_strided_slice %189 {offsets = [0, 0], sizes = [2, 128], strides = [1, 1]} : vector<2x256xf32> to vector<2x128xf32>
    %191 = vector.extract_strided_slice %189 {offsets = [0, 128], sizes = [2, 128], strides = [1, 1]} : vector<2x256xf32> to vector<2x128xf32>
    %192 = vector.extract_strided_slice %179 {offsets = [0, 256], sizes = [2, 128], strides = [1, 1]} : vector<2x384xf32> to vector<2x128xf32>
    %193 = vector.extract_strided_slice %181 {offsets = [0, 256], sizes = [2, 128], strides = [1, 1]} : vector<2x384xf32> to vector<2x128xf32>
    %194 = arith.mulf %190, %193 : vector<2x128xf32>
    %195 = arith.addf %192, %194 : vector<2x128xf32>
    %196 = math.tanh %195 : vector<2x128xf32>
    %cst_41 = arith.constant 1.000000e+00 : f32
    %197 = vector.broadcast %cst_41 : f32 to vector<2x128xf32>
    %198 = arith.subf %197, %191 : vector<2x128xf32>
    %199 = arith.mulf %198, %196 : vector<2x128xf32>
    %200 = arith.mulf %191, %177 : vector<2x128xf32>
    %201 = arith.addf %199, %200 : vector<2x128xf32>
    %c14 = arith.constant 14 : index
    %c0_42 = arith.constant 0 : index
    %202 = vector.load %arg12[%c14, %c0_42] : memref<16x128xf32, #tpu.memory_space<vmem>>, vector<2x128xf32>
    tpu.vector_store %arg12[%c14, %c0_42], %201 {strides = array<i32>} : memref<16x128xf32, #tpu.memory_space<vmem>>, vector<2x128xf32>,
    %c0_43 = arith.constant 0 : index
    %c0_44 = arith.constant 0 : index
    %203 = vector.load %arg5[%c0_43, %c0_44] : memref<128x384xf32, #tpu.memory_space<vmem>>, vector<128x384xf32>
    %c0_45 = arith.constant 0 : index
    %c0_46 = arith.constant 0 : index
    %204 = vector.load %arg6[%c0_45, %c0_46] : memref<128x384xf32, #tpu.memory_space<vmem>>, vector<128x384xf32>
    %c0_47 = arith.constant 0 : index
    %c0_48 = arith.constant 0 : index
    %205 = vector.load %arg7[%c0_47, %c0_48] : memref<1x384xf32, #tpu.memory_space<vmem>>, vector<1x384xf32>
    %c0_49 = arith.constant 0 : index
    %c0_50 = arith.constant 0 : index
    %206 = vector.load %arg8[%c0_49, %c0_50] : memref<1x384xf32, #tpu.memory_space<vmem>>, vector<1x384xf32>
    %c0_51 = arith.constant 0 : index
    %c0_52 = arith.constant 0 : index
    %207 = vector.load %arg12[%c0_51, %c0_52] : memref<16x128xf32, #tpu.memory_space<vmem>>, vector<16x128xf32>
    %cst_53 = arith.constant dense<0.000000e+00> : vector<16x384xf32>
    %208 = tpu.matmul %207, %203, %cst_53 {dimension_numbers = #tpu.dot_dimension_numbers<[1], [0], [0], [1], [0, 0, 1, 1], [], []>} : vector<16x128xf32>, vector<128x384xf32>, vector<16x384xf32> -> vector<16x384xf32>
    %209 = vector.broadcast %205 : vector<1x384xf32> to vector<16x384xf32>
    %210 = arith.addf %208, %209 : vector<16x384xf32>
    %211 = vector.shape_cast %206 : vector<1x384xf32> to vector<1x384xf32>
    %212 = vector.broadcast %211 : vector<1x384xf32> to vector<2x384xf32>
    %cst_54 = arith.constant 0.000000e+00 : f32
    %213 = vector.broadcast %cst_54 : f32 to vector<2x128xf32>
    %214 = vector.extract_strided_slice %210 {offsets = [0, 0], sizes = [2, 384], strides = [1, 1]} : vector<16x384xf32> to vector<2x384xf32>
    %cst_55 = arith.constant dense<0.000000e+00> : vector<2x384xf32>
    %215 = tpu.matmul %213, %204, %cst_55 {dimension_numbers = #tpu.dot_dimension_numbers<[1], [0], [0], [1], [0, 0, 1, 1], [], []>} : vector<2x128xf32>, vector<128x384xf32>, vector<2x384xf32> -> vector<2x384xf32>
    %216 = arith.addf %215, %212 : vector<2x384xf32>
    %217 = vector.extract_strided_slice %214 {offsets = [0, 0], sizes = [2, 256], strides = [1, 1]} : vector<2x384xf32> to vector<2x256xf32>
    %218 = vector.extract_strided_slice %216 {offsets = [0, 0], sizes = [2, 256], strides = [1, 1]} : vector<2x384xf32> to vector<2x256xf32>
    %219 = arith.addf %217, %218 : vector<2x256xf32>
    %220 = arith.negf %219 : vector<2x256xf32>
    %221 = math.exp %220 : vector<2x256xf32>
    %cst_56 = arith.constant 1.000000e+00 : f32
    %222 = vector.broadcast %cst_56 : f32 to vector<2x256xf32>
    %223 = arith.addf %222, %221 : vector<2x256xf32>
    %224 = arith.divf %222, %223 : vector<2x256xf32>
    %225 = vector.extract_strided_slice %224 {offsets = [0, 0], sizes = [2, 128], strides = [1, 1]} : vector<2x256xf32> to vector<2x128xf32>
    %226 = vector.extract_strided_slice %224 {offsets = [0, 128], sizes = [2, 128], strides = [1, 1]} : vector<2x256xf32> to vector<2x128xf32>
    %227 = vector.extract_strided_slice %214 {offsets = [0, 256], sizes = [2, 128], strides = [1, 1]} : vector<2x384xf32> to vector<2x128xf32>
    %228 = vector.extract_strided_slice %216 {offsets = [0, 256], sizes = [2, 128], strides = [1, 1]} : vector<2x384xf32> to vector<2x128xf32>
    %229 = arith.mulf %225, %228 : vector<2x128xf32>
    %230 = arith.addf %227, %229 : vector<2x128xf32>
    %231 = math.tanh %230 : vector<2x128xf32>
    %cst_57 = arith.constant 1.000000e+00 : f32
    %232 = vector.broadcast %cst_57 : f32 to vector<2x128xf32>
    %233 = arith.subf %232, %226 : vector<2x128xf32>
    %234 = arith.mulf %233, %231 : vector<2x128xf32>
    %235 = arith.mulf %226, %213 : vector<2x128xf32>
    %236 = arith.addf %234, %235 : vector<2x128xf32>
    %c0_58 = arith.constant 0 : index
    %c0_59 = arith.constant 0 : index
    %237 = vector.load %arg12[%c0_58, %c0_59] : memref<16x128xf32, #tpu.memory_space<vmem>>, vector<2x128xf32>
    tpu.vector_store %arg12[%c0_58, %c0_59], %236 {strides = array<i32>} : memref<16x128xf32, #tpu.memory_space<vmem>>, vector<2x128xf32>,
    %238 = vector.extract_strided_slice %210 {offsets = [2, 0], sizes = [2, 384], strides = [1, 1]} : vector<16x384xf32> to vector<2x384xf32>
    %cst_60 = arith.constant dense<0.000000e+00> : vector<2x384xf32>
    %239 = tpu.matmul %236, %204, %cst_60 {dimension_numbers = #tpu.dot_dimension_numbers<[1], [0], [0], [1], [0, 0, 1, 1], [], []>} : vector<2x128xf32>, vector<128x384xf32>, vector<2x384xf32> -> vector<2x384xf32>
    %240 = arith.addf %239, %212 : vector<2x384xf32>
    %241 = vector.extract_strided_slice %238 {offsets = [0, 0], sizes = [2, 256], strides = [1, 1]} : vector<2x384xf32> to vector<2x256xf32>
    %242 = vector.extract_strided_slice %240 {offsets = [0, 0], sizes = [2, 256], strides = [1, 1]} : vector<2x384xf32> to vector<2x256xf32>
    %243 = arith.addf %241, %242 : vector<2x256xf32>
    %244 = arith.negf %243 : vector<2x256xf32>
    %245 = math.exp %244 : vector<2x256xf32>
    %cst_61 = arith.constant 1.000000e+00 : f32
    %246 = vector.broadcast %cst_61 : f32 to vector<2x256xf32>
    %247 = arith.addf %246, %245 : vector<2x256xf32>
    %248 = arith.divf %246, %247 : vector<2x256xf32>
    %249 = vector.extract_strided_slice %248 {offsets = [0, 0], sizes = [2, 128], strides = [1, 1]} : vector<2x256xf32> to vector<2x128xf32>
    %250 = vector.extract_strided_slice %248 {offsets = [0, 128], sizes = [2, 128], strides = [1, 1]} : vector<2x256xf32> to vector<2x128xf32>
    %251 = vector.extract_strided_slice %238 {offsets = [0, 256], sizes = [2, 128], strides = [1, 1]} : vector<2x384xf32> to vector<2x128xf32>
    %252 = vector.extract_strided_slice %240 {offsets = [0, 256], sizes = [2, 128], strides = [1, 1]} : vector<2x384xf32> to vector<2x128xf32>
    %253 = arith.mulf %249, %252 : vector<2x128xf32>
    %254 = arith.addf %251, %253 : vector<2x128xf32>
    %255 = math.tanh %254 : vector<2x128xf32>
    %cst_62 = arith.constant 1.000000e+00 : f32
    %256 = vector.broadcast %cst_62 : f32 to vector<2x128xf32>
    %257 = arith.subf %256, %250 : vector<2x128xf32>
    %258 = arith.mulf %257, %255 : vector<2x128xf32>
    %259 = arith.mulf %250, %236 : vector<2x128xf32>
    %260 = arith.addf %258, %259 : vector<2x128xf32>
    %c2_63 = arith.constant 2 : index
    %c0_64 = arith.constant 0 : index
    %261 = vector.load %arg12[%c2_63, %c0_64] : memref<16x128xf32, #tpu.memory_space<vmem>>, vector<2x128xf32>
    tpu.vector_store %arg12[%c2_63, %c0_64], %260 {strides = array<i32>} : memref<16x128xf32, #tpu.memory_space<vmem>>, vector<2x128xf32>,
    %262 = vector.extract_strided_slice %210 {offsets = [4, 0], sizes = [2, 384], strides = [1, 1]} : vector<16x384xf32> to vector<2x384xf32>
    %cst_65 = arith.constant dense<0.000000e+00> : vector<2x384xf32>
    %263 = tpu.matmul %260, %204, %cst_65 {dimension_numbers = #tpu.dot_dimension_numbers<[1], [0], [0], [1], [0, 0, 1, 1], [], []>} : vector<2x128xf32>, vector<128x384xf32>, vector<2x384xf32> -> vector<2x384xf32>
    %264 = arith.addf %263, %212 : vector<2x384xf32>
    %265 = vector.extract_strided_slice %262 {offsets = [0, 0], sizes = [2, 256], strides = [1, 1]} : vector<2x384xf32> to vector<2x256xf32>
    %266 = vector.extract_strided_slice %264 {offsets = [0, 0], sizes = [2, 256], strides = [1, 1]} : vector<2x384xf32> to vector<2x256xf32>
    %267 = arith.addf %265, %266 : vector<2x256xf32>
    %268 = arith.negf %267 : vector<2x256xf32>
    %269 = math.exp %268 : vector<2x256xf32>
    %cst_66 = arith.constant 1.000000e+00 : f32
    %270 = vector.broadcast %cst_66 : f32 to vector<2x256xf32>
    %271 = arith.addf %270, %269 : vector<2x256xf32>
    %272 = arith.divf %270, %271 : vector<2x256xf32>
    %273 = vector.extract_strided_slice %272 {offsets = [0, 0], sizes = [2, 128], strides = [1, 1]} : vector<2x256xf32> to vector<2x128xf32>
    %274 = vector.extract_strided_slice %272 {offsets = [0, 128], sizes = [2, 128], strides = [1, 1]} : vector<2x256xf32> to vector<2x128xf32>
    %275 = vector.extract_strided_slice %262 {offsets = [0, 256], sizes = [2, 128], strides = [1, 1]} : vector<2x384xf32> to vector<2x128xf32>
    %276 = vector.extract_strided_slice %264 {offsets = [0, 256], sizes = [2, 128], strides = [1, 1]} : vector<2x384xf32> to vector<2x128xf32>
    %277 = arith.mulf %273, %276 : vector<2x128xf32>
    %278 = arith.addf %275, %277 : vector<2x128xf32>
    %279 = math.tanh %278 : vector<2x128xf32>
    %cst_67 = arith.constant 1.000000e+00 : f32
    %280 = vector.broadcast %cst_67 : f32 to vector<2x128xf32>
    %281 = arith.subf %280, %274 : vector<2x128xf32>
    %282 = arith.mulf %281, %279 : vector<2x128xf32>
    %283 = arith.mulf %274, %260 : vector<2x128xf32>
    %284 = arith.addf %282, %283 : vector<2x128xf32>
    %c4_68 = arith.constant 4 : index
    %c0_69 = arith.constant 0 : index
    %285 = vector.load %arg12[%c4_68, %c0_69] : memref<16x128xf32, #tpu.memory_space<vmem>>, vector<2x128xf32>
    tpu.vector_store %arg12[%c4_68, %c0_69], %284 {strides = array<i32>} : memref<16x128xf32, #tpu.memory_space<vmem>>, vector<2x128xf32>,
    %286 = vector.extract_strided_slice %210 {offsets = [6, 0], sizes = [2, 384], strides = [1, 1]} : vector<16x384xf32> to vector<2x384xf32>
    %cst_70 = arith.constant dense<0.000000e+00> : vector<2x384xf32>
    %287 = tpu.matmul %284, %204, %cst_70 {dimension_numbers = #tpu.dot_dimension_numbers<[1], [0], [0], [1], [0, 0, 1, 1], [], []>} : vector<2x128xf32>, vector<128x384xf32>, vector<2x384xf32> -> vector<2x384xf32>
    %288 = arith.addf %287, %212 : vector<2x384xf32>
    %289 = vector.extract_strided_slice %286 {offsets = [0, 0], sizes = [2, 256], strides = [1, 1]} : vector<2x384xf32> to vector<2x256xf32>
    %290 = vector.extract_strided_slice %288 {offsets = [0, 0], sizes = [2, 256], strides = [1, 1]} : vector<2x384xf32> to vector<2x256xf32>
    %291 = arith.addf %289, %290 : vector<2x256xf32>
    %292 = arith.negf %291 : vector<2x256xf32>
    %293 = math.exp %292 : vector<2x256xf32>
    %cst_71 = arith.constant 1.000000e+00 : f32
    %294 = vector.broadcast %cst_71 : f32 to vector<2x256xf32>
    %295 = arith.addf %294, %293 : vector<2x256xf32>
    %296 = arith.divf %294, %295 : vector<2x256xf32>
    %297 = vector.extract_strided_slice %296 {offsets = [0, 0], sizes = [2, 128], strides = [1, 1]} : vector<2x256xf32> to vector<2x128xf32>
    %298 = vector.extract_strided_slice %296 {offsets = [0, 128], sizes = [2, 128], strides = [1, 1]} : vector<2x256xf32> to vector<2x128xf32>
    %299 = vector.extract_strided_slice %286 {offsets = [0, 256], sizes = [2, 128], strides = [1, 1]} : vector<2x384xf32> to vector<2x128xf32>
    %300 = vector.extract_strided_slice %288 {offsets = [0, 256], sizes = [2, 128], strides = [1, 1]} : vector<2x384xf32> to vector<2x128xf32>
    %301 = arith.mulf %297, %300 : vector<2x128xf32>
    %302 = arith.addf %299, %301 : vector<2x128xf32>
    %303 = math.tanh %302 : vector<2x128xf32>
    %cst_72 = arith.constant 1.000000e+00 : f32
    %304 = vector.broadcast %cst_72 : f32 to vector<2x128xf32>
    %305 = arith.subf %304, %298 : vector<2x128xf32>
    %306 = arith.mulf %305, %303 : vector<2x128xf32>
    %307 = arith.mulf %298, %284 : vector<2x128xf32>
    %308 = arith.addf %306, %307 : vector<2x128xf32>
    %c6_73 = arith.constant 6 : index
    %c0_74 = arith.constant 0 : index
    %309 = vector.load %arg12[%c6_73, %c0_74] : memref<16x128xf32, #tpu.memory_space<vmem>>, vector<2x128xf32>
    tpu.vector_store %arg12[%c6_73, %c0_74], %308 {strides = array<i32>} : memref<16x128xf32, #tpu.memory_space<vmem>>, vector<2x128xf32>,
    %310 = vector.extract_strided_slice %210 {offsets = [8, 0], sizes = [2, 384], strides = [1, 1]} : vector<16x384xf32> to vector<2x384xf32>
    %cst_75 = arith.constant dense<0.000000e+00> : vector<2x384xf32>
    %311 = tpu.matmul %308, %204, %cst_75 {dimension_numbers = #tpu.dot_dimension_numbers<[1], [0], [0], [1], [0, 0, 1, 1], [], []>} : vector<2x128xf32>, vector<128x384xf32>, vector<2x384xf32> -> vector<2x384xf32>
    %312 = arith.addf %311, %212 : vector<2x384xf32>
    %313 = vector.extract_strided_slice %310 {offsets = [0, 0], sizes = [2, 256], strides = [1, 1]} : vector<2x384xf32> to vector<2x256xf32>
    %314 = vector.extract_strided_slice %312 {offsets = [0, 0], sizes = [2, 256], strides = [1, 1]} : vector<2x384xf32> to vector<2x256xf32>
    %315 = arith.addf %313, %314 : vector<2x256xf32>
    %316 = arith.negf %315 : vector<2x256xf32>
    %317 = math.exp %316 : vector<2x256xf32>
    %cst_76 = arith.constant 1.000000e+00 : f32
    %318 = vector.broadcast %cst_76 : f32 to vector<2x256xf32>
    %319 = arith.addf %318, %317 : vector<2x256xf32>
    %320 = arith.divf %318, %319 : vector<2x256xf32>
    %321 = vector.extract_strided_slice %320 {offsets = [0, 0], sizes = [2, 128], strides = [1, 1]} : vector<2x256xf32> to vector<2x128xf32>
    %322 = vector.extract_strided_slice %320 {offsets = [0, 128], sizes = [2, 128], strides = [1, 1]} : vector<2x256xf32> to vector<2x128xf32>
    %323 = vector.extract_strided_slice %310 {offsets = [0, 256], sizes = [2, 128], strides = [1, 1]} : vector<2x384xf32> to vector<2x128xf32>
    %324 = vector.extract_strided_slice %312 {offsets = [0, 256], sizes = [2, 128], strides = [1, 1]} : vector<2x384xf32> to vector<2x128xf32>
    %325 = arith.mulf %321, %324 : vector<2x128xf32>
    %326 = arith.addf %323, %325 : vector<2x128xf32>
    %327 = math.tanh %326 : vector<2x128xf32>
    %cst_77 = arith.constant 1.000000e+00 : f32
    %328 = vector.broadcast %cst_77 : f32 to vector<2x128xf32>
    %329 = arith.subf %328, %322 : vector<2x128xf32>
    %330 = arith.mulf %329, %327 : vector<2x128xf32>
    %331 = arith.mulf %322, %308 : vector<2x128xf32>
    %332 = arith.addf %330, %331 : vector<2x128xf32>
    %c8_78 = arith.constant 8 : index
    %c0_79 = arith.constant 0 : index
    %333 = vector.load %arg12[%c8_78, %c0_79] : memref<16x128xf32, #tpu.memory_space<vmem>>, vector<2x128xf32>
    tpu.vector_store %arg12[%c8_78, %c0_79], %332 {strides = array<i32>} : memref<16x128xf32, #tpu.memory_space<vmem>>, vector<2x128xf32>,
    %334 = vector.extract_strided_slice %210 {offsets = [10, 0], sizes = [2, 384], strides = [1, 1]} : vector<16x384xf32> to vector<2x384xf32>
    %cst_80 = arith.constant dense<0.000000e+00> : vector<2x384xf32>
    %335 = tpu.matmul %332, %204, %cst_80 {dimension_numbers = #tpu.dot_dimension_numbers<[1], [0], [0], [1], [0, 0, 1, 1], [], []>} : vector<2x128xf32>, vector<128x384xf32>, vector<2x384xf32> -> vector<2x384xf32>
    %336 = arith.addf %335, %212 : vector<2x384xf32>
    %337 = vector.extract_strided_slice %334 {offsets = [0, 0], sizes = [2, 256], strides = [1, 1]} : vector<2x384xf32> to vector<2x256xf32>
    %338 = vector.extract_strided_slice %336 {offsets = [0, 0], sizes = [2, 256], strides = [1, 1]} : vector<2x384xf32> to vector<2x256xf32>
    %339 = arith.addf %337, %338 : vector<2x256xf32>
    %340 = arith.negf %339 : vector<2x256xf32>
    %341 = math.exp %340 : vector<2x256xf32>
    %cst_81 = arith.constant 1.000000e+00 : f32
    %342 = vector.broadcast %cst_81 : f32 to vector<2x256xf32>
    %343 = arith.addf %342, %341 : vector<2x256xf32>
    %344 = arith.divf %342, %343 : vector<2x256xf32>
    %345 = vector.extract_strided_slice %344 {offsets = [0, 0], sizes = [2, 128], strides = [1, 1]} : vector<2x256xf32> to vector<2x128xf32>
    %346 = vector.extract_strided_slice %344 {offsets = [0, 128], sizes = [2, 128], strides = [1, 1]} : vector<2x256xf32> to vector<2x128xf32>
    %347 = vector.extract_strided_slice %334 {offsets = [0, 256], sizes = [2, 128], strides = [1, 1]} : vector<2x384xf32> to vector<2x128xf32>
    %348 = vector.extract_strided_slice %336 {offsets = [0, 256], sizes = [2, 128], strides = [1, 1]} : vector<2x384xf32> to vector<2x128xf32>
    %349 = arith.mulf %345, %348 : vector<2x128xf32>
    %350 = arith.addf %347, %349 : vector<2x128xf32>
    %351 = math.tanh %350 : vector<2x128xf32>
    %cst_82 = arith.constant 1.000000e+00 : f32
    %352 = vector.broadcast %cst_82 : f32 to vector<2x128xf32>
    %353 = arith.subf %352, %346 : vector<2x128xf32>
    %354 = arith.mulf %353, %351 : vector<2x128xf32>
    %355 = arith.mulf %346, %332 : vector<2x128xf32>
    %356 = arith.addf %354, %355 : vector<2x128xf32>
    %c10_83 = arith.constant 10 : index
    %c0_84 = arith.constant 0 : index
    %357 = vector.load %arg12[%c10_83, %c0_84] : memref<16x128xf32, #tpu.memory_space<vmem>>, vector<2x128xf32>
    tpu.vector_store %arg12[%c10_83, %c0_84], %356 {strides = array<i32>} : memref<16x128xf32, #tpu.memory_space<vmem>>, vector<2x128xf32>,
    %358 = vector.extract_strided_slice %210 {offsets = [12, 0], sizes = [2, 384], strides = [1, 1]} : vector<16x384xf32> to vector<2x384xf32>
    %cst_85 = arith.constant dense<0.000000e+00> : vector<2x384xf32>
    %359 = tpu.matmul %356, %204, %cst_85 {dimension_numbers = #tpu.dot_dimension_numbers<[1], [0], [0], [1], [0, 0, 1, 1], [], []>} : vector<2x128xf32>, vector<128x384xf32>, vector<2x384xf32> -> vector<2x384xf32>
    %360 = arith.addf %359, %212 : vector<2x384xf32>
    %361 = vector.extract_strided_slice %358 {offsets = [0, 0], sizes = [2, 256], strides = [1, 1]} : vector<2x384xf32> to vector<2x256xf32>
    %362 = vector.extract_strided_slice %360 {offsets = [0, 0], sizes = [2, 256], strides = [1, 1]} : vector<2x384xf32> to vector<2x256xf32>
    %363 = arith.addf %361, %362 : vector<2x256xf32>
    %364 = arith.negf %363 : vector<2x256xf32>
    %365 = math.exp %364 : vector<2x256xf32>
    %cst_86 = arith.constant 1.000000e+00 : f32
    %366 = vector.broadcast %cst_86 : f32 to vector<2x256xf32>
    %367 = arith.addf %366, %365 : vector<2x256xf32>
    %368 = arith.divf %366, %367 : vector<2x256xf32>
    %369 = vector.extract_strided_slice %368 {offsets = [0, 0], sizes = [2, 128], strides = [1, 1]} : vector<2x256xf32> to vector<2x128xf32>
    %370 = vector.extract_strided_slice %368 {offsets = [0, 128], sizes = [2, 128], strides = [1, 1]} : vector<2x256xf32> to vector<2x128xf32>
    %371 = vector.extract_strided_slice %358 {offsets = [0, 256], sizes = [2, 128], strides = [1, 1]} : vector<2x384xf32> to vector<2x128xf32>
    %372 = vector.extract_strided_slice %360 {offsets = [0, 256], sizes = [2, 128], strides = [1, 1]} : vector<2x384xf32> to vector<2x128xf32>
    %373 = arith.mulf %369, %372 : vector<2x128xf32>
    %374 = arith.addf %371, %373 : vector<2x128xf32>
    %375 = math.tanh %374 : vector<2x128xf32>
    %cst_87 = arith.constant 1.000000e+00 : f32
    %376 = vector.broadcast %cst_87 : f32 to vector<2x128xf32>
    %377 = arith.subf %376, %370 : vector<2x128xf32>
    %378 = arith.mulf %377, %375 : vector<2x128xf32>
    %379 = arith.mulf %370, %356 : vector<2x128xf32>
    %380 = arith.addf %378, %379 : vector<2x128xf32>
    %c12_88 = arith.constant 12 : index
    %c0_89 = arith.constant 0 : index
    %381 = vector.load %arg12[%c12_88, %c0_89] : memref<16x128xf32, #tpu.memory_space<vmem>>, vector<2x128xf32>
    tpu.vector_store %arg12[%c12_88, %c0_89], %380 {strides = array<i32>} : memref<16x128xf32, #tpu.memory_space<vmem>>, vector<2x128xf32>,
    %382 = vector.extract_strided_slice %210 {offsets = [14, 0], sizes = [2, 384], strides = [1, 1]} : vector<16x384xf32> to vector<2x384xf32>
    %cst_90 = arith.constant dense<0.000000e+00> : vector<2x384xf32>
    %383 = tpu.matmul %380, %204, %cst_90 {dimension_numbers = #tpu.dot_dimension_numbers<[1], [0], [0], [1], [0, 0, 1, 1], [], []>} : vector<2x128xf32>, vector<128x384xf32>, vector<2x384xf32> -> vector<2x384xf32>
    %384 = arith.addf %383, %212 : vector<2x384xf32>
    %385 = vector.extract_strided_slice %382 {offsets = [0, 0], sizes = [2, 256], strides = [1, 1]} : vector<2x384xf32> to vector<2x256xf32>
    %386 = vector.extract_strided_slice %384 {offsets = [0, 0], sizes = [2, 256], strides = [1, 1]} : vector<2x384xf32> to vector<2x256xf32>
    %387 = arith.addf %385, %386 : vector<2x256xf32>
    %388 = arith.negf %387 : vector<2x256xf32>
    %389 = math.exp %388 : vector<2x256xf32>
    %cst_91 = arith.constant 1.000000e+00 : f32
    %390 = vector.broadcast %cst_91 : f32 to vector<2x256xf32>
    %391 = arith.addf %390, %389 : vector<2x256xf32>
    %392 = arith.divf %390, %391 : vector<2x256xf32>
    %393 = vector.extract_strided_slice %392 {offsets = [0, 0], sizes = [2, 128], strides = [1, 1]} : vector<2x256xf32> to vector<2x128xf32>
    %394 = vector.extract_strided_slice %392 {offsets = [0, 128], sizes = [2, 128], strides = [1, 1]} : vector<2x256xf32> to vector<2x128xf32>
    %395 = vector.extract_strided_slice %382 {offsets = [0, 256], sizes = [2, 128], strides = [1, 1]} : vector<2x384xf32> to vector<2x128xf32>
    %396 = vector.extract_strided_slice %384 {offsets = [0, 256], sizes = [2, 128], strides = [1, 1]} : vector<2x384xf32> to vector<2x128xf32>
    %397 = arith.mulf %393, %396 : vector<2x128xf32>
    %398 = arith.addf %395, %397 : vector<2x128xf32>
    %399 = math.tanh %398 : vector<2x128xf32>
    %cst_92 = arith.constant 1.000000e+00 : f32
    %400 = vector.broadcast %cst_92 : f32 to vector<2x128xf32>
    %401 = arith.subf %400, %394 : vector<2x128xf32>
    %402 = arith.mulf %401, %399 : vector<2x128xf32>
    %403 = arith.mulf %394, %380 : vector<2x128xf32>
    %404 = arith.addf %402, %403 : vector<2x128xf32>
    %c14_93 = arith.constant 14 : index
    %c0_94 = arith.constant 0 : index
    %405 = vector.load %arg12[%c14_93, %c0_94] : memref<16x128xf32, #tpu.memory_space<vmem>>, vector<2x128xf32>
    tpu.vector_store %arg12[%c14_93, %c0_94], %404 {strides = array<i32>} : memref<16x128xf32, #tpu.memory_space<vmem>>, vector<2x128xf32>,
    %c0_95 = arith.constant 0 : index
    %c0_96 = arith.constant 0 : index
    %406 = vector.load %arg12[%c0_95, %c0_96] : memref<16x128xf32, #tpu.memory_space<vmem>>, vector<16x128xf32>
    %c0_97 = arith.constant 0 : index
    %c0_98 = arith.constant 0 : index
    %407 = vector.load %arg9[%c0_97, %c0_98] : memref<128x128xf32, #tpu.memory_space<vmem>>, vector<128x128xf32>
    %cst_99 = arith.constant dense<0.000000e+00> : vector<16x128xf32>
    %408 = tpu.matmul %406, %407, %cst_99 {dimension_numbers = #tpu.dot_dimension_numbers<[1], [0], [0], [1], [0, 0, 1, 1], [], []>} : vector<16x128xf32>, vector<128x128xf32>, vector<16x128xf32> -> vector<16x128xf32>
    %c0_100 = arith.constant 0 : index
    %c0_101 = arith.constant 0 : index
    %409 = vector.load %arg10[%c0_100, %c0_101] : memref<1x128xf32, #tpu.memory_space<vmem>>, vector<1x128xf32>
    %410 = vector.broadcast %409 : vector<1x128xf32> to vector<16x128xf32>
    %411 = arith.addf %408, %410 : vector<16x128xf32>
    %412 = arith.negf %411 : vector<16x128xf32>
    %413 = math.exp %412 : vector<16x128xf32>
    %cst_102 = arith.constant 1.000000e+00 : f32
    %414 = vector.broadcast %cst_102 : f32 to vector<16x128xf32>
    %415 = arith.addf %414, %413 : vector<16x128xf32>
    %416 = arith.divf %414, %415 : vector<16x128xf32>
    %c0_103 = arith.constant 0 : index
    %c0_104 = arith.constant 0 : index
    %417 = vector.load %arg11[%c0_103, %c0_104] : memref<16x128xf32, #tpu.memory_space<vmem>>, vector<16x128xf32>
    tpu.vector_store %arg11[%c0_103, %c0_104], %416 {strides = array<i32>} : memref<16x128xf32, #tpu.memory_space<vmem>>, vector<16x128xf32>,
    return
  }
}

</mosaic_0001>

<llo_original>
// kernel: tpu_custom_call.1
$region0: #{tpu_custom_call.1}
  #allocation0 [shape = 'u32[]', space=smem, size = 0x4, offset = 0x4, fixed_abs, tag = 'smem constant byte address 0x4 - core index']
  #allocation1 [shape = 'u32[144,128]{1,0:T(1,128)}', space=vmem, size = 0x12000, scoped, tag = 'internal scratch']
  #allocation2 [shape = 'f32[16,128]{1,0:T(8,128)}', space=vmem, size = 0x2000, scoped, tag = 'scratch operand']
  %s0 = inlined_call_operand.vmem [shape: f32[16,8], index: 0, kind: input, shape index: {}]
  %s1 = inlined_call_operand.vmem [shape: f32[8,384], index: 1, kind: input, shape index: {}]
  %s2 = inlined_call_operand.hbm [shape: f32[128,384], index: 2, kind: input, shape index: {}]
  %s3 = inlined_call_operand.vmem [shape: f32[1,384], index: 3, kind: input, shape index: {}]
  %s4 = inlined_call_operand.vmem [shape: f32[1,384], index: 4, kind: input, shape index: {}]
  %s5 = inlined_call_operand.hbm [shape: f32[128,384], index: 5, kind: input, shape index: {}]
  %s6 = inlined_call_operand.hbm [shape: f32[128,384], index: 6, kind: input, shape index: {}]
  %s7 = inlined_call_operand.vmem [shape: f32[1,384], index: 7, kind: input, shape index: {}]
  %s8 = inlined_call_operand.vmem [shape: f32[1,384], index: 8, kind: input, shape index: {}]
  %s9 = inlined_call_operand.hbm [shape: f32[128,128], index: 9, kind: input, shape index: {}]
  %s10 = inlined_call_operand.vmem [shape: f32[1,128], index: 10, kind: input, shape index: {}]
  %s11 = inlined_call_operand.hbm [shape: f32[16,128], index: 11, kind: output, shape index: {}]
  %s12 = sld [smem:[#allocation0]]
  $region70: #{tpu_custom_call.1} parent=0
    _
  %s14 = ssub.s32 1, %s12
  %s15 = scalar_select 0, %s14, %s12
  $region1: #{tpu_custom_call.1} parent=0
    #allocation3 [shape = 'u8[196608]{0}', space=vmem, size = 0x30000, scoped, tag = 'input window, operand 2, single buffered']
    #allocation4 [shape = 's32[1]{0}', space=sflag, size = 0x4, scoped, tag = 'scoped memory for tpu_custom_call.1']
    #allocation5 [shape = 's32[1]{0}', space=sflag, size = 0x4, scoped, tag = 'scoped memory for tpu_custom_call.1']
    #allocation6 [shape = 'u8[196608]{0}', space=vmem, size = 0x30000, scoped, tag = 'input window, operand 5, single buffered']
    #allocation7 [shape = 's32[1]{0}', space=sflag, size = 0x4, scoped, tag = 'scoped memory for tpu_custom_call.1']
    #allocation8 [shape = 'u8[196608]{0}', space=vmem, size = 0x30000, scoped, tag = 'input window, operand 6, single buffered']
    #allocation9 [shape = 'u8[65536]{0}', space=vmem, size = 0x10000, scoped, tag = 'input window, operand 9, single buffered']
    #allocation10 [shape = 's32[1]{0}', space=sflag, size = 0x4, scoped, tag = 'scoped memory for tpu_custom_call.1']
    #allocation11 [shape = 'u8[8192]{0}', space=vmem, size = 0x2000, scoped, tag = 'output window, operand 0, single buffered']
    %16 = vsyncpa [#allocation4], 0
    %17 = vsyncpa [#allocation7], 0
    %18 = vsyncpa [#allocation10], 0
    %19 = vsyncpa [#allocation5], 0
    // Predicated region
    $region2: #{tpu_custom_call.1} parent=1 // pred_check
      _
    $region3: #{tpu_custom_call.1} parent=1 // pred_check_branch
      %21 = sbr.rel (0) target = $region5
    $region4: #{tpu_custom_call.1} parent=1 // pred_region
      _
    $region5: #{tpu_custom_call.1} parent=1 // pred_fallthru
      _
    // Predicated region
    $region6: #{tpu_custom_call.1} parent=1 // pred_check
      _
    $region7: #{tpu_custom_call.1} parent=1 // pred_check_branch
      %23 = sbr.rel (0) target = $region9
    $region8: #{tpu_custom_call.1} parent=1 // pred_region
      _
    $region9: #{tpu_custom_call.1} parent=1 // pred_fallthru
      _
    // Predicated region
    $region10: #{tpu_custom_call.1} parent=1 // pred_check
      _
    $region11: #{tpu_custom_call.1} parent=1 // pred_check_branch
      %25 = sbr.rel (0) target = $region13
    $region12: #{tpu_custom_call.1} parent=1 // pred_region
      %s27 = ssub.s32 6144, 6144
      %28 = vsyncadd [#allocation4], %s27
      %s29 = sshll.u32 [#allocation3], 4
      %s30 = int_to_ptr.vmem [resolvable:$true] %s29
      %35 = dma.hbm_to_vmem [thread:$0]  %s2, 6144, %s30, [#allocation4], 384, 384, 24
    $region13: #{tpu_custom_call.1} parent=1 // pred_fallthru
      _
    // Predicated region
    $region14: #{tpu_custom_call.1} parent=1 // pred_check
      _
    $region15: #{tpu_custom_call.1} parent=1 // pred_check_branch
      %37 = sbr.rel (0) target = $region17
    $region16: #{tpu_custom_call.1} parent=1 // pred_region
      _
    $region17: #{tpu_custom_call.1} parent=1 // pred_fallthru
      _
    // Predicated region
    $region18: #{tpu_custom_call.1} parent=1 // pred_check
      _
    $region19: #{tpu_custom_call.1} parent=1 // pred_check_branch
      %39 = sbr.rel (0) target = $region21
    $region20: #{tpu_custom_call.1} parent=1 // pred_region
      _
    $region21: #{tpu_custom_call.1} parent=1 // pred_fallthru
      _
    // Predicated region
    $region22: #{tpu_custom_call.1} parent=1 // pred_check
      _
    $region23: #{tpu_custom_call.1} parent=1 // pred_check_branch
      %41 = sbr.rel (0) target = $region25
    $region24: #{tpu_custom_call.1} parent=1 // pred_region
      %s43 = ssub.s32 6144, 6144
      %44 = vsyncadd [#allocation7], %s43
      %s45 = sshll.u32 [#allocation6], 4
      %s46 = int_to_ptr.vmem [resolvable:$true] %s45
      %51 = dma.hbm_to_vmem [thread:$0]  %s5, 6144, %s46, [#allocation7], 384, 384, 24
    $region25: #{tpu_custom_call.1} parent=1 // pred_fallthru
      _
    // Predicated region
    $region26: #{tpu_custom_call.1} parent=1 // pred_check
      _
    $region27: #{tpu_custom_call.1} parent=1 // pred_check_branch
      %53 = sbr.rel (0) target = $region29
    $region28: #{tpu_custom_call.1} parent=1 // pred_region
      %s55 = ssub.s32 6144, 6144
      %56 = vsyncadd [#allocation7], %s55
      %s57 = sshll.u32 [#allocation8], 4
      %s58 = int_to_ptr.vmem [resolvable:$true] %s57
      %63 = dma.hbm_to_vmem [thread:$0]  %s6, 6144, %s58, [#allocation7], 384, 384, 24
    $region29: #{tpu_custom_call.1} parent=1 // pred_fallthru
      _
    // Predicated region
    $region30: #{tpu_custom_call.1} parent=1 // pred_check
      _
    $region31: #{tpu_custom_call.1} parent=1 // pred_check_branch
      %65 = sbr.rel (0) target = $region33
    $region32: #{tpu_custom_call.1} parent=1 // pred_region
      _
    $region33: #{tpu_custom_call.1} parent=1 // pred_fallthru
      _
    // Predicated region
    $region34: #{tpu_custom_call.1} parent=1 // pred_check
      _
    $region35: #{tpu_custom_call.1} parent=1 // pred_check_branch
      %67 = sbr.rel (0) target = $region37
    $region36: #{tpu_custom_call.1} parent=1 // pred_region
      _
    $region37: #{tpu_custom_call.1} parent=1 // pred_fallthru
      _
    // Predicated region
    $region38: #{tpu_custom_call.1} parent=1 // pred_check
      _
    $region39: #{tpu_custom_call.1} parent=1 // pred_check_branch
      %69 = sbr.rel (0) target = $region41
    $region40: #{tpu_custom_call.1} parent=1 // pred_region
      %s71 = ssub.s32 2048, 2048
      %72 = vsyncadd [#allocation10], %s71
      %s73 = sshll.u32 [#allocation9], 4
      %s74 = int_to_ptr.vmem [resolvable:$true] %s73
      %79 = dma.hbm_to_vmem [thread:$0]  %s9, 2048, %s74, [#allocation10], 128, 128, 8
    $region41: #{tpu_custom_call.1} parent=1 // pred_fallthru
      _
    // Predicated region
    $region42: #{tpu_custom_call.1} parent=1 // pred_check
      _
    $region43: #{tpu_custom_call.1} parent=1 // pred_check_branch
      %81 = sbr.rel (0) target = $region45
    $region44: #{tpu_custom_call.1} parent=1 // pred_region
      _
    $region45: #{tpu_custom_call.1} parent=1 // pred_fallthru
      _
    // Predicated region
    $region46: #{tpu_custom_call.1} parent=1 // pred_check
      _
    $region47: #{tpu_custom_call.1} parent=1 // pred_check_branch
      %83 = sbr.rel (0) target = $region49
    $region48: #{tpu_custom_call.1} parent=1 // pred_region
      %84 = dma.done [#allocation4], 6144
    $region49: #{tpu_custom_call.1} parent=1 // pred_fallthru
      _
    // Predicated region
    $region50: #{tpu_custom_call.1} parent=1 // pred_check
      _
    $region51: #{tpu_custom_call.1} parent=1 // pred_check_branch
      %86 = sbr.rel (0) target = $region53
    $region52: #{tpu_custom_call.1} parent=1 // pred_region
      %87 = dma.done [#allocation7], 6144
    $region53: #{tpu_custom_call.1} parent=1 // pred_fallthru
      _
    // Predicated region
    $region54: #{tpu_custom_call.1} parent=1 // pred_check
      _
    $region55: #{tpu_custom_call.1} parent=1 // pred_check_branch
      %89 = sbr.rel (0) target = $region57
    $region56: #{tpu_custom_call.1} parent=1 // pred_region
      %90 = dma.done [#allocation7], 6144
    $region57: #{tpu_custom_call.1} parent=1 // pred_fallthru
      _
    // Predicated region
    $region58: #{tpu_custom_call.1} parent=1 // pred_check
      _
    $region59: #{tpu_custom_call.1} parent=1 // pred_check_branch
      %92 = sbr.rel (0) target = $region61
    $region60: #{tpu_custom_call.1} parent=1 // pred_region
      %93 = dma.done [#allocation10], 2048
    $region61: #{tpu_custom_call.1} parent=1 // pred_fallthru
      _
    %v94 = vld [vmem:[%s1] sm:$0xff]
    %v95 = vld [vmem:[%s1 + $0x8] sm:$0xff]
    %v96 = vld [vmem:[%s1 + $0x10] sm:$0xff]
    %v97 = vld [vmem:[#allocation3] sm:$0xff]
    %v98 = vld [vmem:[#allocation3 + $0x8] sm:$0xff]
    %v99 = vld [vmem:[#allocation3 + $0x10] sm:$0xff]
    %v100 = vld [vmem:[#allocation3 + $0x18] sm:$0xff]
    %v101 = vld [vmem:[#allocation3 + $0x20] sm:$0xff]
    %v102 = vld [vmem:[#allocation3 + $0x28] sm:$0xff]
    %v103 = vld [vmem:[#allocation3 + $0x30] sm:$0xff]
    %v104 = vld [vmem:[#allocation3 + $0x38] sm:$0xff]
    %v105 = vld [vmem:[#allocation3 + $0x40] sm:$0xff]
    %v106 = vld [vmem:[#allocation3 + $0x48] sm:$0xff]
    %v107 = vld [vmem:[#allocation3 + $0x50] sm:$0xff]
    %v108 = vld [vmem:[#allocation3 + $0x58] sm:$0xff]
    %v109 = vld [vmem:[#allocation3 + $0x60] sm:$0xff]
    %v110 = vld [vmem:[#allocation3 + $0x68] sm:$0xff]
    %v111 = vld [vmem:[#allocation3 + $0x70] sm:$0xff]
    %v112 = vld [vmem:[#allocation3 + $0x78] sm:$0xff]
    %v113 = vld [vmem:[#allocation3 + $0x80] sm:$0xff]
    %v114 = vld [vmem:[#allocation3 + $0x88] sm:$0xff]
    %v115 = vld [vmem:[#allocation3 + $0x90] sm:$0xff]
    %v116 = vld [vmem:[#allocation3 + $0x98] sm:$0xff]
    %v117 = vld [vmem:[#allocation3 + $0xa0] sm:$0xff]
    %v118 = vld [vmem:[#allocation3 + $0xa8] sm:$0xff]
    %v119 = vld [vmem:[#allocation3 + $0xb0] sm:$0xff]
    %v120 = vld [vmem:[#allocation3 + $0xb8] sm:$0xff]
    %v121 = vld [vmem:[#allocation3 + $0xc0] sm:$0xff]
    %v122 = vld [vmem:[#allocation3 + $0xc8] sm:$0xff]
    %v123 = vld [vmem:[#allocation3 + $0xd0] sm:$0xff]
    %v124 = vld [vmem:[#allocation3 + $0xd8] sm:$0xff]
    %v125 = vld [vmem:[#allocation3 + $0xe0] sm:$0xff]
    %v126 = vld [vmem:[#allocation3 + $0xe8] sm:$0xff]
    %v127 = vld [vmem:[#allocation3 + $0xf0] sm:$0xff]
    %v128 = vld [vmem:[#allocation3 + $0xf8] sm:$0xff]
    %v129 = vld [vmem:[#allocation3 + $0x100] sm:$0xff]
    %v130 = vld [vmem:[#allocation3 + $0x108] sm:$0xff]
    %v131 = vld [vmem:[#allocation3 + $0x110] sm:$0xff]
    %v132 = vld [vmem:[#allocation3 + $0x118] sm:$0xff]
    %v133 = vld [vmem:[#allocation3 + $0x120] sm:$0xff]
    %v134 = vld [vmem:[#allocation3 + $0x128] sm:$0xff]
    %v135 = vld [vmem:[#allocation3 + $0x130] sm:$0xff]
    %v136 = vld [vmem:[#allocation3 + $0x138] sm:$0xff]
    %v137 = vld [vmem:[#allocation3 + $0x140] sm:$0xff]
    %v138 = vld [vmem:[#allocation3 + $0x148] sm:$0xff]
    %v139 = vld [vmem:[#allocation3 + $0x150] sm:$0xff]
    %v140 = vld [vmem:[#allocation3 + $0x158] sm:$0xff]
    %v141 = vld [vmem:[#allocation3 + $0x160] sm:$0xff]
    %v142 = vld [vmem:[#allocation3 + $0x168] sm:$0xff]
    %v143 = vld [vmem:[#allocation3 + $0x170] sm:$0xff]
    %v144 = vld [vmem:[#allocation3 + $0x178] sm:$0xff]
    %v145 = vld [vmem:[%s3] sm:$0x7]
    %v146 = vld [vmem:[%s4] sm:$0x7]
    %v147 = vld [vmem:[%s0] sm:$0xff]
    %v148 = vld [vmem:[%s0 + $0x8] sm:$0xff]
    %v150 = vlaneseq
    %v151 = vshrl.u32 %v150, 7
    %v152 = vsub.s32 0, %v151
    %v153 = vrot.slane %v145, %v152
    %v154 = vlaneseq
    %v155 = vshrl.u32 %v154, 7
    %v156 = vsub.s32 1, %v155
    %v157 = vrot.slane %v145, %v156
    %v158 = vlaneseq
    %v159 = vshrl.u32 %v158, 7
    %v160 = vsub.s32 2, %v159
    %v161 = vrot.slane %v145, %v160
    %vm165 = vcmask 64512
    %v167 = vsel %vm165, %v147, 0
    %v170 = vsel %vm165, %v148, 0
    %172 = vmatprep.subr.mxu0 0.0
    %173 = vmatpush1.msra.mxu0 0.0
    %174 = vmatprep.subr.mxu0 0.0
    %175 = vmatpush1.msra.mxu0 0.0
    %176 = vmatprep.subr.mxu0 0.0
    %177 = vmatpush1.msra.mxu0 0.0
    %178 = vmatprep.subr.mxu0 0.0
    %179 = vmatpush1.msra.mxu0 0.0
    %180 = vmatprep.subr.mxu0 0.0
    %181 = vmatpush1.msra.mxu0 0.0
    %182 = vmatprep.subr.mxu0 0.0
    %183 = vmatpush1.msra.mxu0 0.0
    %184 = vmatprep.subr.mxu0 0.0
    %185 = vmatpush1.msra.mxu0 0.0
    %186 = vmatprep.subr.mxu0 0.0
    %187 = vmatpush1.msra.mxu0 0.0
    %188 = vmatprep.subr.mxu0 0.0
    %189 = vmatpush1.msra.mxu0 0.0
    %190 = vmatprep.subr.mxu0 0.0
    %191 = vmatpush1.msra.mxu0 0.0
    %192 = vmatprep.subr.mxu0 0.0
    %193 = vmatpush1.msra.mxu0 0.0
    %194 = vmatprep.subr.mxu0 0.0
    %195 = vmatpush1.msra.mxu0 0.0
    %196 = vmatprep.subr.mxu0 0.0
    %197 = vmatpush1.msra.mxu0 0.0
    %198 = vmatprep.subr.mxu0 0.0
    %199 = vmatpush1.msra.mxu0 0.0
    %200 = vmatprep.subr.mxu0 0.0
    %201 = vmatpush1.msra.mxu0 0.0
    %202 = vmatprep.subr.mxu0 %v95
    %203 = vmatpush1.msra.mxu0 %v94
    %204 = vmatprep.subr.mxu0 0.0
    %205 = vmatpush2.msra.mxu0 0.0
    %206 = vmatprep.subr.mxu0 0.0
    %207 = vmatpush2.msra.mxu0 0.0
    %208 = vmatprep.subr.mxu0 0.0
    %209 = vmatpush2.msra.mxu0 0.0
    %210 = vmatprep.subr.mxu0 0.0
    %211 = vmatpush2.msra.mxu0 0.0
    %212 = vmatprep.subr.mxu0 0.0
    %213 = vmatpush2.msra.mxu0 0.0
    %214 = vmatprep.subr.mxu0 0.0
    %215 = vmatpush2.msra.mxu0 0.0
    %216 = vmatprep.subr.mxu0 0.0
    %217 = vmatpush2.msra.mxu0 0.0
    %218 = vmatprep.subr.mxu0 0.0
    %219 = vmatpush2.msra.mxu0 0.0
    %220 = vmatprep.subr.mxu0 0.0
    %221 = vmatpush2.msra.mxu0 0.0
    %222 = vmatprep.subr.mxu0 0.0
    %223 = vmatpush2.msra.mxu0 0.0
    %224 = vmatprep.subr.mxu0 0.0
    %225 = vmatpush2.msra.mxu0 0.0
    %226 = vmatprep.subr.mxu0 0.0
    %227 = vmatpush2.msra.mxu0 0.0
    %228 = vmatprep.subr.mxu0 0.0
    %229 = vmatpush2.msra.mxu0 0.0
    %230 = vmatprep.subr.mxu0 0.0
    %231 = vmatpush2.msra.mxu0 0.0
    %232 = vmatprep.subr.mxu0 0.0
    %233 = vmatpush2.msra.mxu0 0.0
    %234 = vmatprep.subr.mxu0 0.0
    %235 = vmatpush2.msra.mxu0 0.0
    %236 = vmatprep.mubr.f32.mxu0 0.0
    %237 = vmatmul.mubr.f32.gmra.mxu0 %v167
    %v238 = vpop.f32.mrf.mxu0
    %v239 = vadd.f32 %v153, %v238
    %v240 = vpop.f32.mrf.mxu0
    %v241 = vadd.f32 %v157, %v240
    %242 = vmatprep.mubr.f32.mxu0 0.0
    %243 = vmatmul.mubr.f32.gmra.mxu0 %v170
    %v244 = vpop.f32.mrf.mxu0
    %v245 = vadd.f32 %v153, %v244
    %v246 = vpop.f32.mrf.mxu0
    %v247 = vadd.f32 %v157, %v246
    %248 = vdwg.mxu0
    %249 = vmatprep.subr.mxu0 0.0
    %250 = vmatpush1.msra.mxu0 0.0
    %251 = vmatprep.subr.mxu0 0.0
    %252 = vmatpush1.msra.mxu0 0.0
    %253 = vmatprep.subr.mxu0 0.0
    %254 = vmatpush1.msra.mxu0 0.0
    %255 = vmatprep.subr.mxu0 0.0
    %256 = vmatpush1.msra.mxu0 0.0
    %257 = vmatprep.subr.mxu0 0.0
    %258 = vmatpush1.msra.mxu0 0.0
    %259 = vmatprep.subr.mxu0 0.0
    %260 = vmatpush1.msra.mxu0 0.0
    %261 = vmatprep.subr.mxu0 0.0
    %262 = vmatpush1.msra.mxu0 0.0
    %263 = vmatprep.subr.mxu0 0.0
    %264 = vmatpush1.msra.mxu0 0.0
    %265 = vmatprep.subr.mxu0 0.0
    %266 = vmatpush1.msra.mxu0 0.0
    %267 = vmatprep.subr.mxu0 0.0
    %268 = vmatpush1.msra.mxu0 0.0
    %269 = vmatprep.subr.mxu0 0.0
    %270 = vmatpush1.msra.mxu0 0.0
    %271 = vmatprep.subr.mxu0 0.0
    %272 = vmatpush1.msra.mxu0 0.0
    %273 = vmatprep.subr.mxu0 0.0
    %274 = vmatpush1.msra.mxu0 0.0
    %275 = vmatprep.subr.mxu0 0.0
    %276 = vmatpush1.msra.mxu0 0.0
    %277 = vmatprep.subr.mxu0 0.0
    %278 = vmatpush1.msra.mxu0 0.0
    %279 = vmatprep.subr.mxu0 0.0
    %280 = vmatpush1.msra.mxu0 %v96
    %281 = vmatprep.subr.mxu0 0.0
    %282 = vmatpush2.msra.mxu0 0.0
    %283 = vmatprep.subr.mxu0 0.0
    %284 = vmatpush2.msra.mxu0 0.0
    %285 = vmatprep.subr.mxu0 0.0
    %286 = vmatpush2.msra.mxu0 0.0
    %287 = vmatprep.subr.mxu0 0.0
    %288 = vmatpush2.msra.mxu0 0.0
    %289 = vmatprep.subr.mxu0 0.0
    %290 = vmatpush2.msra.mxu0 0.0
    %291 = vmatprep.subr.mxu0 0.0
    %292 = vmatpush2.msra.mxu0 0.0
    %293 = vmatprep.subr.mxu0 0.0
    %294 = vmatpush2.msra.mxu0 0.0
    %295 = vmatprep.subr.mxu0 0.0
    %296 = vmatpush2.msra.mxu0 0.0
    %297 = vmatprep.subr.mxu0 0.0
    %298 = vmatpush2.msra.mxu0 0.0
    %299 = vmatprep.subr.mxu0 0.0
    %300 = vmatpush2.msra.mxu0 0.0
    %301 = vmatprep.subr.mxu0 0.0
    %302 = vmatpush2.msra.mxu0 0.0
    %303 = vmatprep.subr.mxu0 0.0
    %304 = vmatpush2.msra.mxu0 0.0
    %305 = vmatprep.subr.mxu0 0.0
    %306 = vmatpush2.msra.mxu0 0.0
    %307 = vmatprep.subr.mxu0 0.0
    %308 = vmatpush2.msra.mxu0 0.0
    %309 = vmatprep.subr.mxu0 0.0
    %310 = vmatpush2.msra.mxu0 0.0
    %311 = vmatprep.subr.mxu0 0.0
    %312 = vmatpush2.msra.mxu0 0.0
    %313 = vmatprep.mubr.f32.mxu0 0.0
    %314 = vmatmul.mubr.f32.gmra.mxu0 %v167
    %v315 = vpop.f32.mrf.mxu0
    %v316 = vadd.f32 %v161, %v315
    %v317 = vpop.f32.mrf.mxu0
    %318 = vmatprep.mubr.f32.mxu0 0.0
    %319 = vmatmul.mubr.f32.gmra.mxu0 %v170
    %v320 = vpop.f32.mrf.mxu0
    %v321 = vadd.f32 %v161, %v320
    %v322 = vpop.f32.mrf.mxu0
    %323 = vdwg.mxu0
    %v325 = vlaneseq
    %v326 = vshrl.u32 %v325, 7
    %v327 = vsub.s32 0, %v326
    %v328 = vrot.slane %v146, %v327
    %v329 = vlaneseq
    %v330 = vshrl.u32 %v329, 7
    %v331 = vsub.s32 1, %v330
    %v332 = vrot.slane %v146, %v331
    %v333 = vlaneseq
    %v334 = vshrl.u32 %v333, 7
    %v335 = vsub.s32 2, %v334
    %v336 = vrot.slane %v146, %v335
    %340 = vmatprep.subr.mxu0 %v143
    %341 = vmatpush1.msra.mxu0 %v142
    %342 = vmatprep.subr.mxu0 %v140
    %343 = vmatpush1.msra.mxu0 %v139
    %344 = vmatprep.subr.mxu0 %v137
    %345 = vmatpush1.msra.mxu0 %v136
    %346 = vmatprep.subr.mxu0 %v134
    %347 = vmatpush1.msra.mxu0 %v133
    %348 = vmatprep.subr.mxu0 %v131
    %349 = vmatpush1.msra.mxu0 %v130
    %350 = vmatprep.subr.mxu0 %v128
    %351 = vmatpush1.msra.mxu0 %v127
    %352 = vmatprep.subr.mxu0 %v125
    %353 = vmatpush1.msra.mxu0 %v124
    %354 = vmatprep.subr.mxu0 %v122
    %355 = vmatpush1.msra.mxu0 %v121
    %356 = vmatprep.subr.mxu0 %v119
    %357 = vmatpush1.msra.mxu0 %v118
    %358 = vmatprep.subr.mxu0 %v116
    %359 = vmatpush1.msra.mxu0 %v115
    %360 = vmatprep.subr.mxu0 %v113
    %361 = vmatpush1.msra.mxu0 %v112
    %362 = vmatprep.subr.mxu0 %v110
    %363 = vmatpush1.msra.mxu0 %v109
    %364 = vmatprep.subr.mxu0 %v107
    %365 = vmatpush1.msra.mxu0 %v106
    %366 = vmatprep.subr.mxu0 %v104
    %367 = vmatpush1.msra.mxu0 %v103
    %368 = vmatprep.subr.mxu0 %v101
    %369 = vmatpush1.msra.mxu0 %v100
    %370 = vmatprep.subr.mxu0 %v98
    %371 = vmatpush1.msra.mxu0 %v97
    %372 = vmatprep.subr.mxu0 0.0
    %373 = vmatpush2.msra.mxu0 0.0
    %374 = vmatprep.subr.mxu0 0.0
    %375 = vmatpush2.msra.mxu0 0.0
    %376 = vmatprep.subr.mxu0 0.0
    %377 = vmatpush2.msra.mxu0 0.0
    %378 = vmatprep.subr.mxu0 0.0
    %379 = vmatpush2.msra.mxu0 0.0
    %380 = vmatprep.subr.mxu0 0.0
    %381 = vmatpush2.msra.mxu0 0.0
    %382 = vmatprep.subr.mxu0 0.0
    %383 = vmatpush2.msra.mxu0 0.0
    %384 = vmatprep.subr.mxu0 0.0
    %385 = vmatpush2.msra.mxu0 0.0
    %386 = vmatprep.subr.mxu0 0.0
    %387 = vmatpush2.msra.mxu0 0.0
    %388 = vmatprep.subr.mxu0 0.0
    %389 = vmatpush2.msra.mxu0 0.0
    %390 = vmatprep.subr.mxu0 0.0
    %391 = vmatpush2.msra.mxu0 0.0
    %392 = vmatprep.subr.mxu0 0.0
    %393 = vmatpush2.msra.mxu0 0.0
    %394 = vmatprep.subr.mxu0 0.0
    %395 = vmatpush2.msra.mxu0 0.0
    %396 = vmatprep.subr.mxu0 0.0
    %397 = vmatpush2.msra.mxu0 0.0
    %398 = vmatprep.subr.mxu0 0.0
    %399 = vmatpush2.msra.mxu0 0.0
    %400 = vmatprep.subr.mxu0 0.0
    %401 = vmatpush2.msra.mxu0 0.0
    %402 = vmatprep.subr.mxu0 0.0
    %403 = vmatpush2.msra.mxu0 0.0
    %404 = vmatprep.mubr.f32.mxu0 0.0
    %405 = vmatmul.mubr.f32.gmra.mxu0 0.0
    %v406 = vpop.f32.mrf.mxu0
    %v407 = vadd.f32 %v328, %v406
    %v408 = vpop.f32.mrf.mxu0
    %v409 = vadd.f32 %v332, %v408
    %410 = vdwg.mxu0
    %411 = vmatprep.subr.mxu0 0.0
    %412 = vmatpush1.msra.mxu0 %v144
    %413 = vmatprep.subr.mxu0 0.0
    %414 = vmatpush1.msra.mxu0 %v141
    %415 = vmatprep.subr.mxu0 0.0
    %416 = vmatpush1.msra.mxu0 %v138
    %417 = vmatprep.subr.mxu0 0.0
    %418 = vmatpush1.msra.mxu0 %v135
    %419 = vmatprep.subr.mxu0 0.0
    %420 = vmatpush1.msra.mxu0 %v132
    %421 = vmatprep.subr.mxu0 0.0
    %422 = vmatpush1.msra.mxu0 %v129
    %423 = vmatprep.subr.mxu0 0.0
    %424 = vmatpush1.msra.mxu0 %v126
    %425 = vmatprep.subr.mxu0 0.0
    %426 = vmatpush1.msra.mxu0 %v123
    %427 = vmatprep.subr.mxu0 0.0
    %428 = vmatpush1.msra.mxu0 %v120
    %429 = vmatprep.subr.mxu0 0.0
    %430 = vmatpush1.msra.mxu0 %v117
    %431 = vmatprep.subr.mxu0 0.0
    %432 = vmatpush1.msra.mxu0 %v114
    %433 = vmatprep.subr.mxu0 0.0
    %434 = vmatpush1.msra.mxu0 %v111
    %435 = vmatprep.subr.mxu0 0.0
    %436 = vmatpush1.msra.mxu0 %v108
    %437 = vmatprep.subr.mxu0 0.0
    %438 = vmatpush1.msra.mxu0 %v105
    %439 = vmatprep.subr.mxu0 0.0
    %440 = vmatpush1.msra.mxu0 %v102
    %441 = vmatprep.subr.mxu0 0.0
    %442 = vmatpush1.msra.mxu0 %v99
    %443 = vmatprep.subr.mxu0 0.0
    %444 = vmatpush2.msra.mxu0 0.0
    %445 = vmatprep.subr.mxu0 0.0
    %446 = vmatpush2.msra.mxu0 0.0
    %447 = vmatprep.subr.mxu0 0.0
    %448 = vmatpush2.msra.mxu0 0.0
    %449 = vmatprep.subr.mxu0 0.0
    %450 = vmatpush2.msra.mxu0 0.0
    %451 = vmatprep.subr.mxu0 0.0
    %452 = vmatpush2.msra.mxu0 0.0
    %453 = vmatprep.subr.mxu0 0.0
    %454 = vmatpush2.msra.mxu0 0.0
    %455 = vmatprep.subr.mxu0 0.0
    %456 = vmatpush2.msra.mxu0 0.0
    %457 = vmatprep.subr.mxu0 0.0
    %458 = vmatpush2.msra.mxu0 0.0
    %459 = vmatprep.subr.mxu0 0.0
    %460 = vmatpush2.msra.mxu0 0.0
    %461 = vmatprep.subr.mxu0 0.0
    %462 = vmatpush2.msra.mxu0 0.0
    %463 = vmatprep.subr.mxu0 0.0
    %464 = vmatpush2.msra.mxu0 0.0
    %465 = vmatprep.subr.mxu0 0.0
    %466 = vmatpush2.msra.mxu0 0.0
    %467 = vmatprep.subr.mxu0 0.0
    %468 = vmatpush2.msra.mxu0 0.0
    %469 = vmatprep.subr.mxu0 0.0
    %470 = vmatpush2.msra.mxu0 0.0
    %471 = vmatprep.subr.mxu0 0.0
    %472 = vmatpush2.msra.mxu0 0.0
    %473 = vmatprep.subr.mxu0 0.0
    %474 = vmatpush2.msra.mxu0 0.0
    %475 = vmatprep.mubr.f32.mxu0 0.0
    %476 = vmatmul.mubr.f32.gmra.mxu0 0.0
    %v477 = vpop.f32.mrf.mxu0
    %v478 = vadd.f32 %v336, %v477
    %v479 = vpop.f32.mrf.mxu0
    %480 = vdwg.mxu0
    %v481 = vadd.f32 %v239, %v407
    %v482 = vadd.f32 %v241, %v409
    %v483 = vxor.u32 %v481, 2147483648
    %v484 = vxor.u32 %v482, 2147483648
    %v485 = vmul.f32 %v483, 1.442695
    %v486 = vpow.pop %v485
    %v487 = vmul.f32 %v484, 1.442695
    %v488 = vpow.pop %v487
    %v489 = vadd.f32 %v486, 1.0
    %v490 = vadd.f32 %v488, 1.0
    %v491 = vrcp.pop %v489
    %v492 = vmul.f32 1.0, %v491
    %v493 = vrcp.pop %v490
    %v494 = vmul.f32 1.0, %v493
    %v495 = vmul.f32 %v492, %v478
    %v496 = vadd.f32 %v316, %v495
    %v497 = vtanh.pop %v496
    %v498 = vsub.f32 1.0, %v494
    %v499 = vmul.f32 %v498, %v497
    %v500 = vmul.f32 %v494, 0.0
    %v501 = vadd.f32 %v499, %v500
    %502 = vst [vmem:[#allocation2] sm:$0x3] %v501
    %503 = vmatprep.subr.mxu0 %v143
    %504 = vmatpush1.msra.mxu0 %v142
    %505 = vmatprep.subr.mxu0 %v140
    %506 = vmatpush1.msra.mxu0 %v139
    %507 = vmatprep.subr.mxu0 %v137
    %508 = vmatpush1.msra.mxu0 %v136
    %509 = vmatprep.subr.mxu0 %v134
    %510 = vmatpush1.msra.mxu0 %v133
    %511 = vmatprep.subr.mxu0 %v131
    %512 = vmatpush1.msra.mxu0 %v130
    %513 = vmatprep.subr.mxu0 %v128
    %514 = vmatpush1.msra.mxu0 %v127
    %515 = vmatprep.subr.mxu0 %v125
    %516 = vmatpush1.msra.mxu0 %v124
    %517 = vmatprep.subr.mxu0 %v122
    %518 = vmatpush1.msra.mxu0 %v121
    %519 = vmatprep.subr.mxu0 %v119
    %520 = vmatpush1.msra.mxu0 %v118
    %521 = vmatprep.subr.mxu0 %v116
    %522 = vmatpush1.msra.mxu0 %v115
    %523 = vmatprep.subr.mxu0 %v113
    %524 = vmatpush1.msra.mxu0 %v112
    %525 = vmatprep.subr.mxu0 %v110
    %526 = vmatpush1.msra.mxu0 %v109
    %527 = vmatprep.subr.mxu0 %v107
    %528 = vmatpush1.msra.mxu0 %v106
    %529 = vmatprep.subr.mxu0 %v104
    %530 = vmatpush1.msra.mxu0 %v103
    %531 = vmatprep.subr.mxu0 %v101
    %532 = vmatpush1.msra.mxu0 %v100
    %533 = vmatprep.subr.mxu0 %v98
    %534 = vmatpush1.msra.mxu0 %v97
    %535 = vmatprep.subr.mxu0 0.0
    %536 = vmatpush2.msra.mxu0 0.0
    %537 = vmatprep.subr.mxu0 0.0
    %538 = vmatpush2.msra.mxu0 0.0
    %539 = vmatprep.subr.mxu0 0.0
    %540 = vmatpush2.msra.mxu0 0.0
    %541 = vmatprep.subr.mxu0 0.0
    %542 = vmatpush2.msra.mxu0 0.0
    %543 = vmatprep.subr.mxu0 0.0
    %544 = vmatpush2.msra.mxu0 0.0
    %545 = vmatprep.subr.mxu0 0.0
    %546 = vmatpush2.msra.mxu0 0.0
    %547 = vmatprep.subr.mxu0 0.0
    %548 = vmatpush2.msra.mxu0 0.0
    %549 = vmatprep.subr.mxu0 0.0
    %550 = vmatpush2.msra.mxu0 0.0
    %551 = vmatprep.subr.mxu0 0.0
    %552 = vmatpush2.msra.mxu0 0.0
    %553 = vmatprep.subr.mxu0 0.0
    %554 = vmatpush2.msra.mxu0 0.0
    %555 = vmatprep.subr.mxu0 0.0
    %556 = vmatpush2.msra.mxu0 0.0
    %557 = vmatprep.subr.mxu0 0.0
    %558 = vmatpush2.msra.mxu0 0.0
    %559 = vmatprep.subr.mxu0 0.0
    %560 = vmatpush2.msra.mxu0 0.0
    %561 = vmatprep.subr.mxu0 0.0
    %562 = vmatpush2.msra.mxu0 0.0
    %563 = vmatprep.subr.mxu0 0.0
    %564 = vmatpush2.msra.mxu0 0.0
    %565 = vmatprep.subr.mxu0 0.0
    %566 = vmatpush2.msra.mxu0 0.0
    %567 = vmatprep.mubr.f32.mxu0 0.0
    %568 = vmatmul.mubr.f32.gmra.mxu0 %v501
    %v569 = vpop.f32.mrf.mxu0
    %v570 = vadd.f32 %v328, %v569
    %v571 = vpop.f32.mrf.mxu0
    %v572 = vadd.f32 %v332, %v571
    %573 = vdwg.mxu0
    %574 = vmatprep.subr.mxu0 0.0
    %575 = vmatpush1.msra.mxu0 %v144
    %576 = vmatprep.subr.mxu0 0.0
    %577 = vmatpush1.msra.mxu0 %v141
    %578 = vmatprep.subr.mxu0 0.0
    %579 = vmatpush1.msra.mxu0 %v138
    %580 = vmatprep.subr.mxu0 0.0
    %581 = vmatpush1.msra.mxu0 %v135
    %582 = vmatprep.subr.mxu0 0.0
    %583 = vmatpush1.msra.mxu0 %v132
    %584 = vmatprep.subr.mxu0 0.0
    %585 = vmatpush1.msra.mxu0 %v129
    %586 = vmatprep.subr.mxu0 0.0
    %587 = vmatpush1.msra.mxu0 %v126
    %588 = vmatprep.subr.mxu0 0.0
    %589 = vmatpush1.msra.mxu0 %v123
    %590 = vmatprep.subr.mxu0 0.0
    %591 = vmatpush1.msra.mxu0 %v120
    %592 = vmatprep.subr.mxu0 0.0
    %593 = vmatpush1.msra.mxu0 %v117
    %594 = vmatprep.subr.mxu0 0.0
    %595 = vmatpush1.msra.mxu0 %v114
    %596 = vmatprep.subr.mxu0 0.0
    %597 = vmatpush1.msra.mxu0 %v111
    %598 = vmatprep.subr.mxu0 0.0
    %599 = vmatpush1.msra.mxu0 %v108
    %600 = vmatprep.subr.mxu0 0.0
    %601 = vmatpush1.msra.mxu0 %v105
    %602 = vmatprep.subr.mxu0 0.0
    %603 = vmatpush1.msra.mxu0 %v102
    %604 = vmatprep.subr.mxu0 0.0
    %605 = vmatpush1.msra.mxu0 %v99
    %606 = vmatprep.subr.mxu0 0.0
    %607 = vmatpush2.msra.mxu0 0.0
    %608 = vmatprep.subr.mxu0 0.0
    %609 = vmatpush2.msra.mxu0 0.0
    %610 = vmatprep.subr.mxu0 0.0
    %611 = vmatpush2.msra.mxu0 0.0
    %612 = vmatprep.subr.mxu0 0.0
    %613 = vmatpush2.msra.mxu0 0.0
    %614 = vmatprep.subr.mxu0 0.0
    %615 = vmatpush2.msra.mxu0 0.0
    %616 = vmatprep.subr.mxu0 0.0
    %617 = vmatpush2.msra.mxu0 0.0
    %618 = vmatprep.subr.mxu0 0.0
    %619 = vmatpush2.msra.mxu0 0.0
    %620 = vmatprep.subr.mxu0 0.0
    %621 = vmatpush2.msra.mxu0 0.0
    %622 = vmatprep.subr.mxu0 0.0
    %623 = vmatpush2.msra.mxu0 0.0
    %624 = vmatprep.subr.mxu0 0.0
    %625 = vmatpush2.msra.mxu0 0.0
    %626 = vmatprep.subr.mxu0 0.0
    %627 = vmatpush2.msra.mxu0 0.0
    %628 = vmatprep.subr.mxu0 0.0
    %629 = vmatpush2.msra.mxu0 0.0
    %630 = vmatprep.subr.mxu0 0.0
    %631 = vmatpush2.msra.mxu0 0.0
    %632 = vmatprep.subr.mxu0 0.0
    %633 = vmatpush2.msra.mxu0 0.0
    %634 = vmatprep.subr.mxu0 0.0
    %635 = vmatpush2.msra.mxu0 0.0
    %636 = vmatprep.subr.mxu0 0.0
    %637 = vmatpush2.msra.mxu0 0.0
    %638 = vmatprep.mubr.f32.mxu0 0.0
    %639 = vmatmul.mubr.f32.gmra.mxu0 %v501
    %v640 = vpop.f32.mrf.mxu0
    %v641 = vadd.f32 %v336, %v640
    %v642 = vpop.f32.mrf.mxu0
    %643 = vdwg.mxu0
    %v646 = vrot.slane %v570, 6
    %v647 = vrot.slane %v572, 6
    %v650 = vadd.f32 %v239, %v646
    %v651 = vadd.f32 %v241, %v647
    %v652 = vxor.u32 %v650, 2147483648
    %v653 = vxor.u32 %v651, 2147483648
    %v654 = vmul.f32 %v652, 1.442695
    %v655 = vpow.pop %v654
    %v656 = vmul.f32 %v653, 1.442695
    %v657 = vpow.pop %v656
    %v658 = vadd.f32 %v655, 1.0
    %v659 = vadd.f32 %v657, 1.0
    %v660 = vrcp.pop %v658
    %v661 = vmul.f32 1.0, %v660
    %v662 = vrcp.pop %v659
    %v663 = vmul.f32 1.0, %v662
    %v665 = vrot.slane %v641, 6
    %v667 = vmul.f32 %v661, %v665
    %v668 = vadd.f32 %v316, %v667
    %v669 = vtanh.pop %v668
    %v670 = vsub.f32 1.0, %v663
    %v671 = vmul.f32 %v670, %v669
    %v673 = vrot.slane %v501, 6
    %v675 = vmul.f32 %v663, %v673
    %v676 = vadd.f32 %v671, %v675
    %677 = vst [vmem:[#allocation2] sm:$0xc] %v676
    %v679 = vrot.slane %v676, 2
    %681 = vmatprep.subr.mxu0 %v143
    %682 = vmatpush1.msra.mxu0 %v142
    %683 = vmatprep.subr.mxu0 %v140
    %684 = vmatpush1.msra.mxu0 %v139
    %685 = vmatprep.subr.mxu0 %v137
    %686 = vmatpush1.msra.mxu0 %v136
    %687 = vmatprep.subr.mxu0 %v134
    %688 = vmatpush1.msra.mxu0 %v133
    %689 = vmatprep.subr.mxu0 %v131
    %690 = vmatpush1.msra.mxu0 %v130
    %691 = vmatprep.subr.mxu0 %v128
    %692 = vmatpush1.msra.mxu0 %v127
    %693 = vmatprep.subr.mxu0 %v125
    %694 = vmatpush1.msra.mxu0 %v124
    %695 = vmatprep.subr.mxu0 %v122
    %696 = vmatpush1.msra.mxu0 %v121
    %697 = vmatprep.subr.mxu0 %v119
    %698 = vmatpush1.msra.mxu0 %v118
    %699 = vmatprep.subr.mxu0 %v116
    %700 = vmatpush1.msra.mxu0 %v115
    %701 = vmatprep.subr.mxu0 %v113
    %702 = vmatpush1.msra.mxu0 %v112
    %703 = vmatprep.subr.mxu0 %v110
    %704 = vmatpush1.msra.mxu0 %v109
    %705 = vmatprep.subr.mxu0 %v107
    %706 = vmatpush1.msra.mxu0 %v106
    %707 = vmatprep.subr.mxu0 %v104
    %708 = vmatpush1.msra.mxu0 %v103
    %709 = vmatprep.subr.mxu0 %v101
    %710 = vmatpush1.msra.mxu0 %v100
    %711 = vmatprep.subr.mxu0 %v98
    %712 = vmatpush1.msra.mxu0 %v97
    %713 = vmatprep.subr.mxu0 0.0
    %714 = vmatpush2.msra.mxu0 0.0
    %715 = vmatprep.subr.mxu0 0.0
    %716 = vmatpush2.msra.mxu0 0.0
    %717 = vmatprep.subr.mxu0 0.0
    %718 = vmatpush2.msra.mxu0 0.0
    %719 = vmatprep.subr.mxu0 0.0
    %720 = vmatpush2.msra.mxu0 0.0
    %721 = vmatprep.subr.mxu0 0.0
    %722 = vmatpush2.msra.mxu0 0.0
    %723 = vmatprep.subr.mxu0 0.0
    %724 = vmatpush2.msra.mxu0 0.0
    %725 = vmatprep.subr.mxu0 0.0
    %726 = vmatpush2.msra.mxu0 0.0
    %727 = vmatprep.subr.mxu0 0.0
    %728 = vmatpush2.msra.mxu0 0.0
    %729 = vmatprep.subr.mxu0 0.0
    %730 = vmatpush2.msra.mxu0 0.0
    %731 = vmatprep.subr.mxu0 0.0
    %732 = vmatpush2.msra.mxu0 0.0
    %733 = vmatprep.subr.mxu0 0.0
    %734 = vmatpush2.msra.mxu0 0.0
    %735 = vmatprep.subr.mxu0 0.0
    %736 = vmatpush2.msra.mxu0 0.0
    %737 = vmatprep.subr.mxu0 0.0
    %738 = vmatpush2.msra.mxu0 0.0
    %739 = vmatprep.subr.mxu0 0.0
    %740 = vmatpush2.msra.mxu0 0.0
    %741 = vmatprep.subr.mxu0 0.0
    %742 = vmatpush2.msra.mxu0 0.0
    %743 = vmatprep.subr.mxu0 0.0
    %744 = vmatpush2.msra.mxu0 0.0
    %745 = vmatprep.mubr.f32.mxu0 0.0
    %746 = vmatmul.mubr.f32.gmra.mxu0 %v679
    %v747 = vpop.f32.mrf.mxu0
    %v748 = vadd.f32 %v328, %v747
    %v749 = vpop.f32.mrf.mxu0
    %v750 = vadd.f32 %v332, %v749
    %751 = vdwg.mxu0
    %752 = vmatprep.subr.mxu0 0.0
    %753 = vmatpush1.msra.mxu0 %v144
    %754 = vmatprep.subr.mxu0 0.0
    %755 = vmatpush1.msra.mxu0 %v141
    %756 = vmatprep.subr.mxu0 0.0
    %757 = vmatpush1.msra.mxu0 %v138
    %758 = vmatprep.subr.mxu0 0.0
    %759 = vmatpush1.msra.mxu0 %v135
    %760 = vmatprep.subr.mxu0 0.0
    %761 = vmatpush1.msra.mxu0 %v132
    %762 = vmatprep.subr.mxu0 0.0
    %763 = vmatpush1.msra.mxu0 %v129
    %764 = vmatprep.subr.mxu0 0.0
    %765 = vmatpush1.msra.mxu0 %v126
    %766 = vmatprep.subr.mxu0 0.0
    %767 = vmatpush1.msra.mxu0 %v123
    %768 = vmatprep.subr.mxu0 0.0
    %769 = vmatpush1.msra.mxu0 %v120
    %770 = vmatprep.subr.mxu0 0.0
    %771 = vmatpush1.msra.mxu0 %v117
    %772 = vmatprep.subr.mxu0 0.0
    %773 = vmatpush1.msra.mxu0 %v114
    %774 = vmatprep.subr.mxu0 0.0
    %775 = vmatpush1.msra.mxu0 %v111
    %776 = vmatprep.subr.mxu0 0.0
    %777 = vmatpush1.msra.mxu0 %v108
    %778 = vmatprep.subr.mxu0 0.0
    %779 = vmatpush1.msra.mxu0 %v105
    %780 = vmatprep.subr.mxu0 0.0
    %781 = vmatpush1.msra.mxu0 %v102
    %782 = vmatprep.subr.mxu0 0.0
    %783 = vmatpush1.msra.mxu0 %v99
    %784 = vmatprep.subr.mxu0 0.0
    %785 = vmatpush2.msra.mxu0 0.0
    %786 = vmatprep.subr.mxu0 0.0
    %787 = vmatpush2.msra.mxu0 0.0
    %788 = vmatprep.subr.mxu0 0.0
    %789 = vmatpush2.msra.mxu0 0.0
    %790 = vmatprep.subr.mxu0 0.0
    %791 = vmatpush2.msra.mxu0 0.0
    %792 = vmatprep.subr.mxu0 0.0
    %793 = vmatpush2.msra.mxu0 0.0
    %794 = vmatprep.subr.mxu0 0.0
    %795 = vmatpush2.msra.mxu0 0.0
    %796 = vmatprep.subr.mxu0 0.0
    %797 = vmatpush2.msra.mxu0 0.0
    %798 = vmatprep.subr.mxu0 0.0
    %799 = vmatpush2.msra.mxu0 0.0
    %800 = vmatprep.subr.mxu0 0.0
    %801 = vmatpush2.msra.mxu0 0.0
    %802 = vmatprep.subr.mxu0 0.0
    %803 = vmatpush2.msra.mxu0 0.0
    %804 = vmatprep.subr.mxu0 0.0
    %805 = vmatpush2.msra.mxu0 0.0
    %806 = vmatprep.subr.mxu0 0.0
    %807 = vmatpush2.msra.mxu0 0.0
    %808 = vmatprep.subr.mxu0 0.0
    %809 = vmatpush2.msra.mxu0 0.0
    %810 = vmatprep.subr.mxu0 0.0
    %811 = vmatpush2.msra.mxu0 0.0
    %812 = vmatprep.subr.mxu0 0.0
    %813 = vmatpush2.msra.mxu0 0.0
    %814 = vmatprep.subr.mxu0 0.0
    %815 = vmatpush2.msra.mxu0 0.0
    %816 = vmatprep.mubr.f32.mxu0 0.0
    %817 = vmatmul.mubr.f32.gmra.mxu0 %v679
    %v818 = vpop.f32.mrf.mxu0
    %v819 = vadd.f32 %v336, %v818
    %v820 = vpop.f32.mrf.mxu0
    %821 = vdwg.mxu0
    %v824 = vrot.slane %v748, 4
    %v825 = vrot.slane %v750, 4
    %v828 = vadd.f32 %v239, %v824
    %v829 = vadd.f32 %v241, %v825
    %v830 = vxor.u32 %v828, 2147483648
    %v831 = vxor.u32 %v829, 2147483648
    %v832 = vmul.f32 %v830, 1.442695
    %v833 = vpow.pop %v832
    %v834 = vmul.f32 %v831, 1.442695
    %v835 = vpow.pop %v834
    %v836 = vadd.f32 %v833, 1.0
    %v837 = vadd.f32 %v835, 1.0
    %v838 = vrcp.pop %v836
    %v839 = vmul.f32 1.0, %v838
    %v840 = vrcp.pop %v837
    %v841 = vmul.f32 1.0, %v840
    %v843 = vrot.slane %v819, 4
    %v845 = vmul.f32 %v839, %v843
    %v846 = vadd.f32 %v316, %v845
    %v847 = vtanh.pop %v846
    %v848 = vsub.f32 1.0, %v841
    %v849 = vmul.f32 %v848, %v847
    %v850 = vrot.slane %v676, 6
    %v852 = vmul.f32 %v841, %v850
    %v853 = vadd.f32 %v849, %v852
    %854 = vst [vmem:[#allocation2] sm:$0x30] %v853
    %v856 = vrot.slane %v853, 4
    %858 = vmatprep.subr.mxu0 %v143
    %859 = vmatpush1.msra.mxu0 %v142
    %860 = vmatprep.subr.mxu0 %v140
    %861 = vmatpush1.msra.mxu0 %v139
    %862 = vmatprep.subr.mxu0 %v137
    %863 = vmatpush1.msra.mxu0 %v136
    %864 = vmatprep.subr.mxu0 %v134
    %865 = vmatpush1.msra.mxu0 %v133
    %866 = vmatprep.subr.mxu0 %v131
    %867 = vmatpush1.msra.mxu0 %v130
    %868 = vmatprep.subr.mxu0 %v128
    %869 = vmatpush1.msra.mxu0 %v127
    %870 = vmatprep.subr.mxu0 %v125
    %871 = vmatpush1.msra.mxu0 %v124
    %872 = vmatprep.subr.mxu0 %v122
    %873 = vmatpush1.msra.mxu0 %v121
    %874 = vmatprep.subr.mxu0 %v119
    %875 = vmatpush1.msra.mxu0 %v118
    %876 = vmatprep.subr.mxu0 %v116
    %877 = vmatpush1.msra.mxu0 %v115
    %878 = vmatprep.subr.mxu0 %v113
    %879 = vmatpush1.msra.mxu0 %v112
    %880 = vmatprep.subr.mxu0 %v110
    %881 = vmatpush1.msra.mxu0 %v109
    %882 = vmatprep.subr.mxu0 %v107
    %883 = vmatpush1.msra.mxu0 %v106
    %884 = vmatprep.subr.mxu0 %v104
    %885 = vmatpush1.msra.mxu0 %v103
    %886 = vmatprep.subr.mxu0 %v101
    %887 = vmatpush1.msra.mxu0 %v100
    %888 = vmatprep.subr.mxu0 %v98
    %889 = vmatpush1.msra.mxu0 %v97
    %890 = vmatprep.subr.mxu0 0.0
    %891 = vmatpush2.msra.mxu0 0.0
    %892 = vmatprep.subr.mxu0 0.0
    %893 = vmatpush2.msra.mxu0 0.0
    %894 = vmatprep.subr.mxu0 0.0
    %895 = vmatpush2.msra.mxu0 0.0
    %896 = vmatprep.subr.mxu0 0.0
    %897 = vmatpush2.msra.mxu0 0.0
    %898 = vmatprep.subr.mxu0 0.0
    %899 = vmatpush2.msra.mxu0 0.0
    %900 = vmatprep.subr.mxu0 0.0
    %901 = vmatpush2.msra.mxu0 0.0
    %902 = vmatprep.subr.mxu0 0.0
    %903 = vmatpush2.msra.mxu0 0.0
    %904 = vmatprep.subr.mxu0 0.0
    %905 = vmatpush2.msra.mxu0 0.0
    %906 = vmatprep.subr.mxu0 0.0
    %907 = vmatpush2.msra.mxu0 0.0
    %908 = vmatprep.subr.mxu0 0.0
    %909 = vmatpush2.msra.mxu0 0.0
    %910 = vmatprep.subr.mxu0 0.0
    %911 = vmatpush2.msra.mxu0 0.0
    %912 = vmatprep.subr.mxu0 0.0
    %913 = vmatpush2.msra.mxu0 0.0
    %914 = vmatprep.subr.mxu0 0.0
    %915 = vmatpush2.msra.mxu0 0.0
    %916 = vmatprep.subr.mxu0 0.0
    %917 = vmatpush2.msra.mxu0 0.0
    %918 = vmatprep.subr.mxu0 0.0
    %919 = vmatpush2.msra.mxu0 0.0
    %920 = vmatprep.subr.mxu0 0.0
    %921 = vmatpush2.msra.mxu0 0.0
    %922 = vmatprep.mubr.f32.mxu0 0.0
    %923 = vmatmul.mubr.f32.gmra.mxu0 %v856
    %v924 = vpop.f32.mrf.mxu0
    %v925 = vadd.f32 %v328, %v924
    %v926 = vpop.f32.mrf.mxu0
    %v927 = vadd.f32 %v332, %v926
    %928 = vdwg.mxu0
    %929 = vmatprep.subr.mxu0 0.0
    %930 = vmatpush1.msra.mxu0 %v144
    %931 = vmatprep.subr.mxu0 0.0
    %932 = vmatpush1.msra.mxu0 %v141
    %933 = vmatprep.subr.mxu0 0.0
    %934 = vmatpush1.msra.mxu0 %v138
    %935 = vmatprep.subr.mxu0 0.0
    %936 = vmatpush1.msra.mxu0 %v135
    %937 = vmatprep.subr.mxu0 0.0
    %938 = vmatpush1.msra.mxu0 %v132
    %939 = vmatprep.subr.mxu0 0.0
    %940 = vmatpush1.msra.mxu0 %v129
    %941 = vmatprep.subr.mxu0 0.0
    %942 = vmatpush1.msra.mxu0 %v126
    %943 = vmatprep.subr.mxu0 0.0
    %944 = vmatpush1.msra.mxu0 %v123
    %945 = vmatprep.subr.mxu0 0.0
    %946 = vmatpush1.msra.mxu0 %v120
    %947 = vmatprep.subr.mxu0 0.0
    %948 = vmatpush1.msra.mxu0 %v117
    %949 = vmatprep.subr.mxu0 0.0
    %950 = vmatpush1.msra.mxu0 %v114
    %951 = vmatprep.subr.mxu0 0.0
    %952 = vmatpush1.msra.mxu0 %v111
    %953 = vmatprep.subr.mxu0 0.0
    %954 = vmatpush1.msra.mxu0 %v108
    %955 = vmatprep.subr.mxu0 0.0
    %956 = vmatpush1.msra.mxu0 %v105
    %957 = vmatprep.subr.mxu0 0.0
    %958 = vmatpush1.msra.mxu0 %v102
    %959 = vmatprep.subr.mxu0 0.0
    %960 = vmatpush1.msra.mxu0 %v99
    %961 = vmatprep.subr.mxu0 0.0
    %962 = vmatpush2.msra.mxu0 0.0
    %963 = vmatprep.subr.mxu0 0.0
    %964 = vmatpush2.msra.mxu0 0.0
    %965 = vmatprep.subr.mxu0 0.0
    %966 = vmatpush2.msra.mxu0 0.0
    %967 = vmatprep.subr.mxu0 0.0
    %968 = vmatpush2.msra.mxu0 0.0
    %969 = vmatprep.subr.mxu0 0.0
    %970 = vmatpush2.msra.mxu0 0.0
    %971 = vmatprep.subr.mxu0 0.0
    %972 = vmatpush2.msra.mxu0 0.0
    %973 = vmatprep.subr.mxu0 0.0
    %974 = vmatpush2.msra.mxu0 0.0
    %975 = vmatprep.subr.mxu0 0.0
    %976 = vmatpush2.msra.mxu0 0.0
    %977 = vmatprep.subr.mxu0 0.0
    %978 = vmatpush2.msra.mxu0 0.0
    %979 = vmatprep.subr.mxu0 0.0
    %980 = vmatpush2.msra.mxu0 0.0
    %981 = vmatprep.subr.mxu0 0.0
    %982 = vmatpush2.msra.mxu0 0.0
    %983 = vmatprep.subr.mxu0 0.0
    %984 = vmatpush2.msra.mxu0 0.0
    %985 = vmatprep.subr.mxu0 0.0
    %986 = vmatpush2.msra.mxu0 0.0
    %987 = vmatprep.subr.mxu0 0.0
    %988 = vmatpush2.msra.mxu0 0.0
    %989 = vmatprep.subr.mxu0 0.0
    %990 = vmatpush2.msra.mxu0 0.0
    %991 = vmatprep.subr.mxu0 0.0
    %992 = vmatpush2.msra.mxu0 0.0
    %993 = vmatprep.mubr.f32.mxu0 0.0
    %994 = vmatmul.mubr.f32.gmra.mxu0 %v856
    %v995 = vpop.f32.mrf.mxu0
    %v996 = vadd.f32 %v336, %v995
    %v997 = vpop.f32.mrf.mxu0
    %998 = vdwg.mxu0
    %v1001 = vrot.slane %v925, 2
    %v1002 = vrot.slane %v927, 2
    %v1005 = vadd.f32 %v239, %v1001
    %v1006 = vadd.f32 %v241, %v1002
    %v1007 = vxor.u32 %v1005, 2147483648
    %v1008 = vxor.u32 %v1006, 2147483648
    %v1009 = vmul.f32 %v1007, 1.442695
    %v1010 = vpow.pop %v1009
    %v1011 = vmul.f32 %v1008, 1.442695
    %v1012 = vpow.pop %v1011
    %v1013 = vadd.f32 %v1010, 1.0
    %v1014 = vadd.f32 %v1012, 1.0
    %v1015 = vrcp.pop %v1013
    %v1016 = vmul.f32 1.0, %v1015
    %v1017 = vrcp.pop %v1014
    %v1018 = vmul.f32 1.0, %v1017
    %v1020 = vrot.slane %v996, 2
    %v1022 = vmul.f32 %v1016, %v1020
    %v1023 = vadd.f32 %v316, %v1022
    %v1024 = vtanh.pop %v1023
    %v1025 = vsub.f32 1.0, %v1018
    %v1026 = vmul.f32 %v1025, %v1024
    %v1027 = vrot.slane %v853, 6
    %v1029 = vmul.f32 %v1018, %v1027
    %v1030 = vadd.f32 %v1026, %v1029
    %1031 = vst [vmem:[#allocation2] sm:$0xc0] %v1030
    %v1033 = vrot.slane %v1030, 6
    %1035 = vmatprep.subr.mxu0 %v143
    %1036 = vmatpush1.msra.mxu0 %v142
    %1037 = vmatprep.subr.mxu0 %v140
    %1038 = vmatpush1.msra.mxu0 %v139
    %1039 = vmatprep.subr.mxu0 %v137
    %1040 = vmatpush1.msra.mxu0 %v136
    %1041 = vmatprep.subr.mxu0 %v134
    %1042 = vmatpush1.msra.mxu0 %v133
    %1043 = vmatprep.subr.mxu0 %v131
    %1044 = vmatpush1.msra.mxu0 %v130
    %1045 = vmatprep.subr.mxu0 %v128
    %1046 = vmatpush1.msra.mxu0 %v127
    %1047 = vmatprep.subr.mxu0 %v125
    %1048 = vmatpush1.msra.mxu0 %v124
    %1049 = vmatprep.subr.mxu0 %v122
    %1050 = vmatpush1.msra.mxu0 %v121
    %1051 = vmatprep.subr.mxu0 %v119
    %1052 = vmatpush1.msra.mxu0 %v118
    %1053 = vmatprep.subr.mxu0 %v116
    %1054 = vmatpush1.msra.mxu0 %v115
    %1055 = vmatprep.subr.mxu0 %v113
    %1056 = vmatpush1.msra.mxu0 %v112
    %1057 = vmatprep.subr.mxu0 %v110
    %1058 = vmatpush1.msra.mxu0 %v109
    %1059 = vmatprep.subr.mxu0 %v107
    %1060 = vmatpush1.msra.mxu0 %v106
    %1061 = vmatprep.subr.mxu0 %v104
    %1062 = vmatpush1.msra.mxu0 %v103
    %1063 = vmatprep.subr.mxu0 %v101
    %1064 = vmatpush1.msra.mxu0 %v100
    %1065 = vmatprep.subr.mxu0 %v98
    %1066 = vmatpush1.msra.mxu0 %v97
    %1067 = vmatprep.subr.mxu0 0.0
    %1068 = vmatpush2.msra.mxu0 0.0
    %1069 = vmatprep.subr.mxu0 0.0
    %1070 = vmatpush2.msra.mxu0 0.0
    %1071 = vmatprep.subr.mxu0 0.0
    %1072 = vmatpush2.msra.mxu0 0.0
    %1073 = vmatprep.subr.mxu0 0.0
    %1074 = vmatpush2.msra.mxu0 0.0
    %1075 = vmatprep.subr.mxu0 0.0
    %1076 = vmatpush2.msra.mxu0 0.0
    %1077 = vmatprep.subr.mxu0 0.0
    %1078 = vmatpush2.msra.mxu0 0.0
    %1079 = vmatprep.subr.mxu0 0.0
    %1080 = vmatpush2.msra.mxu0 0.0
    %1081 = vmatprep.subr.mxu0 0.0
    %1082 = vmatpush2.msra.mxu0 0.0
    %1083 = vmatprep.subr.mxu0 0.0
    %1084 = vmatpush2.msra.mxu0 0.0
    %1085 = vmatprep.subr.mxu0 0.0
    %1086 = vmatpush2.msra.mxu0 0.0
    %1087 = vmatprep.subr.mxu0 0.0
    %1088 = vmatpush2.msra.mxu0 0.0
    %1089 = vmatprep.subr.mxu0 0.0
    %1090 = vmatpush2.msra.mxu0 0.0
    %1091 = vmatprep.subr.mxu0 0.0
    %1092 = vmatpush2.msra.mxu0 0.0
    %1093 = vmatprep.subr.mxu0 0.0
    %1094 = vmatpush2.msra.mxu0 0.0
    %1095 = vmatprep.subr.mxu0 0.0
    %1096 = vmatpush2.msra.mxu0 0.0
    %1097 = vmatprep.subr.mxu0 0.0
    %1098 = vmatpush2.msra.mxu0 0.0
    %1099 = vmatprep.mubr.f32.mxu0 0.0
    %1100 = vmatmul.mubr.f32.gmra.mxu0 %v1033
    %v1101 = vpop.f32.mrf.mxu0
    %v1102 = vadd.f32 %v328, %v1101
    %v1103 = vpop.f32.mrf.mxu0
    %v1104 = vadd.f32 %v332, %v1103
    %1105 = vdwg.mxu0
    %1106 = vmatprep.subr.mxu0 0.0
    %1107 = vmatpush1.msra.mxu0 %v144
    %1108 = vmatprep.subr.mxu0 0.0
    %1109 = vmatpush1.msra.mxu0 %v141
    %1110 = vmatprep.subr.mxu0 0.0
    %1111 = vmatpush1.msra.mxu0 %v138
    %1112 = vmatprep.subr.mxu0 0.0
    %1113 = vmatpush1.msra.mxu0 %v135
    %1114 = vmatprep.subr.mxu0 0.0
    %1115 = vmatpush1.msra.mxu0 %v132
    %1116 = vmatprep.subr.mxu0 0.0
    %1117 = vmatpush1.msra.mxu0 %v129
    %1118 = vmatprep.subr.mxu0 0.0
    %1119 = vmatpush1.msra.mxu0 %v126
    %1120 = vmatprep.subr.mxu0 0.0
    %1121 = vmatpush1.msra.mxu0 %v123
    %1122 = vmatprep.subr.mxu0 0.0
    %1123 = vmatpush1.msra.mxu0 %v120
    %1124 = vmatprep.subr.mxu0 0.0
    %1125 = vmatpush1.msra.mxu0 %v117
    %1126 = vmatprep.subr.mxu0 0.0
    %1127 = vmatpush1.msra.mxu0 %v114
    %1128 = vmatprep.subr.mxu0 0.0
    %1129 = vmatpush1.msra.mxu0 %v111
    %1130 = vmatprep.subr.mxu0 0.0
    %1131 = vmatpush1.msra.mxu0 %v108
    %1132 = vmatprep.subr.mxu0 0.0
    %1133 = vmatpush1.msra.mxu0 %v105
    %1134 = vmatprep.subr.mxu0 0.0
    %1135 = vmatpush1.msra.mxu0 %v102
    %1136 = vmatprep.subr.mxu0 0.0
    %1137 = vmatpush1.msra.mxu0 %v99
    %1138 = vmatprep.subr.mxu0 0.0
    %1139 = vmatpush2.msra.mxu0 0.0
    %1140 = vmatprep.subr.mxu0 0.0
    %1141 = vmatpush2.msra.mxu0 0.0
    %1142 = vmatprep.subr.mxu0 0.0
    %1143 = vmatpush2.msra.mxu0 0.0
    %1144 = vmatprep.subr.mxu0 0.0
    %1145 = vmatpush2.msra.mxu0 0.0
    %1146 = vmatprep.subr.mxu0 0.0
    %1147 = vmatpush2.msra.mxu0 0.0
    %1148 = vmatprep.subr.mxu0 0.0
    %1149 = vmatpush2.msra.mxu0 0.0
    %1150 = vmatprep.subr.mxu0 0.0
    %1151 = vmatpush2.msra.mxu0 0.0
    %1152 = vmatprep.subr.mxu0 0.0
    %1153 = vmatpush2.msra.mxu0 0.0
    %1154 = vmatprep.subr.mxu0 0.0
    %1155 = vmatpush2.msra.mxu0 0.0
    %1156 = vmatprep.subr.mxu0 0.0
    %1157 = vmatpush2.msra.mxu0 0.0
    %1158 = vmatprep.subr.mxu0 0.0
    %1159 = vmatpush2.msra.mxu0 0.0
    %1160 = vmatprep.subr.mxu0 0.0
    %1161 = vmatpush2.msra.mxu0 0.0
    %1162 = vmatprep.subr.mxu0 0.0
    %1163 = vmatpush2.msra.mxu0 0.0
    %1164 = vmatprep.subr.mxu0 0.0
    %1165 = vmatpush2.msra.mxu0 0.0
    %1166 = vmatprep.subr.mxu0 0.0
    %1167 = vmatpush2.msra.mxu0 0.0
    %1168 = vmatprep.subr.mxu0 0.0
    %1169 = vmatpush2.msra.mxu0 0.0
    %1170 = vmatprep.mubr.f32.mxu0 0.0
    %1171 = vmatmul.mubr.f32.gmra.mxu0 %v1033
    %v1172 = vpop.f32.mrf.mxu0
    %v1173 = vadd.f32 %v336, %v1172
    %v1174 = vpop.f32.mrf.mxu0
    %1175 = vdwg.mxu0
    %v1176 = vadd.f32 %v245, %v1102
    %v1177 = vadd.f32 %v247, %v1104
    %v1178 = vxor.u32 %v1176, 2147483648
    %v1179 = vxor.u32 %v1177, 2147483648
    %v1180 = vmul.f32 %v1178, 1.442695
    %v1181 = vpow.pop %v1180
    %v1182 = vmul.f32 %v1179, 1.442695
    %v1183 = vpow.pop %v1182
    %v1184 = vadd.f32 %v1181, 1.0
    %v1185 = vadd.f32 %v1183, 1.0
    %v1186 = vrcp.pop %v1184
    %v1187 = vmul.f32 1.0, %v1186
    %v1188 = vrcp.pop %v1185
    %v1189 = vmul.f32 1.0, %v1188
    %v1190 = vmul.f32 %v1187, %v1173
    %v1191 = vadd.f32 %v321, %v1190
    %v1192 = vtanh.pop %v1191
    %v1193 = vsub.f32 1.0, %v1189
    %v1194 = vmul.f32 %v1193, %v1192
    %v1195 = vmul.f32 %v1189, %v1033
    %v1196 = vadd.f32 %v1194, %v1195
    %1197 = vst [vmem:[#allocation2 + $0x8] sm:$0x3] %v1196
    %1198 = vmatprep.subr.mxu0 %v143
    %1199 = vmatpush1.msra.mxu0 %v142
    %1200 = vmatprep.subr.mxu0 %v140
    %1201 = vmatpush1.msra.mxu0 %v139
    %1202 = vmatprep.subr.mxu0 %v137
    %1203 = vmatpush1.msra.mxu0 %v136
    %1204 = vmatprep.subr.mxu0 %v134
    %1205 = vmatpush1.msra.mxu0 %v133
    %1206 = vmatprep.subr.mxu0 %v131
    %1207 = vmatpush1.msra.mxu0 %v130
    %1208 = vmatprep.subr.mxu0 %v128
    %1209 = vmatpush1.msra.mxu0 %v127
    %1210 = vmatprep.subr.mxu0 %v125
    %1211 = vmatpush1.msra.mxu0 %v124
    %1212 = vmatprep.subr.mxu0 %v122
    %1213 = vmatpush1.msra.mxu0 %v121
    %1214 = vmatprep.subr.mxu0 %v119
    %1215 = vmatpush1.msra.mxu0 %v118
    %1216 = vmatprep.subr.mxu0 %v116
    %1217 = vmatpush1.msra.mxu0 %v115
    %1218 = vmatprep.subr.mxu0 %v113
    %1219 = vmatpush1.msra.mxu0 %v112
    %1220 = vmatprep.subr.mxu0 %v110
    %1221 = vmatpush1.msra.mxu0 %v109
    %1222 = vmatprep.subr.mxu0 %v107
    %1223 = vmatpush1.msra.mxu0 %v106
    %1224 = vmatprep.subr.mxu0 %v104
    %1225 = vmatpush1.msra.mxu0 %v103
    %1226 = vmatprep.subr.mxu0 %v101
    %1227 = vmatpush1.msra.mxu0 %v100
    %1228 = vmatprep.subr.mxu0 %v98
    %1229 = vmatpush1.msra.mxu0 %v97
    %1230 = vmatprep.subr.mxu0 0.0
    %1231 = vmatpush2.msra.mxu0 0.0
    %1232 = vmatprep.subr.mxu0 0.0
    %1233 = vmatpush2.msra.mxu0 0.0
    %1234 = vmatprep.subr.mxu0 0.0
    %1235 = vmatpush2.msra.mxu0 0.0
    %1236 = vmatprep.subr.mxu0 0.0
    %1237 = vmatpush2.msra.mxu0 0.0
    %1238 = vmatprep.subr.mxu0 0.0
    %1239 = vmatpush2.msra.mxu0 0.0
    %1240 = vmatprep.subr.mxu0 0.0
    %1241 = vmatpush2.msra.mxu0 0.0
    %1242 = vmatprep.subr.mxu0 0.0
    %1243 = vmatpush2.msra.mxu0 0.0
    %1244 = vmatprep.subr.mxu0 0.0
    %1245 = vmatpush2.msra.mxu0 0.0
    %1246 = vmatprep.subr.mxu0 0.0
    %1247 = vmatpush2.msra.mxu0 0.0
    %1248 = vmatprep.subr.mxu0 0.0
    %1249 = vmatpush2.msra.mxu0 0.0
    %1250 = vmatprep.subr.mxu0 0.0
    %1251 = vmatpush2.msra.mxu0 0.0
    %1252 = vmatprep.subr.mxu0 0.0
    %1253 = vmatpush2.msra.mxu0 0.0
    %1254 = vmatprep.subr.mxu0 0.0
    %1255 = vmatpush2.msra.mxu0 0.0
    %1256 = vmatprep.subr.mxu0 0.0
    %1257 = vmatpush2.msra.mxu0 0.0
    %1258 = vmatprep.subr.mxu0 0.0
    %1259 = vmatpush2.msra.mxu0 0.0
    %1260 = vmatprep.subr.mxu0 0.0
    %1261 = vmatpush2.msra.mxu0 0.0
    %1262 = vmatprep.mubr.f32.mxu0 0.0
    %1263 = vmatmul.mubr.f32.gmra.mxu0 %v1196
    %v1264 = vpop.f32.mrf.mxu0
    %v1265 = vadd.f32 %v328, %v1264
    %v1266 = vpop.f32.mrf.mxu0
    %v1267 = vadd.f32 %v332, %v1266
    %1268 = vdwg.mxu0
    %1269 = vmatprep.subr.mxu0 0.0
    %1270 = vmatpush1.msra.mxu0 %v144
    %1271 = vmatprep.subr.mxu0 0.0
    %1272 = vmatpush1.msra.mxu0 %v141
    %1273 = vmatprep.subr.mxu0 0.0
    %1274 = vmatpush1.msra.mxu0 %v138
    %1275 = vmatprep.subr.mxu0 0.0
    %1276 = vmatpush1.msra.mxu0 %v135
    %1277 = vmatprep.subr.mxu0 0.0
    %1278 = vmatpush1.msra.mxu0 %v132
    %1279 = vmatprep.subr.mxu0 0.0
    %1280 = vmatpush1.msra.mxu0 %v129
    %1281 = vmatprep.subr.mxu0 0.0
    %1282 = vmatpush1.msra.mxu0 %v126
    %1283 = vmatprep.subr.mxu0 0.0
    %1284 = vmatpush1.msra.mxu0 %v123
    %1285 = vmatprep.subr.mxu0 0.0
    %1286 = vmatpush1.msra.mxu0 %v120
    %1287 = vmatprep.subr.mxu0 0.0
    %1288 = vmatpush1.msra.mxu0 %v117
    %1289 = vmatprep.subr.mxu0 0.0
    %1290 = vmatpush1.msra.mxu0 %v114
    %1291 = vmatprep.subr.mxu0 0.0
    %1292 = vmatpush1.msra.mxu0 %v111
    %1293 = vmatprep.subr.mxu0 0.0
    %1294 = vmatpush1.msra.mxu0 %v108
    %1295 = vmatprep.subr.mxu0 0.0
    %1296 = vmatpush1.msra.mxu0 %v105
    %1297 = vmatprep.subr.mxu0 0.0
    %1298 = vmatpush1.msra.mxu0 %v102
    %1299 = vmatprep.subr.mxu0 0.0
    %1300 = vmatpush1.msra.mxu0 %v99
    %1301 = vmatprep.subr.mxu0 0.0
    %1302 = vmatpush2.msra.mxu0 0.0
    %1303 = vmatprep.subr.mxu0 0.0
    %1304 = vmatpush2.msra.mxu0 0.0
    %1305 = vmatprep.subr.mxu0 0.0
    %1306 = vmatpush2.msra.mxu0 0.0
    %1307 = vmatprep.subr.mxu0 0.0
    %1308 = vmatpush2.msra.mxu0 0.0
    %1309 = vmatprep.subr.mxu0 0.0
    %1310 = vmatpush2.msra.mxu0 0.0
    %1311 = vmatprep.subr.mxu0 0.0
    %1312 = vmatpush2.msra.mxu0 0.0
    %1313 = vmatprep.subr.mxu0 0.0
    %1314 = vmatpush2.msra.mxu0 0.0
    %1315 = vmatprep.subr.mxu0 0.0
    %1316 = vmatpush2.msra.mxu0 0.0
    %1317 = vmatprep.subr.mxu0 0.0
    %1318 = vmatpush2.msra.mxu0 0.0
    %1319 = vmatprep.subr.mxu0 0.0
    %1320 = vmatpush2.msra.mxu0 0.0
    %1321 = vmatprep.subr.mxu0 0.0
    %1322 = vmatpush2.msra.mxu0 0.0
    %1323 = vmatprep.subr.mxu0 0.0
    %1324 = vmatpush2.msra.mxu0 0.0
    %1325 = vmatprep.subr.mxu0 0.0
    %1326 = vmatpush2.msra.mxu0 0.0
    %1327 = vmatprep.subr.mxu0 0.0
    %1328 = vmatpush2.msra.mxu0 0.0
    %1329 = vmatprep.subr.mxu0 0.0
    %1330 = vmatpush2.msra.mxu0 0.0
    %1331 = vmatprep.subr.mxu0 0.0
    %1332 = vmatpush2.msra.mxu0 0.0
    %1333 = vmatprep.mubr.f32.mxu0 0.0
    %1334 = vmatmul.mubr.f32.gmra.mxu0 %v1196
    %v1335 = vpop.f32.mrf.mxu0
    %v1336 = vadd.f32 %v336, %v1335
    %v1337 = vpop.f32.mrf.mxu0
    %1338 = vdwg.mxu0
    %v1341 = vrot.slane %v1265, 6
    %v1342 = vrot.slane %v1267, 6
    %v1345 = vadd.f32 %v245, %v1341
    %v1346 = vadd.f32 %v247, %v1342
    %v1347 = vxor.u32 %v1345, 2147483648
    %v1348 = vxor.u32 %v1346, 2147483648
    %v1349 = vmul.f32 %v1347, 1.442695
    %v1350 = vpow.pop %v1349
    %v1351 = vmul.f32 %v1348, 1.442695
    %v1352 = vpow.pop %v1351
    %v1353 = vadd.f32 %v1350, 1.0
    %v1354 = vadd.f32 %v1352, 1.0
    %v1355 = vrcp.pop %v1353
    %v1356 = vmul.f32 1.0, %v1355
    %v1357 = vrcp.pop %v1354
    %v1358 = vmul.f32 1.0, %v1357
    %v1360 = vrot.slane %v1336, 6
    %v1362 = vmul.f32 %v1356, %v1360
    %v1363 = vadd.f32 %v321, %v1362
    %v1364 = vtanh.pop %v1363
    %v1365 = vsub.f32 1.0, %v1358
    %v1366 = vmul.f32 %v1365, %v1364
    %v1368 = vrot.slane %v1196, 6
    %v1370 = vmul.f32 %v1358, %v1368
    %v1371 = vadd.f32 %v1366, %v1370
    %1372 = vst [vmem:[#allocation2 + $0x8] sm:$0xc] %v1371
    %v1374 = vrot.slane %v1371, 2
    %1376 = vmatprep.subr.mxu0 %v143
    %1377 = vmatpush1.msra.mxu0 %v142
    %1378 = vmatprep.subr.mxu0 %v140
    %1379 = vmatpush1.msra.mxu0 %v139
    %1380 = vmatprep.subr.mxu0 %v137
    %1381 = vmatpush1.msra.mxu0 %v136
    %1382 = vmatprep.subr.mxu0 %v134
    %1383 = vmatpush1.msra.mxu0 %v133
    %1384 = vmatprep.subr.mxu0 %v131
    %1385 = vmatpush1.msra.mxu0 %v130
    %1386 = vmatprep.subr.mxu0 %v128
    %1387 = vmatpush1.msra.mxu0 %v127
    %1388 = vmatprep.subr.mxu0 %v125
    %1389 = vmatpush1.msra.mxu0 %v124
    %1390 = vmatprep.subr.mxu0 %v122
    %1391 = vmatpush1.msra.mxu0 %v121
    %1392 = vmatprep.subr.mxu0 %v119
    %1393 = vmatpush1.msra.mxu0 %v118
    %1394 = vmatprep.subr.mxu0 %v116
    %1395 = vmatpush1.msra.mxu0 %v115
    %1396 = vmatprep.subr.mxu0 %v113
    %1397 = vmatpush1.msra.mxu0 %v112
    %1398 = vmatprep.subr.mxu0 %v110
    %1399 = vmatpush1.msra.mxu0 %v109
    %1400 = vmatprep.subr.mxu0 %v107
    %1401 = vmatpush1.msra.mxu0 %v106
    %1402 = vmatprep.subr.mxu0 %v104
    %1403 = vmatpush1.msra.mxu0 %v103
    %1404 = vmatprep.subr.mxu0 %v101
    %1405 = vmatpush1.msra.mxu0 %v100
    %1406 = vmatprep.subr.mxu0 %v98
    %1407 = vmatpush1.msra.mxu0 %v97
    %1408 = vmatprep.subr.mxu0 0.0
    %1409 = vmatpush2.msra.mxu0 0.0
    %1410 = vmatprep.subr.mxu0 0.0
    %1411 = vmatpush2.msra.mxu0 0.0
    %1412 = vmatprep.subr.mxu0 0.0
    %1413 = vmatpush2.msra.mxu0 0.0
    %1414 = vmatprep.subr.mxu0 0.0
    %1415 = vmatpush2.msra.mxu0 0.0
    %1416 = vmatprep.subr.mxu0 0.0
    %1417 = vmatpush2.msra.mxu0 0.0
    %1418 = vmatprep.subr.mxu0 0.0
    %1419 = vmatpush2.msra.mxu0 0.0
    %1420 = vmatprep.subr.mxu0 0.0
    %1421 = vmatpush2.msra.mxu0 0.0
    %1422 = vmatprep.subr.mxu0 0.0
    %1423 = vmatpush2.msra.mxu0 0.0
    %1424 = vmatprep.subr.mxu0 0.0
    %1425 = vmatpush2.msra.mxu0 0.0
    %1426 = vmatprep.subr.mxu0 0.0
    %1427 = vmatpush2.msra.mxu0 0.0
    %1428 = vmatprep.subr.mxu0 0.0
    %1429 = vmatpush2.msra.mxu0 0.0
    %1430 = vmatprep.subr.mxu0 0.0
    %1431 = vmatpush2.msra.mxu0 0.0
    %1432 = vmatprep.subr.mxu0 0.0
    %1433 = vmatpush2.msra.mxu0 0.0
    %1434 = vmatprep.subr.mxu0 0.0
    %1435 = vmatpush2.msra.mxu0 0.0
    %1436 = vmatprep.subr.mxu0 0.0
    %1437 = vmatpush2.msra.mxu0 0.0
    %1438 = vmatprep.subr.mxu0 0.0
    %1439 = vmatpush2.msra.mxu0 0.0
    %1440 = vmatprep.mubr.f32.mxu0 0.0
    %1441 = vmatmul.mubr.f32.gmra.mxu0 %v1374
    %v1442 = vpop.f32.mrf.mxu0
    %v1443 = vadd.f32 %v328, %v1442
    %v1444 = vpop.f32.mrf.mxu0
    %v1445 = vadd.f32 %v332, %v1444
    %1446 = vdwg.mxu0
    %1447 = vmatprep.subr.mxu0 0.0
    %1448 = vmatpush1.msra.mxu0 %v144
    %1449 = vmatprep.subr.mxu0 0.0
    %1450 = vmatpush1.msra.mxu0 %v141
    %1451 = vmatprep.subr.mxu0 0.0
    %1452 = vmatpush1.msra.mxu0 %v138
    %1453 = vmatprep.subr.mxu0 0.0
    %1454 = vmatpush1.msra.mxu0 %v135
    %1455 = vmatprep.subr.mxu0 0.0
    %1456 = vmatpush1.msra.mxu0 %v132
    %1457 = vmatprep.subr.mxu0 0.0
    %1458 = vmatpush1.msra.mxu0 %v129
    %1459 = vmatprep.subr.mxu0 0.0
    %1460 = vmatpush1.msra.mxu0 %v126
    %1461 = vmatprep.subr.mxu0 0.0
    %1462 = vmatpush1.msra.mxu0 %v123
    %1463 = vmatprep.subr.mxu0 0.0
    %1464 = vmatpush1.msra.mxu0 %v120
    %1465 = vmatprep.subr.mxu0 0.0
    %1466 = vmatpush1.msra.mxu0 %v117
    %1467 = vmatprep.subr.mxu0 0.0
    %1468 = vmatpush1.msra.mxu0 %v114
    %1469 = vmatprep.subr.mxu0 0.0
    %1470 = vmatpush1.msra.mxu0 %v111
    %1471 = vmatprep.subr.mxu0 0.0
    %1472 = vmatpush1.msra.mxu0 %v108
    %1473 = vmatprep.subr.mxu0 0.0
    %1474 = vmatpush1.msra.mxu0 %v105
    %1475 = vmatprep.subr.mxu0 0.0
    %1476 = vmatpush1.msra.mxu0 %v102
    %1477 = vmatprep.subr.mxu0 0.0
    %1478 = vmatpush1.msra.mxu0 %v99
    %1479 = vmatprep.subr.mxu0 0.0
    %1480 = vmatpush2.msra.mxu0 0.0
    %1481 = vmatprep.subr.mxu0 0.0
    %1482 = vmatpush2.msra.mxu0 0.0
    %1483 = vmatprep.subr.mxu0 0.0
    %1484 = vmatpush2.msra.mxu0 0.0
    %1485 = vmatprep.subr.mxu0 0.0
    %1486 = vmatpush2.msra.mxu0 0.0
    %1487 = vmatprep.subr.mxu0 0.0
    %1488 = vmatpush2.msra.mxu0 0.0
    %1489 = vmatprep.subr.mxu0 0.0
    %1490 = vmatpush2.msra.mxu0 0.0
    %1491 = vmatprep.subr.mxu0 0.0
    %1492 = vmatpush2.msra.mxu0 0.0
    %1493 = vmatprep.subr.mxu0 0.0
    %1494 = vmatpush2.msra.mxu0 0.0
    %1495 = vmatprep.subr.mxu0 0.0
    %1496 = vmatpush2.msra.mxu0 0.0
    %1497 = vmatprep.subr.mxu0 0.0
    %1498 = vmatpush2.msra.mxu0 0.0
    %1499 = vmatprep.subr.mxu0 0.0
    %1500 = vmatpush2.msra.mxu0 0.0
    %1501 = vmatprep.subr.mxu0 0.0
    %1502 = vmatpush2.msra.mxu0 0.0
    %1503 = vmatprep.subr.mxu0 0.0
    %1504 = vmatpush2.msra.mxu0 0.0
    %1505 = vmatprep.subr.mxu0 0.0
    %1506 = vmatpush2.msra.mxu0 0.0
    %1507 = vmatprep.subr.mxu0 0.0
    %1508 = vmatpush2.msra.mxu0 0.0
    %1509 = vmatprep.subr.mxu0 0.0
    %1510 = vmatpush2.msra.mxu0 0.0
    %1511 = vmatprep.mubr.f32.mxu0 0.0
    %1512 = vmatmul.mubr.f32.gmra.mxu0 %v1374
    %v1513 = vpop.f32.mrf.mxu0
    %v1514 = vadd.f32 %v336, %v1513
    %v1515 = vpop.f32.mrf.mxu0
    %1516 = vdwg.mxu0
    %v1519 = vrot.slane %v1443, 4
    %v1520 = vrot.slane %v1445, 4
    %v1523 = vadd.f32 %v245, %v1519
    %v1524 = vadd.f32 %v247, %v1520
    %v1525 = vxor.u32 %v1523, 2147483648
    %v1526 = vxor.u32 %v1524, 2147483648
    %v1527 = vmul.f32 %v1525, 1.442695
    %v1528 = vpow.pop %v1527
    %v1529 = vmul.f32 %v1526, 1.442695
    %v1530 = vpow.pop %v1529
    %v1531 = vadd.f32 %v1528, 1.0
    %v1532 = vadd.f32 %v1530, 1.0
    %v1533 = vrcp.pop %v1531
    %v1534 = vmul.f32 1.0, %v1533
    %v1535 = vrcp.pop %v1532
    %v1536 = vmul.f32 1.0, %v1535
    %v1538 = vrot.slane %v1514, 4
    %v1540 = vmul.f32 %v1534, %v1538
    %v1541 = vadd.f32 %v321, %v1540
    %v1542 = vtanh.pop %v1541
    %v1543 = vsub.f32 1.0, %v1536
    %v1544 = vmul.f32 %v1543, %v1542
    %v1545 = vrot.slane %v1371, 6
    %v1547 = vmul.f32 %v1536, %v1545
    %v1548 = vadd.f32 %v1544, %v1547
    %1549 = vst [vmem:[#allocation2 + $0x8] sm:$0x30] %v1548
    %v1551 = vrot.slane %v1548, 4
    %1553 = vmatprep.subr.mxu0 %v143
    %1554 = vmatpush1.msra.mxu0 %v142
    %1555 = vmatprep.subr.mxu0 %v140
    %1556 = vmatpush1.msra.mxu0 %v139
    %1557 = vmatprep.subr.mxu0 %v137
    %1558 = vmatpush1.msra.mxu0 %v136
    %1559 = vmatprep.subr.mxu0 %v134
    %1560 = vmatpush1.msra.mxu0 %v133
    %1561 = vmatprep.subr.mxu0 %v131
    %1562 = vmatpush1.msra.mxu0 %v130
    %1563 = vmatprep.subr.mxu0 %v128
    %1564 = vmatpush1.msra.mxu0 %v127
    %1565 = vmatprep.subr.mxu0 %v125
    %1566 = vmatpush1.msra.mxu0 %v124
    %1567 = vmatprep.subr.mxu0 %v122
    %1568 = vmatpush1.msra.mxu0 %v121
    %1569 = vmatprep.subr.mxu0 %v119
    %1570 = vmatpush1.msra.mxu0 %v118
    %1571 = vmatprep.subr.mxu0 %v116
    %1572 = vmatpush1.msra.mxu0 %v115
    %1573 = vmatprep.subr.mxu0 %v113
    %1574 = vmatpush1.msra.mxu0 %v112
    %1575 = vmatprep.subr.mxu0 %v110
    %1576 = vmatpush1.msra.mxu0 %v109
    %1577 = vmatprep.subr.mxu0 %v107
    %1578 = vmatpush1.msra.mxu0 %v106
    %1579 = vmatprep.subr.mxu0 %v104
    %1580 = vmatpush1.msra.mxu0 %v103
    %1581 = vmatprep.subr.mxu0 %v101
    %1582 = vmatpush1.msra.mxu0 %v100
    %1583 = vmatprep.subr.mxu0 %v98
    %1584 = vmatpush1.msra.mxu0 %v97
    %1585 = vmatprep.subr.mxu0 0.0
    %1586 = vmatpush2.msra.mxu0 0.0
    %1587 = vmatprep.subr.mxu0 0.0
    %1588 = vmatpush2.msra.mxu0 0.0
    %1589 = vmatprep.subr.mxu0 0.0
    %1590 = vmatpush2.msra.mxu0 0.0
    %1591 = vmatprep.subr.mxu0 0.0
    %1592 = vmatpush2.msra.mxu0 0.0
    %1593 = vmatprep.subr.mxu0 0.0
    %1594 = vmatpush2.msra.mxu0 0.0
    %1595 = vmatprep.subr.mxu0 0.0
    %1596 = vmatpush2.msra.mxu0 0.0
    %1597 = vmatprep.subr.mxu0 0.0
    %1598 = vmatpush2.msra.mxu0 0.0
    %1599 = vmatprep.subr.mxu0 0.0
    %1600 = vmatpush2.msra.mxu0 0.0
    %1601 = vmatprep.subr.mxu0 0.0
    %1602 = vmatpush2.msra.mxu0 0.0
    %1603 = vmatprep.subr.mxu0 0.0
    %1604 = vmatpush2.msra.mxu0 0.0
    %1605 = vmatprep.subr.mxu0 0.0
    %1606 = vmatpush2.msra.mxu0 0.0
    %1607 = vmatprep.subr.mxu0 0.0
    %1608 = vmatpush2.msra.mxu0 0.0
    %1609 = vmatprep.subr.mxu0 0.0
    %1610 = vmatpush2.msra.mxu0 0.0
    %1611 = vmatprep.subr.mxu0 0.0
    %1612 = vmatpush2.msra.mxu0 0.0
    %1613 = vmatprep.subr.mxu0 0.0
    %1614 = vmatpush2.msra.mxu0 0.0
    %1615 = vmatprep.subr.mxu0 0.0
    %1616 = vmatpush2.msra.mxu0 0.0
    %1617 = vmatprep.mubr.f32.mxu0 0.0
    %1618 = vmatmul.mubr.f32.gmra.mxu0 %v1551
    %v1619 = vpop.f32.mrf.mxu0
    %v1620 = vadd.f32 %v328, %v1619
    %v1621 = vpop.f32.mrf.mxu0
    %v1622 = vadd.f32 %v332, %v1621
    %1623 = vdwg.mxu0
    %1624 = vmatprep.subr.mxu0 0.0
    %1625 = vmatpush1.msra.mxu0 %v144
    %1626 = vmatprep.subr.mxu0 0.0
    %1627 = vmatpush1.msra.mxu0 %v141
    %1628 = vmatprep.subr.mxu0 0.0
    %1629 = vmatpush1.msra.mxu0 %v138
    %1630 = vmatprep.subr.mxu0 0.0
    %1631 = vmatpush1.msra.mxu0 %v135
    %1632 = vmatprep.subr.mxu0 0.0
    %1633 = vmatpush1.msra.mxu0 %v132
    %1634 = vmatprep.subr.mxu0 0.0
    %1635 = vmatpush1.msra.mxu0 %v129
    %1636 = vmatprep.subr.mxu0 0.0
    %1637 = vmatpush1.msra.mxu0 %v126
    %1638 = vmatprep.subr.mxu0 0.0
    %1639 = vmatpush1.msra.mxu0 %v123
    %1640 = vmatprep.subr.mxu0 0.0
    %1641 = vmatpush1.msra.mxu0 %v120
    %1642 = vmatprep.subr.mxu0 0.0
    %1643 = vmatpush1.msra.mxu0 %v117
    %1644 = vmatprep.subr.mxu0 0.0
    %1645 = vmatpush1.msra.mxu0 %v114
    %1646 = vmatprep.subr.mxu0 0.0
    %1647 = vmatpush1.msra.mxu0 %v111
    %1648 = vmatprep.subr.mxu0 0.0
    %1649 = vmatpush1.msra.mxu0 %v108
    %1650 = vmatprep.subr.mxu0 0.0
    %1651 = vmatpush1.msra.mxu0 %v105
    %1652 = vmatprep.subr.mxu0 0.0
    %1653 = vmatpush1.msra.mxu0 %v102
    %1654 = vmatprep.subr.mxu0 0.0
    %1655 = vmatpush1.msra.mxu0 %v99
    %1656 = vmatprep.subr.mxu0 0.0
    %1657 = vmatpush2.msra.mxu0 0.0
    %1658 = vmatprep.subr.mxu0 0.0
    %1659 = vmatpush2.msra.mxu0 0.0
    %1660 = vmatprep.subr.mxu0 0.0
    %1661 = vmatpush2.msra.mxu0 0.0
    %1662 = vmatprep.subr.mxu0 0.0
    %1663 = vmatpush2.msra.mxu0 0.0
    %1664 = vmatprep.subr.mxu0 0.0
    %1665 = vmatpush2.msra.mxu0 0.0
    %1666 = vmatprep.subr.mxu0 0.0
    %1667 = vmatpush2.msra.mxu0 0.0
    %1668 = vmatprep.subr.mxu0 0.0
    %1669 = vmatpush2.msra.mxu0 0.0
    %1670 = vmatprep.subr.mxu0 0.0
    %1671 = vmatpush2.msra.mxu0 0.0
    %1672 = vmatprep.subr.mxu0 0.0
    %1673 = vmatpush2.msra.mxu0 0.0
    %1674 = vmatprep.subr.mxu0 0.0
    %1675 = vmatpush2.msra.mxu0 0.0
    %1676 = vmatprep.subr.mxu0 0.0
    %1677 = vmatpush2.msra.mxu0 0.0
    %1678 = vmatprep.subr.mxu0 0.0
    %1679 = vmatpush2.msra.mxu0 0.0
    %1680 = vmatprep.subr.mxu0 0.0
    %1681 = vmatpush2.msra.mxu0 0.0
    %1682 = vmatprep.subr.mxu0 0.0
    %1683 = vmatpush2.msra.mxu0 0.0
    %1684 = vmatprep.subr.mxu0 0.0
    %1685 = vmatpush2.msra.mxu0 0.0
    %1686 = vmatprep.subr.mxu0 0.0
    %1687 = vmatpush2.msra.mxu0 0.0
    %1688 = vmatprep.mubr.f32.mxu0 0.0
    %1689 = vmatmul.mubr.f32.gmra.mxu0 %v1551
    %v1690 = vpop.f32.mrf.mxu0
    %v1691 = vadd.f32 %v336, %v1690
    %v1692 = vpop.f32.mrf.mxu0
    %1693 = vdwg.mxu0
    %v1696 = vrot.slane %v1620, 2
    %v1697 = vrot.slane %v1622, 2
    %v1700 = vadd.f32 %v245, %v1696
    %v1701 = vadd.f32 %v247, %v1697
    %v1702 = vxor.u32 %v1700, 2147483648
    %v1703 = vxor.u32 %v1701, 2147483648
    %v1704 = vmul.f32 %v1702, 1.442695
    %v1705 = vpow.pop %v1704
    %v1706 = vmul.f32 %v1703, 1.442695
    %v1707 = vpow.pop %v1706
    %v1708 = vadd.f32 %v1705, 1.0
    %v1709 = vadd.f32 %v1707, 1.0
    %v1710 = vrcp.pop %v1708
    %v1711 = vmul.f32 1.0, %v1710
    %v1712 = vrcp.pop %v1709
    %v1713 = vmul.f32 1.0, %v1712
    %v1715 = vrot.slane %v1691, 2
    %v1717 = vmul.f32 %v1711, %v1715
    %v1718 = vadd.f32 %v321, %v1717
    %v1719 = vtanh.pop %v1718
    %v1720 = vsub.f32 1.0, %v1713
    %v1721 = vmul.f32 %v1720, %v1719
    %v1722 = vrot.slane %v1548, 6
    %v1724 = vmul.f32 %v1713, %v1722
    %v1725 = vadd.f32 %v1721, %v1724
    %1726 = vst [vmem:[#allocation2 + $0x8] sm:$0xc0] %v1725
    %v1727 = vld [vmem:[#allocation6] sm:$0xff]
    %v1728 = vld [vmem:[#allocation6 + $0x8] sm:$0xff]
    %v1729 = vld [vmem:[#allocation6 + $0x10] sm:$0xff]
    %v1730 = vld [vmem:[#allocation6 + $0x18] sm:$0xff]
    %v1731 = vld [vmem:[#allocation6 + $0x20] sm:$0xff]
    %v1732 = vld [vmem:[#allocation6 + $0x28] sm:$0xff]
    %v1733 = vld [vmem:[#allocation6 + $0x30] sm:$0xff]
    %v1734 = vld [vmem:[#allocation6 + $0x38] sm:$0xff]
    %v1735 = vld [vmem:[#allocation6 + $0x40] sm:$0xff]
    %v1736 = vld [vmem:[#allocation6 + $0x48] sm:$0xff]
    %v1737 = vld [vmem:[#allocation6 + $0x50] sm:$0xff]
    %v1738 = vld [vmem:[#allocation6 + $0x58] sm:$0xff]
    %v1739 = vld [vmem:[#allocation6 + $0x60] sm:$0xff]
    %v1740 = vld [vmem:[#allocation6 + $0x68] sm:$0xff]
    %v1741 = vld [vmem:[#allocation6 + $0x70] sm:$0xff]
    %v1742 = vld [vmem:[#allocation6 + $0x78] sm:$0xff]
    %v1743 = vld [vmem:[#allocation6 + $0x80] sm:$0xff]
    %v1744 = vld [vmem:[#allocation6 + $0x88] sm:$0xff]
    %v1745 = vld [vmem:[#allocation6 + $0x90] sm:$0xff]
    %v1746 = vld [vmem:[#allocation6 + $0x98] sm:$0xff]
    %v1747 = vld [vmem:[#allocation6 + $0xa0] sm:$0xff]
    %v1748 = vld [vmem:[#allocation6 + $0xa8] sm:$0xff]
    %v1749 = vld [vmem:[#allocation6 + $0xb0] sm:$0xff]
    %v1750 = vld [vmem:[#allocation6 + $0xb8] sm:$0xff]
    %v1751 = vld [vmem:[#allocation6 + $0xc0] sm:$0xff]
    %v1752 = vld [vmem:[#allocation6 + $0xc8] sm:$0xff]
    %v1753 = vld [vmem:[#allocation6 + $0xd0] sm:$0xff]
    %v1754 = vld [vmem:[#allocation6 + $0xd8] sm:$0xff]
    %v1755 = vld [vmem:[#allocation6 + $0xe0] sm:$0xff]
    %v1756 = vld [vmem:[#allocation6 + $0xe8] sm:$0xff]
    %v1757 = vld [vmem:[#allocation6 + $0xf0] sm:$0xff]
    %v1758 = vld [vmem:[#allocation6 + $0xf8] sm:$0xff]
    %v1759 = vld [vmem:[#allocation6 + $0x100] sm:$0xff]
    %v1760 = vld [vmem:[#allocation6 + $0x108] sm:$0xff]
    %v1761 = vld [vmem:[#allocation6 + $0x110] sm:$0xff]
    %v1762 = vld [vmem:[#allocation6 + $0x118] sm:$0xff]
    %v1763 = vld [vmem:[#allocation6 + $0x120] sm:$0xff]
    %v1764 = vld [vmem:[#allocation6 + $0x128] sm:$0xff]
    %v1765 = vld [vmem:[#allocation6 + $0x130] sm:$0xff]
    %v1766 = vld [vmem:[#allocation6 + $0x138] sm:$0xff]
    %v1767 = vld [vmem:[#allocation6 + $0x140] sm:$0xff]
    %v1768 = vld [vmem:[#allocation6 + $0x148] sm:$0xff]
    %v1769 = vld [vmem:[#allocation6 + $0x150] sm:$0xff]
    %v1770 = vld [vmem:[#allocation6 + $0x158] sm:$0xff]
    %v1771 = vld [vmem:[#allocation6 + $0x160] sm:$0xff]
    %v1772 = vld [vmem:[#allocation6 + $0x168] sm:$0xff]
    %v1773 = vld [vmem:[#allocation6 + $0x170] sm:$0xff]
    %v1774 = vld [vmem:[#allocation6 + $0x178] sm:$0xff]
    %v1775 = vld [vmem:[#allocation8] sm:$0xff]
    %v1776 = vld [vmem:[#allocation8 + $0x8] sm:$0xff]
    %v1777 = vld [vmem:[#allocation8 + $0x10] sm:$0xff]
    %v1778 = vld [vmem:[#allocation8 + $0x18] sm:$0xff]
    %v1779 = vld [vmem:[#allocation8 + $0x20] sm:$0xff]
    %v1780 = vld [vmem:[#allocation8 + $0x28] sm:$0xff]
    %v1781 = vld [vmem:[#allocation8 + $0x30] sm:$0xff]
    %v1782 = vld [vmem:[#allocation8 + $0x38] sm:$0xff]
    %v1783 = vld [vmem:[#allocation8 + $0x40] sm:$0xff]
    %v1784 = vld [vmem:[#allocation8 + $0x48] sm:$0xff]
    %v1785 = vld [vmem:[#allocation8 + $0x50] sm:$0xff]
    %v1786 = vld [vmem:[#allocation8 + $0x58] sm:$0xff]
    %v1787 = vld [vmem:[#allocation8 + $0x60] sm:$0xff]
    %v1788 = vld [vmem:[#allocation8 + $0x68] sm:$0xff]
    %v1789 = vld [vmem:[#allocation8 + $0x70] sm:$0xff]
    %v1790 = vld [vmem:[#allocation8 + $0x78] sm:$0xff]
    %v1791 = vld [vmem:[#allocation8 + $0x80] sm:$0xff]
    %v1792 = vld [vmem:[#allocation8 + $0x88] sm:$0xff]
    %v1793 = vld [vmem:[#allocation8 + $0x90] sm:$0xff]
    %v1794 = vld [vmem:[#allocation8 + $0x98] sm:$0xff]
    %v1795 = vld [vmem:[#allocation8 + $0xa0] sm:$0xff]
    %v1796 = vld [vmem:[#allocation8 + $0xa8] sm:$0xff]
    %v1797 = vld [vmem:[#allocation8 + $0xb0] sm:$0xff]
    %v1798 = vld [vmem:[#allocation8 + $0xb8] sm:$0xff]
    %v1799 = vld [vmem:[#allocation8 + $0xc0] sm:$0xff]
    %v1800 = vld [vmem:[#allocation8 + $0xc8] sm:$0xff]
    %v1801 = vld [vmem:[#allocation8 + $0xd0] sm:$0xff]
    %v1802 = vld [vmem:[#allocation8 + $0xd8] sm:$0xff]
    %v1803 = vld [vmem:[#allocation8 + $0xe0] sm:$0xff]
    %v1804 = vld [vmem:[#allocation8 + $0xe8] sm:$0xff]
    %v1805 = vld [vmem:[#allocation8 + $0xf0] sm:$0xff]
    %v1806 = vld [vmem:[#allocation8 + $0xf8] sm:$0xff]
    %v1807 = vld [vmem:[#allocation8 + $0x100] sm:$0xff]
    %v1808 = vld [vmem:[#allocation8 + $0x108] sm:$0xff]
    %v1809 = vld [vmem:[#allocation8 + $0x110] sm:$0xff]
    %v1810 = vld [vmem:[#allocation8 + $0x118] sm:$0xff]
    %v1811 = vld [vmem:[#allocation8 + $0x120] sm:$0xff]
    %v1812 = vld [vmem:[#allocation8 + $0x128] sm:$0xff]
    %v1813 = vld [vmem:[#allocation8 + $0x130] sm:$0xff]
    %v1814 = vld [vmem:[#allocation8 + $0x138] sm:$0xff]
    %v1815 = vld [vmem:[#allocation8 + $0x140] sm:$0xff]
    %v1816 = vld [vmem:[#allocation8 + $0x148] sm:$0xff]
    %v1817 = vld [vmem:[#allocation8 + $0x150] sm:$0xff]
    %v1818 = vld [vmem:[#allocation8 + $0x158] sm:$0xff]
    %v1819 = vld [vmem:[#allocation8 + $0x160] sm:$0xff]
    %v1820 = vld [vmem:[#allocation8 + $0x168] sm:$0xff]
    %v1821 = vld [vmem:[#allocation8 + $0x170] sm:$0xff]
    %v1822 = vld [vmem:[#allocation8 + $0x178] sm:$0xff]
    %v1823 = vld [vmem:[%s7] sm:$0x7]
    %v1824 = vld [vmem:[%s8] sm:$0x7]
    %v1825 = vld [vmem:[#allocation2] sm:$0xff]
    %v1826 = vld [vmem:[#allocation2 + $0x8] sm:$0xff]
    %v1828 = vlaneseq
    %v1829 = vshrl.u32 %v1828, 7
    %v1830 = vsub.s32 0, %v1829
    %v1831 = vrot.slane %v1823, %v1830
    %v1832 = vlaneseq
    %v1833 = vshrl.u32 %v1832, 7
    %v1834 = vsub.s32 1, %v1833
    %v1835 = vrot.slane %v1823, %v1834
    %v1836 = vlaneseq
    %v1837 = vshrl.u32 %v1836, 7
    %v1838 = vsub.s32 2, %v1837
    %v1839 = vrot.slane %v1823, %v1838
    %1843 = vmatprep.subr.mxu0 %v1773
    %1844 = vmatpush1.msra.mxu0 %v1772
    %1845 = vmatprep.subr.mxu0 %v1770
    %1846 = vmatpush1.msra.mxu0 %v1769
    %1847 = vmatprep.subr.mxu0 %v1767
    %1848 = vmatpush1.msra.mxu0 %v1766
    %1849 = vmatprep.subr.mxu0 %v1764
    %1850 = vmatpush1.msra.mxu0 %v1763
    %1851 = vmatprep.subr.mxu0 %v1761
    %1852 = vmatpush1.msra.mxu0 %v1760
    %1853 = vmatprep.subr.mxu0 %v1758
    %1854 = vmatpush1.msra.mxu0 %v1757
    %1855 = vmatprep.subr.mxu0 %v1755
    %1856 = vmatpush1.msra.mxu0 %v1754
    %1857 = vmatprep.subr.mxu0 %v1752
    %1858 = vmatpush1.msra.mxu0 %v1751
    %1859 = vmatprep.subr.mxu0 %v1749
    %1860 = vmatpush1.msra.mxu0 %v1748
    %1861 = vmatprep.subr.mxu0 %v1746
    %1862 = vmatpush1.msra.mxu0 %v1745
    %1863 = vmatprep.subr.mxu0 %v1743
    %1864 = vmatpush1.msra.mxu0 %v1742
    %1865 = vmatprep.subr.mxu0 %v1740
    %1866 = vmatpush1.msra.mxu0 %v1739
    %1867 = vmatprep.subr.mxu0 %v1737
    %1868 = vmatpush1.msra.mxu0 %v1736
    %1869 = vmatprep.subr.mxu0 %v1734
    %1870 = vmatpush1.msra.mxu0 %v1733
    %1871 = vmatprep.subr.mxu0 %v1731
    %1872 = vmatpush1.msra.mxu0 %v1730
    %1873 = vmatprep.subr.mxu0 %v1728
    %1874 = vmatpush1.msra.mxu0 %v1727
    %1875 = vmatprep.subr.mxu0 0.0
    %1876 = vmatpush2.msra.mxu0 0.0
    %1877 = vmatprep.subr.mxu0 0.0
    %1878 = vmatpush2.msra.mxu0 0.0
    %1879 = vmatprep.subr.mxu0 0.0
    %1880 = vmatpush2.msra.mxu0 0.0
    %1881 = vmatprep.subr.mxu0 0.0
    %1882 = vmatpush2.msra.mxu0 0.0
    %1883 = vmatprep.subr.mxu0 0.0
    %1884 = vmatpush2.msra.mxu0 0.0
    %1885 = vmatprep.subr.mxu0 0.0
    %1886 = vmatpush2.msra.mxu0 0.0
    %1887 = vmatprep.subr.mxu0 0.0
    %1888 = vmatpush2.msra.mxu0 0.0
    %1889 = vmatprep.subr.mxu0 0.0
    %1890 = vmatpush2.msra.mxu0 0.0
    %1891 = vmatprep.subr.mxu0 0.0
    %1892 = vmatpush2.msra.mxu0 0.0
    %1893 = vmatprep.subr.mxu0 0.0
    %1894 = vmatpush2.msra.mxu0 0.0
    %1895 = vmatprep.subr.mxu0 0.0
    %1896 = vmatpush2.msra.mxu0 0.0
    %1897 = vmatprep.subr.mxu0 0.0
    %1898 = vmatpush2.msra.mxu0 0.0
    %1899 = vmatprep.subr.mxu0 0.0
    %1900 = vmatpush2.msra.mxu0 0.0
    %1901 = vmatprep.subr.mxu0 0.0
    %1902 = vmatpush2.msra.mxu0 0.0
    %1903 = vmatprep.subr.mxu0 0.0
    %1904 = vmatpush2.msra.mxu0 0.0
    %1905 = vmatprep.subr.mxu0 0.0
    %1906 = vmatpush2.msra.mxu0 0.0
    %1907 = vmatprep.mubr.f32.mxu0 0.0
    %1908 = vmatmul.mubr.f32.gmra.mxu0 %v1825
    %v1909 = vpop.f32.mrf.mxu0
    %v1910 = vadd.f32 %v1831, %v1909
    %v1911 = vpop.f32.mrf.mxu0
    %v1912 = vadd.f32 %v1835, %v1911
    %1913 = vmatprep.mubr.f32.mxu0 0.0
    %1914 = vmatmul.mubr.f32.gmra.mxu0 %v1826
    %v1915 = vpop.f32.mrf.mxu0
    %v1916 = vadd.f32 %v1831, %v1915
    %v1917 = vpop.f32.mrf.mxu0
    %v1918 = vadd.f32 %v1835, %v1917
    %1919 = vdwg.mxu0
    %1920 = vmatprep.subr.mxu0 0.0
    %1921 = vmatpush1.msra.mxu0 %v1774
    %1922 = vmatprep.subr.mxu0 0.0
    %1923 = vmatpush1.msra.mxu0 %v1771
    %1924 = vmatprep.subr.mxu0 0.0
    %1925 = vmatpush1.msra.mxu0 %v1768
    %1926 = vmatprep.subr.mxu0 0.0
    %1927 = vmatpush1.msra.mxu0 %v1765
    %1928 = vmatprep.subr.mxu0 0.0
    %1929 = vmatpush1.msra.mxu0 %v1762
    %1930 = vmatprep.subr.mxu0 0.0
    %1931 = vmatpush1.msra.mxu0 %v1759
    %1932 = vmatprep.subr.mxu0 0.0
    %1933 = vmatpush1.msra.mxu0 %v1756
    %1934 = vmatprep.subr.mxu0 0.0
    %1935 = vmatpush1.msra.mxu0 %v1753
    %1936 = vmatprep.subr.mxu0 0.0
    %1937 = vmatpush1.msra.mxu0 %v1750
    %1938 = vmatprep.subr.mxu0 0.0
    %1939 = vmatpush1.msra.mxu0 %v1747
    %1940 = vmatprep.subr.mxu0 0.0
    %1941 = vmatpush1.msra.mxu0 %v1744
    %1942 = vmatprep.subr.mxu0 0.0
    %1943 = vmatpush1.msra.mxu0 %v1741
    %1944 = vmatprep.subr.mxu0 0.0
    %1945 = vmatpush1.msra.mxu0 %v1738
    %1946 = vmatprep.subr.mxu0 0.0
    %1947 = vmatpush1.msra.mxu0 %v1735
    %1948 = vmatprep.subr.mxu0 0.0
    %1949 = vmatpush1.msra.mxu0 %v1732
    %1950 = vmatprep.subr.mxu0 0.0
    %1951 = vmatpush1.msra.mxu0 %v1729
    %1952 = vmatprep.subr.mxu0 0.0
    %1953 = vmatpush2.msra.mxu0 0.0
    %1954 = vmatprep.subr.mxu0 0.0
    %1955 = vmatpush2.msra.mxu0 0.0
    %1956 = vmatprep.subr.mxu0 0.0
    %1957 = vmatpush2.msra.mxu0 0.0
    %1958 = vmatprep.subr.mxu0 0.0
    %1959 = vmatpush2.msra.mxu0 0.0
    %1960 = vmatprep.subr.mxu0 0.0
    %1961 = vmatpush2.msra.mxu0 0.0
    %1962 = vmatprep.subr.mxu0 0.0
    %1963 = vmatpush2.msra.mxu0 0.0
    %1964 = vmatprep.subr.mxu0 0.0
    %1965 = vmatpush2.msra.mxu0 0.0
    %1966 = vmatprep.subr.mxu0 0.0
    %1967 = vmatpush2.msra.mxu0 0.0
    %1968 = vmatprep.subr.mxu0 0.0
    %1969 = vmatpush2.msra.mxu0 0.0
    %1970 = vmatprep.subr.mxu0 0.0
    %1971 = vmatpush2.msra.mxu0 0.0
    %1972 = vmatprep.subr.mxu0 0.0
    %1973 = vmatpush2.msra.mxu0 0.0
    %1974 = vmatprep.subr.mxu0 0.0
    %1975 = vmatpush2.msra.mxu0 0.0
    %1976 = vmatprep.subr.mxu0 0.0
    %1977 = vmatpush2.msra.mxu0 0.0
    %1978 = vmatprep.subr.mxu0 0.0
    %1979 = vmatpush2.msra.mxu0 0.0
    %1980 = vmatprep.subr.mxu0 0.0
    %1981 = vmatpush2.msra.mxu0 0.0
    %1982 = vmatprep.subr.mxu0 0.0
    %1983 = vmatpush2.msra.mxu0 0.0
    %1984 = vmatprep.mubr.f32.mxu0 0.0
    %1985 = vmatmul.mubr.f32.gmra.mxu0 %v1825
    %v1986 = vpop.f32.mrf.mxu0
    %v1987 = vadd.f32 %v1839, %v1986
    %v1988 = vpop.f32.mrf.mxu0
    %1989 = vmatprep.mubr.f32.mxu0 0.0
    %1990 = vmatmul.mubr.f32.gmra.mxu0 %v1826
    %v1991 = vpop.f32.mrf.mxu0
    %v1992 = vadd.f32 %v1839, %v1991
    %v1993 = vpop.f32.mrf.mxu0
    %1994 = vdwg.mxu0
    %v1996 = vlaneseq
    %v1997 = vshrl.u32 %v1996, 7
    %v1998 = vsub.s32 0, %v1997
    %v1999 = vrot.slane %v1824, %v1998
    %v2000 = vlaneseq
    %v2001 = vshrl.u32 %v2000, 7
    %v2002 = vsub.s32 1, %v2001
    %v2003 = vrot.slane %v1824, %v2002
    %v2004 = vlaneseq
    %v2005 = vshrl.u32 %v2004, 7
    %v2006 = vsub.s32 2, %v2005
    %v2007 = vrot.slane %v1824, %v2006
    %2011 = vmatprep.subr.mxu0 %v1821
    %2012 = vmatpush1.msra.mxu0 %v1820
    %2013 = vmatprep.subr.mxu0 %v1818
    %2014 = vmatpush1.msra.mxu0 %v1817
    %2015 = vmatprep.subr.mxu0 %v1815
    %2016 = vmatpush1.msra.mxu0 %v1814
    %2017 = vmatprep.subr.mxu0 %v1812
    %2018 = vmatpush1.msra.mxu0 %v1811
    %2019 = vmatprep.subr.mxu0 %v1809
    %2020 = vmatpush1.msra.mxu0 %v1808
    %2021 = vmatprep.subr.mxu0 %v1806
    %2022 = vmatpush1.msra.mxu0 %v1805
    %2023 = vmatprep.subr.mxu0 %v1803
    %2024 = vmatpush1.msra.mxu0 %v1802
    %2025 = vmatprep.subr.mxu0 %v1800
    %2026 = vmatpush1.msra.mxu0 %v1799
    %2027 = vmatprep.subr.mxu0 %v1797
    %2028 = vmatpush1.msra.mxu0 %v1796
    %2029 = vmatprep.subr.mxu0 %v1794
    %2030 = vmatpush1.msra.mxu0 %v1793
    %2031 = vmatprep.subr.mxu0 %v1791
    %2032 = vmatpush1.msra.mxu0 %v1790
    %2033 = vmatprep.subr.mxu0 %v1788
    %2034 = vmatpush1.msra.mxu0 %v1787
    %2035 = vmatprep.subr.mxu0 %v1785
    %2036 = vmatpush1.msra.mxu0 %v1784
    %2037 = vmatprep.subr.mxu0 %v1782
    %2038 = vmatpush1.msra.mxu0 %v1781
    %2039 = vmatprep.subr.mxu0 %v1779
    %2040 = vmatpush1.msra.mxu0 %v1778
    %2041 = vmatprep.subr.mxu0 %v1776
    %2042 = vmatpush1.msra.mxu0 %v1775
    %2043 = vmatprep.subr.mxu0 0.0
    %2044 = vmatpush2.msra.mxu0 0.0
    %2045 = vmatprep.subr.mxu0 0.0
    %2046 = vmatpush2.msra.mxu0 0.0
    %2047 = vmatprep.subr.mxu0 0.0
    %2048 = vmatpush2.msra.mxu0 0.0
    %2049 = vmatprep.subr.mxu0 0.0
    %2050 = vmatpush2.msra.mxu0 0.0
    %2051 = vmatprep.subr.mxu0 0.0
    %2052 = vmatpush2.msra.mxu0 0.0
    %2053 = vmatprep.subr.mxu0 0.0
    %2054 = vmatpush2.msra.mxu0 0.0
    %2055 = vmatprep.subr.mxu0 0.0
    %2056 = vmatpush2.msra.mxu0 0.0
    %2057 = vmatprep.subr.mxu0 0.0
    %2058 = vmatpush2.msra.mxu0 0.0
    %2059 = vmatprep.subr.mxu0 0.0
    %2060 = vmatpush2.msra.mxu0 0.0
    %2061 = vmatprep.subr.mxu0 0.0
    %2062 = vmatpush2.msra.mxu0 0.0
    %2063 = vmatprep.subr.mxu0 0.0
    %2064 = vmatpush2.msra.mxu0 0.0
    %2065 = vmatprep.subr.mxu0 0.0
    %2066 = vmatpush2.msra.mxu0 0.0
    %2067 = vmatprep.subr.mxu0 0.0
    %2068 = vmatpush2.msra.mxu0 0.0
    %2069 = vmatprep.subr.mxu0 0.0
    %2070 = vmatpush2.msra.mxu0 0.0
    %2071 = vmatprep.subr.mxu0 0.0
    %2072 = vmatpush2.msra.mxu0 0.0
    %2073 = vmatprep.subr.mxu0 0.0
    %2074 = vmatpush2.msra.mxu0 0.0
    %2075 = vmatprep.mubr.f32.mxu0 0.0
    %2076 = vmatmul.mubr.f32.gmra.mxu0 0.0
    %v2077 = vpop.f32.mrf.mxu0
    %v2078 = vadd.f32 %v1999, %v2077
    %v2079 = vpop.f32.mrf.mxu0
    %v2080 = vadd.f32 %v2003, %v2079
    %2081 = vdwg.mxu0
    %2082 = vmatprep.subr.mxu0 0.0
    %2083 = vmatpush1.msra.mxu0 %v1822
    %2084 = vmatprep.subr.mxu0 0.0
    %2085 = vmatpush1.msra.mxu0 %v1819
    %2086 = vmatprep.subr.mxu0 0.0
    %2087 = vmatpush1.msra.mxu0 %v1816
    %2088 = vmatprep.subr.mxu0 0.0
    %2089 = vmatpush1.msra.mxu0 %v1813
    %2090 = vmatprep.subr.mxu0 0.0
    %2091 = vmatpush1.msra.mxu0 %v1810
    %2092 = vmatprep.subr.mxu0 0.0
    %2093 = vmatpush1.msra.mxu0 %v1807
    %2094 = vmatprep.subr.mxu0 0.0
    %2095 = vmatpush1.msra.mxu0 %v1804
    %2096 = vmatprep.subr.mxu0 0.0
    %2097 = vmatpush1.msra.mxu0 %v1801
    %2098 = vmatprep.subr.mxu0 0.0
    %2099 = vmatpush1.msra.mxu0 %v1798
    %2100 = vmatprep.subr.mxu0 0.0
    %2101 = vmatpush1.msra.mxu0 %v1795
    %2102 = vmatprep.subr.mxu0 0.0
    %2103 = vmatpush1.msra.mxu0 %v1792
    %2104 = vmatprep.subr.mxu0 0.0
    %2105 = vmatpush1.msra.mxu0 %v1789
    %2106 = vmatprep.subr.mxu0 0.0
    %2107 = vmatpush1.msra.mxu0 %v1786
    %2108 = vmatprep.subr.mxu0 0.0
    %2109 = vmatpush1.msra.mxu0 %v1783
    %2110 = vmatprep.subr.mxu0 0.0
    %2111 = vmatpush1.msra.mxu0 %v1780
    %2112 = vmatprep.subr.mxu0 0.0
    %2113 = vmatpush1.msra.mxu0 %v1777
    %2114 = vmatprep.subr.mxu0 0.0
    %2115 = vmatpush2.msra.mxu0 0.0
    %2116 = vmatprep.subr.mxu0 0.0
    %2117 = vmatpush2.msra.mxu0 0.0
    %2118 = vmatprep.subr.mxu0 0.0
    %2119 = vmatpush2.msra.mxu0 0.0
    %2120 = vmatprep.subr.mxu0 0.0
    %2121 = vmatpush2.msra.mxu0 0.0
    %2122 = vmatprep.subr.mxu0 0.0
    %2123 = vmatpush2.msra.mxu0 0.0
    %2124 = vmatprep.subr.mxu0 0.0
    %2125 = vmatpush2.msra.mxu0 0.0
    %2126 = vmatprep.subr.mxu0 0.0
    %2127 = vmatpush2.msra.mxu0 0.0
    %2128 = vmatprep.subr.mxu0 0.0
    %2129 = vmatpush2.msra.mxu0 0.0
    %2130 = vmatprep.subr.mxu0 0.0
    %2131 = vmatpush2.msra.mxu0 0.0
    %2132 = vmatprep.subr.mxu0 0.0
    %2133 = vmatpush2.msra.mxu0 0.0
    %2134 = vmatprep.subr.mxu0 0.0
    %2135 = vmatpush2.msra.mxu0 0.0
    %2136 = vmatprep.subr.mxu0 0.0
    %2137 = vmatpush2.msra.mxu0 0.0
    %2138 = vmatprep.subr.mxu0 0.0
    %2139 = vmatpush2.msra.mxu0 0.0
    %2140 = vmatprep.subr.mxu0 0.0
    %2141 = vmatpush2.msra.mxu0 0.0
    %2142 = vmatprep.subr.mxu0 0.0
    %2143 = vmatpush2.msra.mxu0 0.0
    %2144 = vmatprep.subr.mxu0 0.0
    %2145 = vmatpush2.msra.mxu0 0.0
    %2146 = vmatprep.mubr.f32.mxu0 0.0
    %2147 = vmatmul.mubr.f32.gmra.mxu0 0.0
    %v2148 = vpop.f32.mrf.mxu0
    %v2149 = vadd.f32 %v2007, %v2148
    %v2150 = vpop.f32.mrf.mxu0
    %2151 = vdwg.mxu0
    %v2152 = vadd.f32 %v1910, %v2078
    %v2153 = vadd.f32 %v1912, %v2080
    %v2154 = vxor.u32 %v2152, 2147483648
    %v2155 = vxor.u32 %v2153, 2147483648
    %v2156 = vmul.f32 %v2154, 1.442695
    %v2157 = vpow.pop %v2156
    %v2158 = vmul.f32 %v2155, 1.442695
    %v2159 = vpow.pop %v2158
    %v2160 = vadd.f32 %v2157, 1.0
    %v2161 = vadd.f32 %v2159, 1.0
    %v2162 = vrcp.pop %v2160
    %v2163 = vmul.f32 1.0, %v2162
    %v2164 = vrcp.pop %v2161
    %v2165 = vmul.f32 1.0, %v2164
    %v2166 = vmul.f32 %v2163, %v2149
    %v2167 = vadd.f32 %v1987, %v2166
    %v2168 = vtanh.pop %v2167
    %v2169 = vsub.f32 1.0, %v2165
    %v2170 = vmul.f32 %v2169, %v2168
    %v2171 = vmul.f32 %v2165, 0.0
    %v2172 = vadd.f32 %v2170, %v2171
    %2173 = vst [vmem:[#allocation2] sm:$0x3] %v2172
    %2174 = vmatprep.subr.mxu0 %v1821
    %2175 = vmatpush1.msra.mxu0 %v1820
    %2176 = vmatprep.subr.mxu0 %v1818
    %2177 = vmatpush1.msra.mxu0 %v1817
    %2178 = vmatprep.subr.mxu0 %v1815
    %2179 = vmatpush1.msra.mxu0 %v1814
    %2180 = vmatprep.subr.mxu0 %v1812
    %2181 = vmatpush1.msra.mxu0 %v1811
    %2182 = vmatprep.subr.mxu0 %v1809
    %2183 = vmatpush1.msra.mxu0 %v1808
    %2184 = vmatprep.subr.mxu0 %v1806
    %2185 = vmatpush1.msra.mxu0 %v1805
    %2186 = vmatprep.subr.mxu0 %v1803
    %2187 = vmatpush1.msra.mxu0 %v1802
    %2188 = vmatprep.subr.mxu0 %v1800
    %2189 = vmatpush1.msra.mxu0 %v1799
    %2190 = vmatprep.subr.mxu0 %v1797
    %2191 = vmatpush1.msra.mxu0 %v1796
    %2192 = vmatprep.subr.mxu0 %v1794
    %2193 = vmatpush1.msra.mxu0 %v1793
    %2194 = vmatprep.subr.mxu0 %v1791
    %2195 = vmatpush1.msra.mxu0 %v1790
    %2196 = vmatprep.subr.mxu0 %v1788
    %2197 = vmatpush1.msra.mxu0 %v1787
    %2198 = vmatprep.subr.mxu0 %v1785
    %2199 = vmatpush1.msra.mxu0 %v1784
    %2200 = vmatprep.subr.mxu0 %v1782
    %2201 = vmatpush1.msra.mxu0 %v1781
    %2202 = vmatprep.subr.mxu0 %v1779
    %2203 = vmatpush1.msra.mxu0 %v1778
    %2204 = vmatprep.subr.mxu0 %v1776
    %2205 = vmatpush1.msra.mxu0 %v1775
    %2206 = vmatprep.subr.mxu0 0.0
    %2207 = vmatpush2.msra.mxu0 0.0
    %2208 = vmatprep.subr.mxu0 0.0
    %2209 = vmatpush2.msra.mxu0 0.0
    %2210 = vmatprep.subr.mxu0 0.0
    %2211 = vmatpush2.msra.mxu0 0.0
    %2212 = vmatprep.subr.mxu0 0.0
    %2213 = vmatpush2.msra.mxu0 0.0
    %2214 = vmatprep.subr.mxu0 0.0
    %2215 = vmatpush2.msra.mxu0 0.0
    %2216 = vmatprep.subr.mxu0 0.0
    %2217 = vmatpush2.msra.mxu0 0.0
    %2218 = vmatprep.subr.mxu0 0.0
    %2219 = vmatpush2.msra.mxu0 0.0
    %2220 = vmatprep.subr.mxu0 0.0
    %2221 = vmatpush2.msra.mxu0 0.0
    %2222 = vmatprep.subr.mxu0 0.0
    %2223 = vmatpush2.msra.mxu0 0.0
    %2224 = vmatprep.subr.mxu0 0.0
    %2225 = vmatpush2.msra.mxu0 0.0
    %2226 = vmatprep.subr.mxu0 0.0
    %2227 = vmatpush2.msra.mxu0 0.0
    %2228 = vmatprep.subr.mxu0 0.0
    %2229 = vmatpush2.msra.mxu0 0.0
    %2230 = vmatprep.subr.mxu0 0.0
    %2231 = vmatpush2.msra.mxu0 0.0
    %2232 = vmatprep.subr.mxu0 0.0
    %2233 = vmatpush2.msra.mxu0 0.0
    %2234 = vmatprep.subr.mxu0 0.0
    %2235 = vmatpush2.msra.mxu0 0.0
    %2236 = vmatprep.subr.mxu0 0.0
    %2237 = vmatpush2.msra.mxu0 0.0
    %2238 = vmatprep.mubr.f32.mxu0 0.0
    %2239 = vmatmul.mubr.f32.gmra.mxu0 %v2172
    %v2240 = vpop.f32.mrf.mxu0
    %v2241 = vadd.f32 %v1999, %v2240
    %v2242 = vpop.f32.mrf.mxu0
    %v2243 = vadd.f32 %v2003, %v2242
    %2244 = vdwg.mxu0
    %2245 = vmatprep.subr.mxu0 0.0
    %2246 = vmatpush1.msra.mxu0 %v1822
    %2247 = vmatprep.subr.mxu0 0.0
    %2248 = vmatpush1.msra.mxu0 %v1819
    %2249 = vmatprep.subr.mxu0 0.0
    %2250 = vmatpush1.msra.mxu0 %v1816
    %2251 = vmatprep.subr.mxu0 0.0
    %2252 = vmatpush1.msra.mxu0 %v1813
    %2253 = vmatprep.subr.mxu0 0.0
    %2254 = vmatpush1.msra.mxu0 %v1810
    %2255 = vmatprep.subr.mxu0 0.0
    %2256 = vmatpush1.msra.mxu0 %v1807
    %2257 = vmatprep.subr.mxu0 0.0
    %2258 = vmatpush1.msra.mxu0 %v1804
    %2259 = vmatprep.subr.mxu0 0.0
    %2260 = vmatpush1.msra.mxu0 %v1801
    %2261 = vmatprep.subr.mxu0 0.0
    %2262 = vmatpush1.msra.mxu0 %v1798
    %2263 = vmatprep.subr.mxu0 0.0
    %2264 = vmatpush1.msra.mxu0 %v1795
    %2265 = vmatprep.subr.mxu0 0.0
    %2266 = vmatpush1.msra.mxu0 %v1792
    %2267 = vmatprep.subr.mxu0 0.0
    %2268 = vmatpush1.msra.mxu0 %v1789
    %2269 = vmatprep.subr.mxu0 0.0
    %2270 = vmatpush1.msra.mxu0 %v1786
    %2271 = vmatprep.subr.mxu0 0.0
    %2272 = vmatpush1.msra.mxu0 %v1783
    %2273 = vmatprep.subr.mxu0 0.0
    %2274 = vmatpush1.msra.mxu0 %v1780
    %2275 = vmatprep.subr.mxu0 0.0
    %2276 = vmatpush1.msra.mxu0 %v1777
    %2277 = vmatprep.subr.mxu0 0.0
    %2278 = vmatpush2.msra.mxu0 0.0
    %2279 = vmatprep.subr.mxu0 0.0
    %2280 = vmatpush2.msra.mxu0 0.0
    %2281 = vmatprep.subr.mxu0 0.0
    %2282 = vmatpush2.msra.mxu0 0.0
    %2283 = vmatprep.subr.mxu0 0.0
    %2284 = vmatpush2.msra.mxu0 0.0
    %2285 = vmatprep.subr.mxu0 0.0
    %2286 = vmatpush2.msra.mxu0 0.0
    %2287 = vmatprep.subr.mxu0 0.0
    %2288 = vmatpush2.msra.mxu0 0.0
    %2289 = vmatprep.subr.mxu0 0.0
    %2290 = vmatpush2.msra.mxu0 0.0
    %2291 = vmatprep.subr.mxu0 0.0
    %2292 = vmatpush2.msra.mxu0 0.0
    %2293 = vmatprep.subr.mxu0 0.0
    %2294 = vmatpush2.msra.mxu0 0.0
    %2295 = vmatprep.subr.mxu0 0.0
    %2296 = vmatpush2.msra.mxu0 0.0
    %2297 = vmatprep.subr.mxu0 0.0
    %2298 = vmatpush2.msra.mxu0 0.0
    %2299 = vmatprep.subr.mxu0 0.0
    %2300 = vmatpush2.msra.mxu0 0.0
    %2301 = vmatprep.subr.mxu0 0.0
    %2302 = vmatpush2.msra.mxu0 0.0
    %2303 = vmatprep.subr.mxu0 0.0
    %2304 = vmatpush2.msra.mxu0 0.0
    %2305 = vmatprep.subr.mxu0 0.0
    %2306 = vmatpush2.msra.mxu0 0.0
    %2307 = vmatprep.subr.mxu0 0.0
    %2308 = vmatpush2.msra.mxu0 0.0
    %2309 = vmatprep.mubr.f32.mxu0 0.0
    %2310 = vmatmul.mubr.f32.gmra.mxu0 %v2172
    %v2311 = vpop.f32.mrf.mxu0
    %v2312 = vadd.f32 %v2007, %v2311
    %v2313 = vpop.f32.mrf.mxu0
    %2314 = vdwg.mxu0
    %v2317 = vrot.slane %v2241, 6
    %v2318 = vrot.slane %v2243, 6
    %v2321 = vadd.f32 %v1910, %v2317
    %v2322 = vadd.f32 %v1912, %v2318
    %v2323 = vxor.u32 %v2321, 2147483648
    %v2324 = vxor.u32 %v2322, 2147483648
    %v2325 = vmul.f32 %v2323, 1.442695
    %v2326 = vpow.pop %v2325
    %v2327 = vmul.f32 %v2324, 1.442695
    %v2328 = vpow.pop %v2327
    %v2329 = vadd.f32 %v2326, 1.0
    %v2330 = vadd.f32 %v2328, 1.0
    %v2331 = vrcp.pop %v2329
    %v2332 = vmul.f32 1.0, %v2331
    %v2333 = vrcp.pop %v2330
    %v2334 = vmul.f32 1.0, %v2333
    %v2336 = vrot.slane %v2312, 6
    %v2338 = vmul.f32 %v2332, %v2336
    %v2339 = vadd.f32 %v1987, %v2338
    %v2340 = vtanh.pop %v2339
    %v2341 = vsub.f32 1.0, %v2334
    %v2342 = vmul.f32 %v2341, %v2340
    %v2344 = vrot.slane %v2172, 6
    %v2346 = vmul.f32 %v2334, %v2344
    %v2347 = vadd.f32 %v2342, %v2346
    %2348 = vst [vmem:[#allocation2] sm:$0xc] %v2347
    %v2350 = vrot.slane %v2347, 2
    %2352 = vmatprep.subr.mxu0 %v1821
    %2353 = vmatpush1.msra.mxu0 %v1820
    %2354 = vmatprep.subr.mxu0 %v1818
    %2355 = vmatpush1.msra.mxu0 %v1817
    %2356 = vmatprep.subr.mxu0 %v1815
    %2357 = vmatpush1.msra.mxu0 %v1814
    %2358 = vmatprep.subr.mxu0 %v1812
    %2359 = vmatpush1.msra.mxu0 %v1811
    %2360 = vmatprep.subr.mxu0 %v1809
    %2361 = vmatpush1.msra.mxu0 %v1808
    %2362 = vmatprep.subr.mxu0 %v1806
    %2363 = vmatpush1.msra.mxu0 %v1805
    %2364 = vmatprep.subr.mxu0 %v1803
    %2365 = vmatpush1.msra.mxu0 %v1802
    %2366 = vmatprep.subr.mxu0 %v1800
    %2367 = vmatpush1.msra.mxu0 %v1799
    %2368 = vmatprep.subr.mxu0 %v1797
    %2369 = vmatpush1.msra.mxu0 %v1796
    %2370 = vmatprep.subr.mxu0 %v1794
    %2371 = vmatpush1.msra.mxu0 %v1793
    %2372 = vmatprep.subr.mxu0 %v1791
    %2373 = vmatpush1.msra.mxu0 %v1790
    %2374 = vmatprep.subr.mxu0 %v1788
    %2375 = vmatpush1.msra.mxu0 %v1787
    %2376 = vmatprep.subr.mxu0 %v1785
    %2377 = vmatpush1.msra.mxu0 %v1784
    %2378 = vmatprep.subr.mxu0 %v1782
    %2379 = vmatpush1.msra.mxu0 %v1781
    %2380 = vmatprep.subr.mxu0 %v1779
    %2381 = vmatpush1.msra.mxu0 %v1778
    %2382 = vmatprep.subr.mxu0 %v1776
    %2383 = vmatpush1.msra.mxu0 %v1775
    %2384 = vmatprep.subr.mxu0 0.0
    %2385 = vmatpush2.msra.mxu0 0.0
    %2386 = vmatprep.subr.mxu0 0.0
    %2387 = vmatpush2.msra.mxu0 0.0
    %2388 = vmatprep.subr.mxu0 0.0
    %2389 = vmatpush2.msra.mxu0 0.0
    %2390 = vmatprep.subr.mxu0 0.0
    %2391 = vmatpush2.msra.mxu0 0.0
    %2392 = vmatprep.subr.mxu0 0.0
    %2393 = vmatpush2.msra.mxu0 0.0
    %2394 = vmatprep.subr.mxu0 0.0
    %2395 = vmatpush2.msra.mxu0 0.0
    %2396 = vmatprep.subr.mxu0 0.0
    %2397 = vmatpush2.msra.mxu0 0.0
    %2398 = vmatprep.subr.mxu0 0.0
    %2399 = vmatpush2.msra.mxu0 0.0
    %2400 = vmatprep.subr.mxu0 0.0
    %2401 = vmatpush2.msra.mxu0 0.0
    %2402 = vmatprep.subr.mxu0 0.0
    %2403 = vmatpush2.msra.mxu0 0.0
    %2404 = vmatprep.subr.mxu0 0.0
    %2405 = vmatpush2.msra.mxu0 0.0
    %2406 = vmatprep.subr.mxu0 0.0
    %2407 = vmatpush2.msra.mxu0 0.0
    %2408 = vmatprep.subr.mxu0 0.0
    %2409 = vmatpush2.msra.mxu0 0.0
    %2410 = vmatprep.subr.mxu0 0.0
    %2411 = vmatpush2.msra.mxu0 0.0
    %2412 = vmatprep.subr.mxu0 0.0
    %2413 = vmatpush2.msra.mxu0 0.0
    %2414 = vmatprep.subr.mxu0 0.0
    %2415 = vmatpush2.msra.mxu0 0.0
    %2416 = vmatprep.mubr.f32.mxu0 0.0
    %2417 = vmatmul.mubr.f32.gmra.mxu0 %v2350
    %v2418 = vpop.f32.mrf.mxu0
    %v2419 = vadd.f32 %v1999, %v2418
    %v2420 = vpop.f32.mrf.mxu0
    %v2421 = vadd.f32 %v2003, %v2420
    %2422 = vdwg.mxu0
    %2423 = vmatprep.subr.mxu0 0.0
    %2424 = vmatpush1.msra.mxu0 %v1822
    %2425 = vmatprep.subr.mxu0 0.0
    %2426 = vmatpush1.msra.mxu0 %v1819
    %2427 = vmatprep.subr.mxu0 0.0
    %2428 = vmatpush1.msra.mxu0 %v1816
    %2429 = vmatprep.subr.mxu0 0.0
    %2430 = vmatpush1.msra.mxu0 %v1813
    %2431 = vmatprep.subr.mxu0 0.0
    %2432 = vmatpush1.msra.mxu0 %v1810
    %2433 = vmatprep.subr.mxu0 0.0
    %2434 = vmatpush1.msra.mxu0 %v1807
    %2435 = vmatprep.subr.mxu0 0.0
    %2436 = vmatpush1.msra.mxu0 %v1804
    %2437 = vmatprep.subr.mxu0 0.0
    %2438 = vmatpush1.msra.mxu0 %v1801
    %2439 = vmatprep.subr.mxu0 0.0
    %2440 = vmatpush1.msra.mxu0 %v1798
    %2441 = vmatprep.subr.mxu0 0.0
    %2442 = vmatpush1.msra.mxu0 %v1795
    %2443 = vmatprep.subr.mxu0 0.0
    %2444 = vmatpush1.msra.mxu0 %v1792
    %2445 = vmatprep.subr.mxu0 0.0
    %2446 = vmatpush1.msra.mxu0 %v1789
    %2447 = vmatprep.subr.mxu0 0.0
    %2448 = vmatpush1.msra.mxu0 %v1786
    %2449 = vmatprep.subr.mxu0 0.0
    %2450 = vmatpush1.msra.mxu0 %v1783
    %2451 = vmatprep.subr.mxu0 0.0
    %2452 = vmatpush1.msra.mxu0 %v1780
    %2453 = vmatprep.subr.mxu0 0.0
    %2454 = vmatpush1.msra.mxu0 %v1777
    %2455 = vmatprep.subr.mxu0 0.0
    %2456 = vmatpush2.msra.mxu0 0.0
    %2457 = vmatprep.subr.mxu0 0.0
    %2458 = vmatpush2.msra.mxu0 0.0
    %2459 = vmatprep.subr.mxu0 0.0
    %2460 = vmatpush2.msra.mxu0 0.0
    %2461 = vmatprep.subr.mxu0 0.0
    %2462 = vmatpush2.msra.mxu0 0.0
    %2463 = vmatprep.subr.mxu0 0.0
    %2464 = vmatpush2.msra.mxu0 0.0
    %2465 = vmatprep.subr.mxu0 0.0
    %2466 = vmatpush2.msra.mxu0 0.0
    %2467 = vmatprep.subr.mxu0 0.0
    %2468 = vmatpush2.msra.mxu0 0.0
    %2469 = vmatprep.subr.mxu0 0.0
    %2470 = vmatpush2.msra.mxu0 0.0
    %2471 = vmatprep.subr.mxu0 0.0
    %2472 = vmatpush2.msra.mxu0 0.0
    %2473 = vmatprep.subr.mxu0 0.0
    %2474 = vmatpush2.msra.mxu0 0.0
    %2475 = vmatprep.subr.mxu0 0.0
    %2476 = vmatpush2.msra.mxu0 0.0
    %2477 = vmatprep.subr.mxu0 0.0
    %2478 = vmatpush2.msra.mxu0 0.0
    %2479 = vmatprep.subr.mxu0 0.0
    %2480 = vmatpush2.msra.mxu0 0.0
    %2481 = vmatprep.subr.mxu0 0.0
    %2482 = vmatpush2.msra.mxu0 0.0
    %2483 = vmatprep.subr.mxu0 0.0
    %2484 = vmatpush2.msra.mxu0 0.0
    %2485 = vmatprep.subr.mxu0 0.0
    %2486 = vmatpush2.msra.mxu0 0.0
    %2487 = vmatprep.mubr.f32.mxu0 0.0
    %2488 = vmatmul.mubr.f32.gmra.mxu0 %v2350
    %v2489 = vpop.f32.mrf.mxu0
    %v2490 = vadd.f32 %v2007, %v2489
    %v2491 = vpop.f32.mrf.mxu0
    %2492 = vdwg.mxu0
    %v2495 = vrot.slane %v2419, 4
    %v2496 = vrot.slane %v2421, 4
    %v2499 = vadd.f32 %v1910, %v2495
    %v2500 = vadd.f32 %v1912, %v2496
    %v2501 = vxor.u32 %v2499, 2147483648
    %v2502 = vxor.u32 %v2500, 2147483648
    %v2503 = vmul.f32 %v2501, 1.442695
    %v2504 = vpow.pop %v2503
    %v2505 = vmul.f32 %v2502, 1.442695
    %v2506 = vpow.pop %v2505
    %v2507 = vadd.f32 %v2504, 1.0
    %v2508 = vadd.f32 %v2506, 1.0
    %v2509 = vrcp.pop %v2507
    %v2510 = vmul.f32 1.0, %v2509
    %v2511 = vrcp.pop %v2508
    %v2512 = vmul.f32 1.0, %v2511
    %v2514 = vrot.slane %v2490, 4
    %v2516 = vmul.f32 %v2510, %v2514
    %v2517 = vadd.f32 %v1987, %v2516
    %v2518 = vtanh.pop %v2517
    %v2519 = vsub.f32 1.0, %v2512
    %v2520 = vmul.f32 %v2519, %v2518
    %v2521 = vrot.slane %v2347, 6
    %v2523 = vmul.f32 %v2512, %v2521
    %v2524 = vadd.f32 %v2520, %v2523
    %2525 = vst [vmem:[#allocation2] sm:$0x30] %v2524
    %v2527 = vrot.slane %v2524, 4
    %2529 = vmatprep.subr.mxu0 %v1821
    %2530 = vmatpush1.msra.mxu0 %v1820
    %2531 = vmatprep.subr.mxu0 %v1818
    %2532 = vmatpush1.msra.mxu0 %v1817
    %2533 = vmatprep.subr.mxu0 %v1815
    %2534 = vmatpush1.msra.mxu0 %v1814
    %2535 = vmatprep.subr.mxu0 %v1812
    %2536 = vmatpush1.msra.mxu0 %v1811
    %2537 = vmatprep.subr.mxu0 %v1809
    %2538 = vmatpush1.msra.mxu0 %v1808
    %2539 = vmatprep.subr.mxu0 %v1806
    %2540 = vmatpush1.msra.mxu0 %v1805
    %2541 = vmatprep.subr.mxu0 %v1803
    %2542 = vmatpush1.msra.mxu0 %v1802
    %2543 = vmatprep.subr.mxu0 %v1800
    %2544 = vmatpush1.msra.mxu0 %v1799
    %2545 = vmatprep.subr.mxu0 %v1797
    %2546 = vmatpush1.msra.mxu0 %v1796
    %2547 = vmatprep.subr.mxu0 %v1794
    %2548 = vmatpush1.msra.mxu0 %v1793
    %2549 = vmatprep.subr.mxu0 %v1791
    %2550 = vmatpush1.msra.mxu0 %v1790
    %2551 = vmatprep.subr.mxu0 %v1788
    %2552 = vmatpush1.msra.mxu0 %v1787
    %2553 = vmatprep.subr.mxu0 %v1785
    %2554 = vmatpush1.msra.mxu0 %v1784
    %2555 = vmatprep.subr.mxu0 %v1782
    %2556 = vmatpush1.msra.mxu0 %v1781
    %2557 = vmatprep.subr.mxu0 %v1779
    %2558 = vmatpush1.msra.mxu0 %v1778
    %2559 = vmatprep.subr.mxu0 %v1776
    %2560 = vmatpush1.msra.mxu0 %v1775
    %2561 = vmatprep.subr.mxu0 0.0
    %2562 = vmatpush2.msra.mxu0 0.0
    %2563 = vmatprep.subr.mxu0 0.0
    %2564 = vmatpush2.msra.mxu0 0.0
    %2565 = vmatprep.subr.mxu0 0.0
    %2566 = vmatpush2.msra.mxu0 0.0
    %2567 = vmatprep.subr.mxu0 0.0
    %2568 = vmatpush2.msra.mxu0 0.0
    %2569 = vmatprep.subr.mxu0 0.0
    %2570 = vmatpush2.msra.mxu0 0.0
    %2571 = vmatprep.subr.mxu0 0.0
    %2572 = vmatpush2.msra.mxu0 0.0
    %2573 = vmatprep.subr.mxu0 0.0
    %2574 = vmatpush2.msra.mxu0 0.0
    %2575 = vmatprep.subr.mxu0 0.0
    %2576 = vmatpush2.msra.mxu0 0.0
    %2577 = vmatprep.subr.mxu0 0.0
    %2578 = vmatpush2.msra.mxu0 0.0
    %2579 = vmatprep.subr.mxu0 0.0
    %2580 = vmatpush2.msra.mxu0 0.0
    %2581 = vmatprep.subr.mxu0 0.0
    %2582 = vmatpush2.msra.mxu0 0.0
    %2583 = vmatprep.subr.mxu0 0.0
    %2584 = vmatpush2.msra.mxu0 0.0
    %2585 = vmatprep.subr.mxu0 0.0
    %2586 = vmatpush2.msra.mxu0 0.0
    %2587 = vmatprep.subr.mxu0 0.0
    %2588 = vmatpush2.msra.mxu0 0.0
    %2589 = vmatprep.subr.mxu0 0.0
    %2590 = vmatpush2.msra.mxu0 0.0
    %2591 = vmatprep.subr.mxu0 0.0
    %2592 = vmatpush2.msra.mxu0 0.0
    %2593 = vmatprep.mubr.f32.mxu0 0.0
    %2594 = vmatmul.mubr.f32.gmra.mxu0 %v2527
    %v2595 = vpop.f32.mrf.mxu0
    %v2596 = vadd.f32 %v1999, %v2595
    %v2597 = vpop.f32.mrf.mxu0
    %v2598 = vadd.f32 %v2003, %v2597
    %2599 = vdwg.mxu0
    %2600 = vmatprep.subr.mxu0 0.0
    %2601 = vmatpush1.msra.mxu0 %v1822
    %2602 = vmatprep.subr.mxu0 0.0
    %2603 = vmatpush1.msra.mxu0 %v1819
    %2604 = vmatprep.subr.mxu0 0.0
    %2605 = vmatpush1.msra.mxu0 %v1816
    %2606 = vmatprep.subr.mxu0 0.0
    %2607 = vmatpush1.msra.mxu0 %v1813
    %2608 = vmatprep.subr.mxu0 0.0
    %2609 = vmatpush1.msra.mxu0 %v1810
    %2610 = vmatprep.subr.mxu0 0.0
    %2611 = vmatpush1.msra.mxu0 %v1807
    %2612 = vmatprep.subr.mxu0 0.0
    %2613 = vmatpush1.msra.mxu0 %v1804
    %2614 = vmatprep.subr.mxu0 0.0
    %2615 = vmatpush1.msra.mxu0 %v1801
    %2616 = vmatprep.subr.mxu0 0.0
    %2617 = vmatpush1.msra.mxu0 %v1798
    %2618 = vmatprep.subr.mxu0 0.0
    %2619 = vmatpush1.msra.mxu0 %v1795
    %2620 = vmatprep.subr.mxu0 0.0
    %2621 = vmatpush1.msra.mxu0 %v1792
    %2622 = vmatprep.subr.mxu0 0.0
    %2623 = vmatpush1.msra.mxu0 %v1789
    %2624 = vmatprep.subr.mxu0 0.0
    %2625 = vmatpush1.msra.mxu0 %v1786
    %2626 = vmatprep.subr.mxu0 0.0
    %2627 = vmatpush1.msra.mxu0 %v1783
    %2628 = vmatprep.subr.mxu0 0.0
    %2629 = vmatpush1.msra.mxu0 %v1780
    %2630 = vmatprep.subr.mxu0 0.0
    %2631 = vmatpush1.msra.mxu0 %v1777
    %2632 = vmatprep.subr.mxu0 0.0
    %2633 = vmatpush2.msra.mxu0 0.0
    %2634 = vmatprep.subr.mxu0 0.0
    %2635 = vmatpush2.msra.mxu0 0.0
    %2636 = vmatprep.subr.mxu0 0.0
    %2637 = vmatpush2.msra.mxu0 0.0
    %2638 = vmatprep.subr.mxu0 0.0
    %2639 = vmatpush2.msra.mxu0 0.0
    %2640 = vmatprep.subr.mxu0 0.0
    %2641 = vmatpush2.msra.mxu0 0.0
    %2642 = vmatprep.subr.mxu0 0.0
    %2643 = vmatpush2.msra.mxu0 0.0
    %2644 = vmatprep.subr.mxu0 0.0
    %2645 = vmatpush2.msra.mxu0 0.0
    %2646 = vmatprep.subr.mxu0 0.0
    %2647 = vmatpush2.msra.mxu0 0.0
    %2648 = vmatprep.subr.mxu0 0.0
    %2649 = vmatpush2.msra.mxu0 0.0
    %2650 = vmatprep.subr.mxu0 0.0
    %2651 = vmatpush2.msra.mxu0 0.0
    %2652 = vmatprep.subr.mxu0 0.0
    %2653 = vmatpush2.msra.mxu0 0.0
    %2654 = vmatprep.subr.mxu0 0.0
    %2655 = vmatpush2.msra.mxu0 0.0
    %2656 = vmatprep.subr.mxu0 0.0
    %2657 = vmatpush2.msra.mxu0 0.0
    %2658 = vmatprep.subr.mxu0 0.0
    %2659 = vmatpush2.msra.mxu0 0.0
    %2660 = vmatprep.subr.mxu0 0.0
    %2661 = vmatpush2.msra.mxu0 0.0
    %2662 = vmatprep.subr.mxu0 0.0
    %2663 = vmatpush2.msra.mxu0 0.0
    %2664 = vmatprep.mubr.f32.mxu0 0.0
    %2665 = vmatmul.mubr.f32.gmra.mxu0 %v2527
    %v2666 = vpop.f32.mrf.mxu0
    %v2667 = vadd.f32 %v2007, %v2666
    %v2668 = vpop.f32.mrf.mxu0
    %2669 = vdwg.mxu0
    %v2672 = vrot.slane %v2596, 2
    %v2673 = vrot.slane %v2598, 2
    %v2676 = vadd.f32 %v1910, %v2672
    %v2677 = vadd.f32 %v1912, %v2673
    %v2678 = vxor.u32 %v2676, 2147483648
    %v2679 = vxor.u32 %v2677, 2147483648
    %v2680 = vmul.f32 %v2678, 1.442695
    %v2681 = vpow.pop %v2680
    %v2682 = vmul.f32 %v2679, 1.442695
    %v2683 = vpow.pop %v2682
    %v2684 = vadd.f32 %v2681, 1.0
    %v2685 = vadd.f32 %v2683, 1.0
    %v2686 = vrcp.pop %v2684
    %v2687 = vmul.f32 1.0, %v2686
    %v2688 = vrcp.pop %v2685
    %v2689 = vmul.f32 1.0, %v2688
    %v2691 = vrot.slane %v2667, 2
    %v2693 = vmul.f32 %v2687, %v2691
    %v2694 = vadd.f32 %v1987, %v2693
    %v2695 = vtanh.pop %v2694
    %v2696 = vsub.f32 1.0, %v2689
    %v2697 = vmul.f32 %v2696, %v2695
    %v2698 = vrot.slane %v2524, 6
    %v2700 = vmul.f32 %v2689, %v2698
    %v2701 = vadd.f32 %v2697, %v2700
    %2702 = vst [vmem:[#allocation2] sm:$0xc0] %v2701
    %v2704 = vrot.slane %v2701, 6
    %2706 = vmatprep.subr.mxu0 %v1821
    %2707 = vmatpush1.msra.mxu0 %v1820
    %2708 = vmatprep.subr.mxu0 %v1818
    %2709 = vmatpush1.msra.mxu0 %v1817
    %2710 = vmatprep.subr.mxu0 %v1815
    %2711 = vmatpush1.msra.mxu0 %v1814
    %2712 = vmatprep.subr.mxu0 %v1812
    %2713 = vmatpush1.msra.mxu0 %v1811
    %2714 = vmatprep.subr.mxu0 %v1809
    %2715 = vmatpush1.msra.mxu0 %v1808
    %2716 = vmatprep.subr.mxu0 %v1806
    %2717 = vmatpush1.msra.mxu0 %v1805
    %2718 = vmatprep.subr.mxu0 %v1803
    %2719 = vmatpush1.msra.mxu0 %v1802
    %2720 = vmatprep.subr.mxu0 %v1800
    %2721 = vmatpush1.msra.mxu0 %v1799
    %2722 = vmatprep.subr.mxu0 %v1797
    %2723 = vmatpush1.msra.mxu0 %v1796
    %2724 = vmatprep.subr.mxu0 %v1794
    %2725 = vmatpush1.msra.mxu0 %v1793
    %2726 = vmatprep.subr.mxu0 %v1791
    %2727 = vmatpush1.msra.mxu0 %v1790
    %2728 = vmatprep.subr.mxu0 %v1788
    %2729 = vmatpush1.msra.mxu0 %v1787
    %2730 = vmatprep.subr.mxu0 %v1785
    %2731 = vmatpush1.msra.mxu0 %v1784
    %2732 = vmatprep.subr.mxu0 %v1782
    %2733 = vmatpush1.msra.mxu0 %v1781
    %2734 = vmatprep.subr.mxu0 %v1779
    %2735 = vmatpush1.msra.mxu0 %v1778
    %2736 = vmatprep.subr.mxu0 %v1776
    %2737 = vmatpush1.msra.mxu0 %v1775
    %2738 = vmatprep.subr.mxu0 0.0
    %2739 = vmatpush2.msra.mxu0 0.0
    %2740 = vmatprep.subr.mxu0 0.0
    %2741 = vmatpush2.msra.mxu0 0.0
    %2742 = vmatprep.subr.mxu0 0.0
    %2743 = vmatpush2.msra.mxu0 0.0
    %2744 = vmatprep.subr.mxu0 0.0
    %2745 = vmatpush2.msra.mxu0 0.0
    %2746 = vmatprep.subr.mxu0 0.0
    %2747 = vmatpush2.msra.mxu0 0.0
    %2748 = vmatprep.subr.mxu0 0.0
    %2749 = vmatpush2.msra.mxu0 0.0
    %2750 = vmatprep.subr.mxu0 0.0
    %2751 = vmatpush2.msra.mxu0 0.0
    %2752 = vmatprep.subr.mxu0 0.0
    %2753 = vmatpush2.msra.mxu0 0.0
    %2754 = vmatprep.subr.mxu0 0.0
    %2755 = vmatpush2.msra.mxu0 0.0
    %2756 = vmatprep.subr.mxu0 0.0
    %2757 = vmatpush2.msra.mxu0 0.0
    %2758 = vmatprep.subr.mxu0 0.0
    %2759 = vmatpush2.msra.mxu0 0.0
    %2760 = vmatprep.subr.mxu0 0.0
    %2761 = vmatpush2.msra.mxu0 0.0
    %2762 = vmatprep.subr.mxu0 0.0
    %2763 = vmatpush2.msra.mxu0 0.0
    %2764 = vmatprep.subr.mxu0 0.0
    %2765 = vmatpush2.msra.mxu0 0.0
    %2766 = vmatprep.subr.mxu0 0.0
    %2767 = vmatpush2.msra.mxu0 0.0
    %2768 = vmatprep.subr.mxu0 0.0
    %2769 = vmatpush2.msra.mxu0 0.0
    %2770 = vmatprep.mubr.f32.mxu0 0.0
    %2771 = vmatmul.mubr.f32.gmra.mxu0 %v2704
    %v2772 = vpop.f32.mrf.mxu0
    %v2773 = vadd.f32 %v1999, %v2772
    %v2774 = vpop.f32.mrf.mxu0
    %v2775 = vadd.f32 %v2003, %v2774
    %2776 = vdwg.mxu0
    %2777 = vmatprep.subr.mxu0 0.0
    %2778 = vmatpush1.msra.mxu0 %v1822
    %2779 = vmatprep.subr.mxu0 0.0
    %2780 = vmatpush1.msra.mxu0 %v1819
    %2781 = vmatprep.subr.mxu0 0.0
    %2782 = vmatpush1.msra.mxu0 %v1816
    %2783 = vmatprep.subr.mxu0 0.0
    %2784 = vmatpush1.msra.mxu0 %v1813
    %2785 = vmatprep.subr.mxu0 0.0
    %2786 = vmatpush1.msra.mxu0 %v1810
    %2787 = vmatprep.subr.mxu0 0.0
    %2788 = vmatpush1.msra.mxu0 %v1807
    %2789 = vmatprep.subr.mxu0 0.0
    %2790 = vmatpush1.msra.mxu0 %v1804
    %2791 = vmatprep.subr.mxu0 0.0
    %2792 = vmatpush1.msra.mxu0 %v1801
    %2793 = vmatprep.subr.mxu0 0.0
    %2794 = vmatpush1.msra.mxu0 %v1798
    %2795 = vmatprep.subr.mxu0 0.0
    %2796 = vmatpush1.msra.mxu0 %v1795
    %2797 = vmatprep.subr.mxu0 0.0
    %2798 = vmatpush1.msra.mxu0 %v1792
    %2799 = vmatprep.subr.mxu0 0.0
    %2800 = vmatpush1.msra.mxu0 %v1789
    %2801 = vmatprep.subr.mxu0 0.0
    %2802 = vmatpush1.msra.mxu0 %v1786
    %2803 = vmatprep.subr.mxu0 0.0
    %2804 = vmatpush1.msra.mxu0 %v1783
    %2805 = vmatprep.subr.mxu0 0.0
    %2806 = vmatpush1.msra.mxu0 %v1780
    %2807 = vmatprep.subr.mxu0 0.0
    %2808 = vmatpush1.msra.mxu0 %v1777
    %2809 = vmatprep.subr.mxu0 0.0
    %2810 = vmatpush2.msra.mxu0 0.0
    %2811 = vmatprep.subr.mxu0 0.0
    %2812 = vmatpush2.msra.mxu0 0.0
    %2813 = vmatprep.subr.mxu0 0.0
    %2814 = vmatpush2.msra.mxu0 0.0
    %2815 = vmatprep.subr.mxu0 0.0
    %2816 = vmatpush2.msra.mxu0 0.0
    %2817 = vmatprep.subr.mxu0 0.0
    %2818 = vmatpush2.msra.mxu0 0.0
    %2819 = vmatprep.subr.mxu0 0.0
    %2820 = vmatpush2.msra.mxu0 0.0
    %2821 = vmatprep.subr.mxu0 0.0
    %2822 = vmatpush2.msra.mxu0 0.0
    %2823 = vmatprep.subr.mxu0 0.0
    %2824 = vmatpush2.msra.mxu0 0.0
    %2825 = vmatprep.subr.mxu0 0.0
    %2826 = vmatpush2.msra.mxu0 0.0
    %2827 = vmatprep.subr.mxu0 0.0
    %2828 = vmatpush2.msra.mxu0 0.0
    %2829 = vmatprep.subr.mxu0 0.0
    %2830 = vmatpush2.msra.mxu0 0.0
    %2831 = vmatprep.subr.mxu0 0.0
    %2832 = vmatpush2.msra.mxu0 0.0
    %2833 = vmatprep.subr.mxu0 0.0
    %2834 = vmatpush2.msra.mxu0 0.0
    %2835 = vmatprep.subr.mxu0 0.0
    %2836 = vmatpush2.msra.mxu0 0.0
    %2837 = vmatprep.subr.mxu0 0.0
    %2838 = vmatpush2.msra.mxu0 0.0
    %2839 = vmatprep.subr.mxu0 0.0
    %2840 = vmatpush2.msra.mxu0 0.0
    %2841 = vmatprep.mubr.f32.mxu0 0.0
    %2842 = vmatmul.mubr.f32.gmra.mxu0 %v2704
    %v2843 = vpop.f32.mrf.mxu0
    %v2844 = vadd.f32 %v2007, %v2843
    %v2845 = vpop.f32.mrf.mxu0
    %2846 = vdwg.mxu0
    %v2847 = vadd.f32 %v1916, %v2773
    %v2848 = vadd.f32 %v1918, %v2775
    %v2849 = vxor.u32 %v2847, 2147483648
    %v2850 = vxor.u32 %v2848, 2147483648
    %v2851 = vmul.f32 %v2849, 1.442695
    %v2852 = vpow.pop %v2851
    %v2853 = vmul.f32 %v2850, 1.442695
    %v2854 = vpow.pop %v2853
    %v2855 = vadd.f32 %v2852, 1.0
    %v2856 = vadd.f32 %v2854, 1.0
    %v2857 = vrcp.pop %v2855
    %v2858 = vmul.f32 1.0, %v2857
    %v2859 = vrcp.pop %v2856
    %v2860 = vmul.f32 1.0, %v2859
    %v2861 = vmul.f32 %v2858, %v2844
    %v2862 = vadd.f32 %v1992, %v2861
    %v2863 = vtanh.pop %v2862
    %v2864 = vsub.f32 1.0, %v2860
    %v2865 = vmul.f32 %v2864, %v2863
    %v2866 = vmul.f32 %v2860, %v2704
    %v2867 = vadd.f32 %v2865, %v2866
    %2868 = vst [vmem:[#allocation2 + $0x8] sm:$0x3] %v2867
    %2869 = vmatprep.subr.mxu0 %v1821
    %2870 = vmatpush1.msra.mxu0 %v1820
    %2871 = vmatprep.subr.mxu0 %v1818
    %2872 = vmatpush1.msra.mxu0 %v1817
    %2873 = vmatprep.subr.mxu0 %v1815
    %2874 = vmatpush1.msra.mxu0 %v1814
    %2875 = vmatprep.subr.mxu0 %v1812
    %2876 = vmatpush1.msra.mxu0 %v1811
    %2877 = vmatprep.subr.mxu0 %v1809
    %2878 = vmatpush1.msra.mxu0 %v1808
    %2879 = vmatprep.subr.mxu0 %v1806
    %2880 = vmatpush1.msra.mxu0 %v1805
    %2881 = vmatprep.subr.mxu0 %v1803
    %2882 = vmatpush1.msra.mxu0 %v1802
    %2883 = vmatprep.subr.mxu0 %v1800
    %2884 = vmatpush1.msra.mxu0 %v1799
    %2885 = vmatprep.subr.mxu0 %v1797
    %2886 = vmatpush1.msra.mxu0 %v1796
    %2887 = vmatprep.subr.mxu0 %v1794
    %2888 = vmatpush1.msra.mxu0 %v1793
    %2889 = vmatprep.subr.mxu0 %v1791
    %2890 = vmatpush1.msra.mxu0 %v1790
    %2891 = vmatprep.subr.mxu0 %v1788
    %2892 = vmatpush1.msra.mxu0 %v1787
    %2893 = vmatprep.subr.mxu0 %v1785
    %2894 = vmatpush1.msra.mxu0 %v1784
    %2895 = vmatprep.subr.mxu0 %v1782
    %2896 = vmatpush1.msra.mxu0 %v1781
    %2897 = vmatprep.subr.mxu0 %v1779
    %2898 = vmatpush1.msra.mxu0 %v1778
    %2899 = vmatprep.subr.mxu0 %v1776
    %2900 = vmatpush1.msra.mxu0 %v1775
    %2901 = vmatprep.subr.mxu0 0.0
    %2902 = vmatpush2.msra.mxu0 0.0
    %2903 = vmatprep.subr.mxu0 0.0
    %2904 = vmatpush2.msra.mxu0 0.0
    %2905 = vmatprep.subr.mxu0 0.0
    %2906 = vmatpush2.msra.mxu0 0.0
    %2907 = vmatprep.subr.mxu0 0.0
    %2908 = vmatpush2.msra.mxu0 0.0
    %2909 = vmatprep.subr.mxu0 0.0
    %2910 = vmatpush2.msra.mxu0 0.0
    %2911 = vmatprep.subr.mxu0 0.0
    %2912 = vmatpush2.msra.mxu0 0.0
    %2913 = vmatprep.subr.mxu0 0.0
    %2914 = vmatpush2.msra.mxu0 0.0
    %2915 = vmatprep.subr.mxu0 0.0
    %2916 = vmatpush2.msra.mxu0 0.0
    %2917 = vmatprep.subr.mxu0 0.0
    %2918 = vmatpush2.msra.mxu0 0.0
    %2919 = vmatprep.subr.mxu0 0.0
    %2920 = vmatpush2.msra.mxu0 0.0
    %2921 = vmatprep.subr.mxu0 0.0
    %2922 = vmatpush2.msra.mxu0 0.0
    %2923 = vmatprep.subr.mxu0 0.0
    %2924 = vmatpush2.msra.mxu0 0.0
    %2925 = vmatprep.subr.mxu0 0.0
    %2926 = vmatpush2.msra.mxu0 0.0
    %2927 = vmatprep.subr.mxu0 0.0
    %2928 = vmatpush2.msra.mxu0 0.0
    %2929 = vmatprep.subr.mxu0 0.0
    %2930 = vmatpush2.msra.mxu0 0.0
    %2931 = vmatprep.subr.mxu0 0.0
    %2932 = vmatpush2.msra.mxu0 0.0
    %2933 = vmatprep.mubr.f32.mxu0 0.0
    %2934 = vmatmul.mubr.f32.gmra.mxu0 %v2867
    %v2935 = vpop.f32.mrf.mxu0
    %v2936 = vadd.f32 %v1999, %v2935
    %v2937 = vpop.f32.mrf.mxu0
    %v2938 = vadd.f32 %v2003, %v2937
    %2939 = vdwg.mxu0
    %2940 = vmatprep.subr.mxu0 0.0
    %2941 = vmatpush1.msra.mxu0 %v1822
    %2942 = vmatprep.subr.mxu0 0.0
    %2943 = vmatpush1.msra.mxu0 %v1819
    %2944 = vmatprep.subr.mxu0 0.0
    %2945 = vmatpush1.msra.mxu0 %v1816
    %2946 = vmatprep.subr.mxu0 0.0
    %2947 = vmatpush1.msra.mxu0 %v1813
    %2948 = vmatprep.subr.mxu0 0.0
    %2949 = vmatpush1.msra.mxu0 %v1810
    %2950 = vmatprep.subr.mxu0 0.0
    %2951 = vmatpush1.msra.mxu0 %v1807
    %2952 = vmatprep.subr.mxu0 0.0
    %2953 = vmatpush1.msra.mxu0 %v1804
    %2954 = vmatprep.subr.mxu0 0.0
    %2955 = vmatpush1.msra.mxu0 %v1801
    %2956 = vmatprep.subr.mxu0 0.0
    %2957 = vmatpush1.msra.mxu0 %v1798
    %2958 = vmatprep.subr.mxu0 0.0
    %2959 = vmatpush1.msra.mxu0 %v1795
    %2960 = vmatprep.subr.mxu0 0.0
    %2961 = vmatpush1.msra.mxu0 %v1792
    %2962 = vmatprep.subr.mxu0 0.0
    %2963 = vmatpush1.msra.mxu0 %v1789
    %2964 = vmatprep.subr.mxu0 0.0
    %2965 = vmatpush1.msra.mxu0 %v1786
    %2966 = vmatprep.subr.mxu0 0.0
    %2967 = vmatpush1.msra.mxu0 %v1783
    %2968 = vmatprep.subr.mxu0 0.0
    %2969 = vmatpush1.msra.mxu0 %v1780
    %2970 = vmatprep.subr.mxu0 0.0
    %2971 = vmatpush1.msra.mxu0 %v1777
    %2972 = vmatprep.subr.mxu0 0.0
    %2973 = vmatpush2.msra.mxu0 0.0
    %2974 = vmatprep.subr.mxu0 0.0
    %2975 = vmatpush2.msra.mxu0 0.0
    %2976 = vmatprep.subr.mxu0 0.0
    %2977 = vmatpush2.msra.mxu0 0.0
    %2978 = vmatprep.subr.mxu0 0.0
    %2979 = vmatpush2.msra.mxu0 0.0
    %2980 = vmatprep.subr.mxu0 0.0
    %2981 = vmatpush2.msra.mxu0 0.0
    %2982 = vmatprep.subr.mxu0 0.0
    %2983 = vmatpush2.msra.mxu0 0.0
    %2984 = vmatprep.subr.mxu0 0.0
    %2985 = vmatpush2.msra.mxu0 0.0
    %2986 = vmatprep.subr.mxu0 0.0
    %2987 = vmatpush2.msra.mxu0 0.0
    %2988 = vmatprep.subr.mxu0 0.0
    %2989 = vmatpush2.msra.mxu0 0.0
    %2990 = vmatprep.subr.mxu0 0.0
    %2991 = vmatpush2.msra.mxu0 0.0
    %2992 = vmatprep.subr.mxu0 0.0
    %2993 = vmatpush2.msra.mxu0 0.0
    %2994 = vmatprep.subr.mxu0 0.0
    %2995 = vmatpush2.msra.mxu0 0.0
    %2996 = vmatprep.subr.mxu0 0.0
    %2997 = vmatpush2.msra.mxu0 0.0
    %2998 = vmatprep.subr.mxu0 0.0
    %2999 = vmatpush2.msra.mxu0 0.0
    %3000 = vmatprep.subr.mxu0 0.0
    %3001 = vmatpush2.msra.mxu0 0.0
    %3002 = vmatprep.subr.mxu0 0.0
    %3003 = vmatpush2.msra.mxu0 0.0
    %3004 = vmatprep.mubr.f32.mxu0 0.0
    %3005 = vmatmul.mubr.f32.gmra.mxu0 %v2867
    %v3006 = vpop.f32.mrf.mxu0
    %v3007 = vadd.f32 %v2007, %v3006
    %v3008 = vpop.f32.mrf.mxu0
    %3009 = vdwg.mxu0
    %v3012 = vrot.slane %v2936, 6
    %v3013 = vrot.slane %v2938, 6
    %v3016 = vadd.f32 %v1916, %v3012
    %v3017 = vadd.f32 %v1918, %v3013
    %v3018 = vxor.u32 %v3016, 2147483648
    %v3019 = vxor.u32 %v3017, 2147483648
    %v3020 = vmul.f32 %v3018, 1.442695
    %v3021 = vpow.pop %v3020
    %v3022 = vmul.f32 %v3019, 1.442695
    %v3023 = vpow.pop %v3022
    %v3024 = vadd.f32 %v3021, 1.0
    %v3025 = vadd.f32 %v3023, 1.0
    %v3026 = vrcp.pop %v3024
    %v3027 = vmul.f32 1.0, %v3026
    %v3028 = vrcp.pop %v3025
    %v3029 = vmul.f32 1.0, %v3028
    %v3031 = vrot.slane %v3007, 6
    %v3033 = vmul.f32 %v3027, %v3031
    %v3034 = vadd.f32 %v1992, %v3033
    %v3035 = vtanh.pop %v3034
    %v3036 = vsub.f32 1.0, %v3029
    %v3037 = vmul.f32 %v3036, %v3035
    %v3039 = vrot.slane %v2867, 6
    %v3041 = vmul.f32 %v3029, %v3039
    %v3042 = vadd.f32 %v3037, %v3041
    %3043 = vst [vmem:[#allocation2 + $0x8] sm:$0xc] %v3042
    %v3045 = vrot.slane %v3042, 2
    %3047 = vmatprep.subr.mxu0 %v1821
    %3048 = vmatpush1.msra.mxu0 %v1820
    %3049 = vmatprep.subr.mxu0 %v1818
    %3050 = vmatpush1.msra.mxu0 %v1817
    %3051 = vmatprep.subr.mxu0 %v1815
    %3052 = vmatpush1.msra.mxu0 %v1814
    %3053 = vmatprep.subr.mxu0 %v1812
    %3054 = vmatpush1.msra.mxu0 %v1811
    %3055 = vmatprep.subr.mxu0 %v1809
    %3056 = vmatpush1.msra.mxu0 %v1808
    %3057 = vmatprep.subr.mxu0 %v1806
    %3058 = vmatpush1.msra.mxu0 %v1805
    %3059 = vmatprep.subr.mxu0 %v1803
    %3060 = vmatpush1.msra.mxu0 %v1802
    %3061 = vmatprep.subr.mxu0 %v1800
    %3062 = vmatpush1.msra.mxu0 %v1799
    %3063 = vmatprep.subr.mxu0 %v1797
    %3064 = vmatpush1.msra.mxu0 %v1796
    %3065 = vmatprep.subr.mxu0 %v1794
    %3066 = vmatpush1.msra.mxu0 %v1793
    %3067 = vmatprep.subr.mxu0 %v1791
    %3068 = vmatpush1.msra.mxu0 %v1790
    %3069 = vmatprep.subr.mxu0 %v1788
    %3070 = vmatpush1.msra.mxu0 %v1787
    %3071 = vmatprep.subr.mxu0 %v1785
    %3072 = vmatpush1.msra.mxu0 %v1784
    %3073 = vmatprep.subr.mxu0 %v1782
    %3074 = vmatpush1.msra.mxu0 %v1781
    %3075 = vmatprep.subr.mxu0 %v1779
    %3076 = vmatpush1.msra.mxu0 %v1778
    %3077 = vmatprep.subr.mxu0 %v1776
    %3078 = vmatpush1.msra.mxu0 %v1775
    %3079 = vmatprep.subr.mxu0 0.0
    %3080 = vmatpush2.msra.mxu0 0.0
    %3081 = vmatprep.subr.mxu0 0.0
    %3082 = vmatpush2.msra.mxu0 0.0
    %3083 = vmatprep.subr.mxu0 0.0
    %3084 = vmatpush2.msra.mxu0 0.0
    %3085 = vmatprep.subr.mxu0 0.0
    %3086 = vmatpush2.msra.mxu0 0.0
    %3087 = vmatprep.subr.mxu0 0.0
    %3088 = vmatpush2.msra.mxu0 0.0
    %3089 = vmatprep.subr.mxu0 0.0
    %3090 = vmatpush2.msra.mxu0 0.0
    %3091 = vmatprep.subr.mxu0 0.0
    %3092 = vmatpush2.msra.mxu0 0.0
    %3093 = vmatprep.subr.mxu0 0.0
    %3094 = vmatpush2.msra.mxu0 0.0
    %3095 = vmatprep.subr.mxu0 0.0
    %3096 = vmatpush2.msra.mxu0 0.0
    %3097 = vmatprep.subr.mxu0 0.0
    %3098 = vmatpush2.msra.mxu0 0.0
    %3099 = vmatprep.subr.mxu0 0.0
    %3100 = vmatpush2.msra.mxu0 0.0
    %3101 = vmatprep.subr.mxu0 0.0
    %3102 = vmatpush2.msra.mxu0 0.0
    %3103 = vmatprep.subr.mxu0 0.0
    %3104 = vmatpush2.msra.mxu0 0.0
    %3105 = vmatprep.subr.mxu0 0.0
    %3106 = vmatpush2.msra.mxu0 0.0
    %3107 = vmatprep.subr.mxu0 0.0
    %3108 = vmatpush2.msra.mxu0 0.0
    %3109 = vmatprep.subr.mxu0 0.0
    %3110 = vmatpush2.msra.mxu0 0.0
    %3111 = vmatprep.mubr.f32.mxu0 0.0
    %3112 = vmatmul.mubr.f32.gmra.mxu0 %v3045
    %v3113 = vpop.f32.mrf.mxu0
    %v3114 = vadd.f32 %v1999, %v3113
    %v3115 = vpop.f32.mrf.mxu0
    %v3116 = vadd.f32 %v2003, %v3115
    %3117 = vdwg.mxu0
    %3118 = vmatprep.subr.mxu0 0.0
    %3119 = vmatpush1.msra.mxu0 %v1822
    %3120 = vmatprep.subr.mxu0 0.0
    %3121 = vmatpush1.msra.mxu0 %v1819
    %3122 = vmatprep.subr.mxu0 0.0
    %3123 = vmatpush1.msra.mxu0 %v1816
    %3124 = vmatprep.subr.mxu0 0.0
    %3125 = vmatpush1.msra.mxu0 %v1813
    %3126 = vmatprep.subr.mxu0 0.0
    %3127 = vmatpush1.msra.mxu0 %v1810
    %3128 = vmatprep.subr.mxu0 0.0
    %3129 = vmatpush1.msra.mxu0 %v1807
    %3130 = vmatprep.subr.mxu0 0.0
    %3131 = vmatpush1.msra.mxu0 %v1804
    %3132 = vmatprep.subr.mxu0 0.0
    %3133 = vmatpush1.msra.mxu0 %v1801
    %3134 = vmatprep.subr.mxu0 0.0
    %3135 = vmatpush1.msra.mxu0 %v1798
    %3136 = vmatprep.subr.mxu0 0.0
    %3137 = vmatpush1.msra.mxu0 %v1795
    %3138 = vmatprep.subr.mxu0 0.0
    %3139 = vmatpush1.msra.mxu0 %v1792
    %3140 = vmatprep.subr.mxu0 0.0
    %3141 = vmatpush1.msra.mxu0 %v1789
    %3142 = vmatprep.subr.mxu0 0.0
    %3143 = vmatpush1.msra.mxu0 %v1786
    %3144 = vmatprep.subr.mxu0 0.0
    %3145 = vmatpush1.msra.mxu0 %v1783
    %3146 = vmatprep.subr.mxu0 0.0
    %3147 = vmatpush1.msra.mxu0 %v1780
    %3148 = vmatprep.subr.mxu0 0.0
    %3149 = vmatpush1.msra.mxu0 %v1777
    %3150 = vmatprep.subr.mxu0 0.0
    %3151 = vmatpush2.msra.mxu0 0.0
    %3152 = vmatprep.subr.mxu0 0.0
    %3153 = vmatpush2.msra.mxu0 0.0
    %3154 = vmatprep.subr.mxu0 0.0
    %3155 = vmatpush2.msra.mxu0 0.0
    %3156 = vmatprep.subr.mxu0 0.0
    %3157 = vmatpush2.msra.mxu0 0.0
    %3158 = vmatprep.subr.mxu0 0.0
    %3159 = vmatpush2.msra.mxu0 0.0
    %3160 = vmatprep.subr.mxu0 0.0
    %3161 = vmatpush2.msra.mxu0 0.0
    %3162 = vmatprep.subr.mxu0 0.0
    %3163 = vmatpush2.msra.mxu0 0.0
    %3164 = vmatprep.subr.mxu0 0.0
    %3165 = vmatpush2.msra.mxu0 0.0
    %3166 = vmatprep.subr.mxu0 0.0
    %3167 = vmatpush2.msra.mxu0 0.0
    %3168 = vmatprep.subr.mxu0 0.0
    %3169 = vmatpush2.msra.mxu0 0.0
    %3170 = vmatprep.subr.mxu0 0.0
    %3171 = vmatpush2.msra.mxu0 0.0
    %3172 = vmatprep.subr.mxu0 0.0
    %3173 = vmatpush2.msra.mxu0 0.0
    %3174 = vmatprep.subr.mxu0 0.0
    %3175 = vmatpush2.msra.mxu0 0.0
    %3176 = vmatprep.subr.mxu0 0.0
    %3177 = vmatpush2.msra.mxu0 0.0
    %3178 = vmatprep.subr.mxu0 0.0
    %3179 = vmatpush2.msra.mxu0 0.0
    %3180 = vmatprep.subr.mxu0 0.0
    %3181 = vmatpush2.msra.mxu0 0.0
    %3182 = vmatprep.mubr.f32.mxu0 0.0
    %3183 = vmatmul.mubr.f32.gmra.mxu0 %v3045
    %v3184 = vpop.f32.mrf.mxu0
    %v3185 = vadd.f32 %v2007, %v3184
    %v3186 = vpop.f32.mrf.mxu0
    %3187 = vdwg.mxu0
    %v3190 = vrot.slane %v3114, 4
    %v3191 = vrot.slane %v3116, 4
    %v3194 = vadd.f32 %v1916, %v3190
    %v3195 = vadd.f32 %v1918, %v3191
    %v3196 = vxor.u32 %v3194, 2147483648
    %v3197 = vxor.u32 %v3195, 2147483648
    %v3198 = vmul.f32 %v3196, 1.442695
    %v3199 = vpow.pop %v3198
    %v3200 = vmul.f32 %v3197, 1.442695
    %v3201 = vpow.pop %v3200
    %v3202 = vadd.f32 %v3199, 1.0
    %v3203 = vadd.f32 %v3201, 1.0
    %v3204 = vrcp.pop %v3202
    %v3205 = vmul.f32 1.0, %v3204
    %v3206 = vrcp.pop %v3203
    %v3207 = vmul.f32 1.0, %v3206
    %v3209 = vrot.slane %v3185, 4
    %v3211 = vmul.f32 %v3205, %v3209
    %v3212 = vadd.f32 %v1992, %v3211
    %v3213 = vtanh.pop %v3212
    %v3214 = vsub.f32 1.0, %v3207
    %v3215 = vmul.f32 %v3214, %v3213
    %v3216 = vrot.slane %v3042, 6
    %v3218 = vmul.f32 %v3207, %v3216
    %v3219 = vadd.f32 %v3215, %v3218
    %3220 = vst [vmem:[#allocation2 + $0x8] sm:$0x30] %v3219
    %v3222 = vrot.slane %v3219, 4
    %3224 = vmatprep.subr.mxu0 %v1821
    %3225 = vmatpush1.msra.mxu0 %v1820
    %3226 = vmatprep.subr.mxu0 %v1818
    %3227 = vmatpush1.msra.mxu0 %v1817
    %3228 = vmatprep.subr.mxu0 %v1815
    %3229 = vmatpush1.msra.mxu0 %v1814
    %3230 = vmatprep.subr.mxu0 %v1812
    %3231 = vmatpush1.msra.mxu0 %v1811
    %3232 = vmatprep.subr.mxu0 %v1809
    %3233 = vmatpush1.msra.mxu0 %v1808
    %3234 = vmatprep.subr.mxu0 %v1806
    %3235 = vmatpush1.msra.mxu0 %v1805
    %3236 = vmatprep.subr.mxu0 %v1803
    %3237 = vmatpush1.msra.mxu0 %v1802
    %3238 = vmatprep.subr.mxu0 %v1800
    %3239 = vmatpush1.msra.mxu0 %v1799
    %3240 = vmatprep.subr.mxu0 %v1797
    %3241 = vmatpush1.msra.mxu0 %v1796
    %3242 = vmatprep.subr.mxu0 %v1794
    %3243 = vmatpush1.msra.mxu0 %v1793
    %3244 = vmatprep.subr.mxu0 %v1791
    %3245 = vmatpush1.msra.mxu0 %v1790
    %3246 = vmatprep.subr.mxu0 %v1788
    %3247 = vmatpush1.msra.mxu0 %v1787
    %3248 = vmatprep.subr.mxu0 %v1785
    %3249 = vmatpush1.msra.mxu0 %v1784
    %3250 = vmatprep.subr.mxu0 %v1782
    %3251 = vmatpush1.msra.mxu0 %v1781
    %3252 = vmatprep.subr.mxu0 %v1779
    %3253 = vmatpush1.msra.mxu0 %v1778
    %3254 = vmatprep.subr.mxu0 %v1776
    %3255 = vmatpush1.msra.mxu0 %v1775
    %3256 = vmatprep.subr.mxu0 0.0
    %3257 = vmatpush2.msra.mxu0 0.0
    %3258 = vmatprep.subr.mxu0 0.0
    %3259 = vmatpush2.msra.mxu0 0.0
    %3260 = vmatprep.subr.mxu0 0.0
    %3261 = vmatpush2.msra.mxu0 0.0
    %3262 = vmatprep.subr.mxu0 0.0
    %3263 = vmatpush2.msra.mxu0 0.0
    %3264 = vmatprep.subr.mxu0 0.0
    %3265 = vmatpush2.msra.mxu0 0.0
    %3266 = vmatprep.subr.mxu0 0.0
    %3267 = vmatpush2.msra.mxu0 0.0
    %3268 = vmatprep.subr.mxu0 0.0
    %3269 = vmatpush2.msra.mxu0 0.0
    %3270 = vmatprep.subr.mxu0 0.0
    %3271 = vmatpush2.msra.mxu0 0.0
    %3272 = vmatprep.subr.mxu0 0.0
    %3273 = vmatpush2.msra.mxu0 0.0
    %3274 = vmatprep.subr.mxu0 0.0
    %3275 = vmatpush2.msra.mxu0 0.0
    %3276 = vmatprep.subr.mxu0 0.0
    %3277 = vmatpush2.msra.mxu0 0.0
    %3278 = vmatprep.subr.mxu0 0.0
    %3279 = vmatpush2.msra.mxu0 0.0
    %3280 = vmatprep.subr.mxu0 0.0
    %3281 = vmatpush2.msra.mxu0 0.0
    %3282 = vmatprep.subr.mxu0 0.0
    %3283 = vmatpush2.msra.mxu0 0.0
    %3284 = vmatprep.subr.mxu0 0.0
    %3285 = vmatpush2.msra.mxu0 0.0
    %3286 = vmatprep.subr.mxu0 0.0
    %3287 = vmatpush2.msra.mxu0 0.0
    %3288 = vmatprep.mubr.f32.mxu0 0.0
    %3289 = vmatmul.mubr.f32.gmra.mxu0 %v3222
    %v3290 = vpop.f32.mrf.mxu0
    %v3291 = vadd.f32 %v1999, %v3290
    %v3292 = vpop.f32.mrf.mxu0
    %v3293 = vadd.f32 %v2003, %v3292
    %3294 = vdwg.mxu0
    %3295 = vmatprep.subr.mxu0 0.0
    %3296 = vmatpush1.msra.mxu0 %v1822
    %3297 = vmatprep.subr.mxu0 0.0
    %3298 = vmatpush1.msra.mxu0 %v1819
    %3299 = vmatprep.subr.mxu0 0.0
    %3300 = vmatpush1.msra.mxu0 %v1816
    %3301 = vmatprep.subr.mxu0 0.0
    %3302 = vmatpush1.msra.mxu0 %v1813
    %3303 = vmatprep.subr.mxu0 0.0
    %3304 = vmatpush1.msra.mxu0 %v1810
    %3305 = vmatprep.subr.mxu0 0.0
    %3306 = vmatpush1.msra.mxu0 %v1807
    %3307 = vmatprep.subr.mxu0 0.0
    %3308 = vmatpush1.msra.mxu0 %v1804
    %3309 = vmatprep.subr.mxu0 0.0
    %3310 = vmatpush1.msra.mxu0 %v1801
    %3311 = vmatprep.subr.mxu0 0.0
    %3312 = vmatpush1.msra.mxu0 %v1798
    %3313 = vmatprep.subr.mxu0 0.0
    %3314 = vmatpush1.msra.mxu0 %v1795
    %3315 = vmatprep.subr.mxu0 0.0
    %3316 = vmatpush1.msra.mxu0 %v1792
    %3317 = vmatprep.subr.mxu0 0.0
    %3318 = vmatpush1.msra.mxu0 %v1789
    %3319 = vmatprep.subr.mxu0 0.0
    %3320 = vmatpush1.msra.mxu0 %v1786
    %3321 = vmatprep.subr.mxu0 0.0
    %3322 = vmatpush1.msra.mxu0 %v1783
    %3323 = vmatprep.subr.mxu0 0.0
    %3324 = vmatpush1.msra.mxu0 %v1780
    %3325 = vmatprep.subr.mxu0 0.0
    %3326 = vmatpush1.msra.mxu0 %v1777
    %3327 = vmatprep.subr.mxu0 0.0
    %3328 = vmatpush2.msra.mxu0 0.0
    %3329 = vmatprep.subr.mxu0 0.0
    %3330 = vmatpush2.msra.mxu0 0.0
    %3331 = vmatprep.subr.mxu0 0.0
    %3332 = vmatpush2.msra.mxu0 0.0
    %3333 = vmatprep.subr.mxu0 0.0
    %3334 = vmatpush2.msra.mxu0 0.0
    %3335 = vmatprep.subr.mxu0 0.0
    %3336 = vmatpush2.msra.mxu0 0.0
    %3337 = vmatprep.subr.mxu0 0.0
    %3338 = vmatpush2.msra.mxu0 0.0
    %3339 = vmatprep.subr.mxu0 0.0
    %3340 = vmatpush2.msra.mxu0 0.0
    %3341 = vmatprep.subr.mxu0 0.0
    %3342 = vmatpush2.msra.mxu0 0.0
    %3343 = vmatprep.subr.mxu0 0.0
    %3344 = vmatpush2.msra.mxu0 0.0
    %3345 = vmatprep.subr.mxu0 0.0
    %3346 = vmatpush2.msra.mxu0 0.0
    %3347 = vmatprep.subr.mxu0 0.0
    %3348 = vmatpush2.msra.mxu0 0.0
    %3349 = vmatprep.subr.mxu0 0.0
    %3350 = vmatpush2.msra.mxu0 0.0
    %3351 = vmatprep.subr.mxu0 0.0
    %3352 = vmatpush2.msra.mxu0 0.0
    %3353 = vmatprep.subr.mxu0 0.0
    %3354 = vmatpush2.msra.mxu0 0.0
    %3355 = vmatprep.subr.mxu0 0.0
    %3356 = vmatpush2.msra.mxu0 0.0
    %3357 = vmatprep.subr.mxu0 0.0
    %3358 = vmatpush2.msra.mxu0 0.0
    %3359 = vmatprep.mubr.f32.mxu0 0.0
    %3360 = vmatmul.mubr.f32.gmra.mxu0 %v3222
    %v3361 = vpop.f32.mrf.mxu0
    %v3362 = vadd.f32 %v2007, %v3361
    %v3363 = vpop.f32.mrf.mxu0
    %3364 = vdwg.mxu0
    %v3367 = vrot.slane %v3291, 2
    %v3368 = vrot.slane %v3293, 2
    %v3371 = vadd.f32 %v1916, %v3367
    %v3372 = vadd.f32 %v1918, %v3368
    %v3373 = vxor.u32 %v3371, 2147483648
    %v3374 = vxor.u32 %v3372, 2147483648
    %v3375 = vmul.f32 %v3373, 1.442695
    %v3376 = vpow.pop %v3375
    %v3377 = vmul.f32 %v3374, 1.442695
    %v3378 = vpow.pop %v3377
    %v3379 = vadd.f32 %v3376, 1.0
    %v3380 = vadd.f32 %v3378, 1.0
    %v3381 = vrcp.pop %v3379
    %v3382 = vmul.f32 1.0, %v3381
    %v3383 = vrcp.pop %v3380
    %v3384 = vmul.f32 1.0, %v3383
    %v3386 = vrot.slane %v3362, 2
    %v3388 = vmul.f32 %v3382, %v3386
    %v3389 = vadd.f32 %v1992, %v3388
    %v3390 = vtanh.pop %v3389
    %v3391 = vsub.f32 1.0, %v3384
    %v3392 = vmul.f32 %v3391, %v3390
    %v3393 = vrot.slane %v3219, 6
    %v3395 = vmul.f32 %v3384, %v3393
    %v3396 = vadd.f32 %v3392, %v3395
    %3397 = vst [vmem:[#allocation2 + $0x8] sm:$0xc0] %v3396
    %v3398 = vld [vmem:[#allocation2] sm:$0xff]
    %v3399 = vld [vmem:[#allocation2 + $0x8] sm:$0xff]
    %v3400 = vld [vmem:[#allocation9] sm:$0xff]
    %v3401 = vld [vmem:[#allocation9 + $0x8] sm:$0xff]
    %v3402 = vld [vmem:[#allocation9 + $0x10] sm:$0xff]
    %v3403 = vld [vmem:[#allocation9 + $0x18] sm:$0xff]
    %v3404 = vld [vmem:[#allocation9 + $0x20] sm:$0xff]
    %v3405 = vld [vmem:[#allocation9 + $0x28] sm:$0xff]
    %v3406 = vld [vmem:[#allocation9 + $0x30] sm:$0xff]
    %v3407 = vld [vmem:[#allocation9 + $0x38] sm:$0xff]
    %v3408 = vld [vmem:[#allocation9 + $0x40] sm:$0xff]
    %v3409 = vld [vmem:[#allocation9 + $0x48] sm:$0xff]
    %v3410 = vld [vmem:[#allocation9 + $0x50] sm:$0xff]
    %v3411 = vld [vmem:[#allocation9 + $0x58] sm:$0xff]
    %v3412 = vld [vmem:[#allocation9 + $0x60] sm:$0xff]
    %v3413 = vld [vmem:[#allocation9 + $0x68] sm:$0xff]
    %v3414 = vld [vmem:[#allocation9 + $0x70] sm:$0xff]
    %v3415 = vld [vmem:[#allocation9 + $0x78] sm:$0xff]
    %v3416 = vld [vmem:[%s10] sm:$0x1]
    %v3418 = vlaneseq
    %v3419 = vshrl.u32 %v3418, 7
    %v3420 = vsub.s32 0, %v3419
    %v3421 = vrot.slane %v3416, %v3420
    %3423 = vmatprep.subr.mxu0 0.0
    %3424 = vmatpush1.msra.mxu0 %v3415
    %3425 = vmatprep.subr.mxu0 0.0
    %3426 = vmatpush1.msra.mxu0 %v3414
    %3427 = vmatprep.subr.mxu0 0.0
    %3428 = vmatpush1.msra.mxu0 %v3413
    %3429 = vmatprep.subr.mxu0 0.0
    %3430 = vmatpush1.msra.mxu0 %v3412
    %3431 = vmatprep.subr.mxu0 0.0
    %3432 = vmatpush1.msra.mxu0 %v3411
    %3433 = vmatprep.subr.mxu0 0.0
    %3434 = vmatpush1.msra.mxu0 %v3410
    %3435 = vmatprep.subr.mxu0 0.0
    %3436 = vmatpush1.msra.mxu0 %v3409
    %3437 = vmatprep.subr.mxu0 0.0
    %3438 = vmatpush1.msra.mxu0 %v3408
    %3439 = vmatprep.subr.mxu0 0.0
    %3440 = vmatpush1.msra.mxu0 %v3407
    %3441 = vmatprep.subr.mxu0 0.0
    %3442 = vmatpush1.msra.mxu0 %v3406
    %3443 = vmatprep.subr.mxu0 0.0
    %3444 = vmatpush1.msra.mxu0 %v3405
    %3445 = vmatprep.subr.mxu0 0.0
    %3446 = vmatpush1.msra.mxu0 %v3404
    %3447 = vmatprep.subr.mxu0 0.0
    %3448 = vmatpush1.msra.mxu0 %v3403
    %3449 = vmatprep.subr.mxu0 0.0
    %3450 = vmatpush1.msra.mxu0 %v3402
    %3451 = vmatprep.subr.mxu0 0.0
    %3452 = vmatpush1.msra.mxu0 %v3401
    %3453 = vmatprep.subr.mxu0 0.0
    %3454 = vmatpush1.msra.mxu0 %v3400
    %3455 = vmatprep.subr.mxu0 0.0
    %3456 = vmatpush2.msra.mxu0 0.0
    %3457 = vmatprep.subr.mxu0 0.0
    %3458 = vmatpush2.msra.mxu0 0.0
    %3459 = vmatprep.subr.mxu0 0.0
    %3460 = vmatpush2.msra.mxu0 0.0
    %3461 = vmatprep.subr.mxu0 0.0
    %3462 = vmatpush2.msra.mxu0 0.0
    %3463 = vmatprep.subr.mxu0 0.0
    %3464 = vmatpush2.msra.mxu0 0.0
    %3465 = vmatprep.subr.mxu0 0.0
    %3466 = vmatpush2.msra.mxu0 0.0
    %3467 = vmatprep.subr.mxu0 0.0
    %3468 = vmatpush2.msra.mxu0 0.0
    %3469 = vmatprep.subr.mxu0 0.0
    %3470 = vmatpush2.msra.mxu0 0.0
    %3471 = vmatprep.subr.mxu0 0.0
    %3472 = vmatpush2.msra.mxu0 0.0
    %3473 = vmatprep.subr.mxu0 0.0
    %3474 = vmatpush2.msra.mxu0 0.0
    %3475 = vmatprep.subr.mxu0 0.0
    %3476 = vmatpush2.msra.mxu0 0.0
    %3477 = vmatprep.subr.mxu0 0.0
    %3478 = vmatpush2.msra.mxu0 0.0
    %3479 = vmatprep.subr.mxu0 0.0
    %3480 = vmatpush2.msra.mxu0 0.0
    %3481 = vmatprep.subr.mxu0 0.0
    %3482 = vmatpush2.msra.mxu0 0.0
    %3483 = vmatprep.subr.mxu0 0.0
    %3484 = vmatpush2.msra.mxu0 0.0
    %3485 = vmatprep.subr.mxu0 0.0
    %3486 = vmatpush2.msra.mxu0 0.0
    %3487 = vmatprep.mubr.f32.mxu0 0.0
    %3488 = vmatmul.mubr.f32.gmra.mxu0 %v3398
    %v3489 = vpop.f32.mrf.mxu0
    %v3490 = vadd.f32 %v3421, %v3489
    %v3491 = vpop.f32.mrf.mxu0
    %3492 = vmatprep.mubr.f32.mxu0 0.0
    %3493 = vmatmul.mubr.f32.gmra.mxu0 %v3399
    %v3494 = vpop.f32.mrf.mxu0
    %v3495 = vadd.f32 %v3421, %v3494
    %v3496 = vpop.f32.mrf.mxu0
    %3497 = vdwg.mxu0
    %v3498 = vxor.u32 %v3490, 2147483648
    %v3499 = vxor.u32 %v3495, 2147483648
    %v3500 = vmul.f32 %v3498, 1.442695
    %v3501 = vpow.pop %v3500
    %v3502 = vmul.f32 %v3499, 1.442695
    %v3503 = vpow.pop %v3502
    %v3504 = vadd.f32 %v3501, 1.0
    %v3505 = vadd.f32 %v3503, 1.0
    %v3506 = vrcp.pop %v3504
    %v3507 = vmul.f32 1.0, %v3506
    %v3508 = vrcp.pop %v3505
    %v3509 = vmul.f32 1.0, %v3508
    %3510 = vst [vmem:[#allocation11] sm:$0xff] %v3507
    %3511 = vst [vmem:[#allocation11 + $0x8] sm:$0xff] %v3509
    // Predicated region
    $region62: #{tpu_custom_call.1} parent=1 // pred_check
      _
    $region63: #{tpu_custom_call.1} parent=1 // pred_check_branch
      %3513 = sbr.rel (0) target = $region65
    $region64: #{tpu_custom_call.1} parent=1 // pred_region
      %s3515 = ssub.s32 256, 256
      %3516 = vsyncadd [#allocation5], %s3515
      %s3517 = sshll.u32 [#allocation11], 4
      %s3518 = int_to_ptr.vmem [resolvable:$true] %s3517
      %3523 = dma.vmem_to_hbm [thread:$0]  %s3518, 256, %s11, [#allocation5], 128, 128, 8
    $region65: #{tpu_custom_call.1} parent=1 // pred_fallthru
      _
    // Predicated region
    $region66: #{tpu_custom_call.1} parent=1 // pred_check
      _
    $region67: #{tpu_custom_call.1} parent=1 // pred_check_branch
      %3525 = sbr.rel (0) target = $region69
    $region68: #{tpu_custom_call.1} parent=1 // pred_region
      %3526 = dma.done [#allocation5], 256
    $region69: #{tpu_custom_call.1} parent=1 // pred_fallthru
      _
    %3527 = vsyncpa [#allocation4], 1
    %3528 = vsyncpa [#allocation7], 1
    %3529 = vsyncpa [#allocation10], 1
    %3530 = vsyncpa [#allocation5], 1

</llo_original>
